<compile_context>
chip_gen: v5e
topology: v5e:2x2
jax: 0.10.0
libtpu: 0.0.40
codegen_flags: <defaults>
</compile_context>

<pallas_src>
import functools
import math

import numpy as np
import jax
import jax.numpy as jnp
from jax import lax
from jax.experimental import pallas as pl
from jax.experimental.pallas import tpu as pltpu


_LANE = 128
# Per-lane double-buffered tile budget; conservative so the pipelined working set
# stays well under v7x's 32 MiB default scoped VMEM (v5e/v6e have more headroom).
_TILE_BUDGET = 12 * 1024 * 1024


def _round_up(n, m):
    return ((n + m - 1) // m) * m


def _pad_last(x, target):
    pad = target - x.shape[-1]
    if pad == 0:
        return x
    return jnp.pad(x, [(0, 0)] * (x.ndim - 1) + [(0, pad)])


def _pick_tile(sp, per_lane_bytes,
               candidates=(32768, 16384, 8192, 4096, 2048, 1024, 512, 256, 128),
               budget=_TILE_BUDGET):
    """Largest multiple-of-128 tile dividing sp under the VMEM budget."""
    for t in candidates:
        if sp % t == 0 and per_lane_bytes * t <= budget:
            return t
    return _LANE  # sp is always a multiple of 128 here


# ---------------------------------------------------------------------------
# Kernel 1a: hoisted Q/K/V projections (channel-major, bf16, Q pre-scaled).
# ---------------------------------------------------------------------------
def _qkv_proj_kernel(y_ref, s_ref, wq_ref, wk_ref, wv_ref,
                     q_ref, k_ref, v_ref, *, scale):
    y = y_ref[0]                                  # (C, TL), input dtype
    s = s_ref[0]
    q = jnp.dot(wq_ref[...], y, preferred_element_type=jnp.float32)
    k = jnp.dot(wk_ref[...], y, preferred_element_type=jnp.float32)
    v = jnp.dot(wv_ref[...], s, preferred_element_type=jnp.float32)
    q_ref[0] = (q * scale).astype(q_ref.dtype)    # fold 1/sqrt(C) into Q once
    k_ref[0] = k.astype(k_ref.dtype)
    v_ref[0] = v.astype(v_ref.dtype)


# ---------------------------------------------------------------------------
# Kernel 1b: flash-style cross attention, channel-major (lanes = sequence).
#   scores^T (TK, TQ) = K'^T Q'   (contraction over the channel axis)
#   acc      (C,  TQ) = V' @ P    (canonical matmul)
#   running max / denom live as (1, TQ) rows; output store is (C, TQ) lane-dense.
# ---------------------------------------------------------------------------
def _attn_kernel(q_ref, k_ref, v_ref, o_ref, m_scr, l_scr, acc_scr,
                 *, l_actual, tk, needs_mask):
    ki = pl.program_id(2)

    @pl.when(ki == 0)
    def _():
        m_scr[...] = jnp.full(m_scr.shape, -jnp.inf, m_scr.dtype)
        l_scr[...] = jnp.zeros(l_scr.shape, l_scr.dtype)
        acc_scr[...] = jnp.zeros(acc_scr.shape, acc_scr.dtype)

    q = q_ref[0]          # (C, TQ) bf16, already scaled by 1/sqrt(C)
    k = k_ref[0]          # (C, TK) bf16
    v = v_ref[0]          # (C, TK) bf16

    # scores^T: (TK, TQ), bf16 MXU operands, f32 accumulation.
    s = lax.dot_general(k, q, (((0,), (0,)), ((), ())),
                        preferred_element_type=jnp.float32)

    if needs_mask:
        key_idx = ki * tk + lax.broadcasted_iota(jnp.int32, (tk, 1), 0)
        s = jnp.where(key_idx < l_actual, s, -jnp.inf)

    m_new = jnp.maximum(m_scr[...], jnp.max(s, axis=0, keepdims=True))   # (1, TQ)
    alpha = jnp.exp(m_scr[...] - m_new)
    p = jnp.exp(s - m_new)                                               # (TK, TQ)
    l_scr[...] = alpha * l_scr[...] + jnp.sum(p, axis=0, keepdims=True)
    acc_scr[...] = alpha * acc_scr[...] + jnp.dot(
        v, p.astype(v.dtype), preferred_element_type=jnp.float32)        # (C, TQ)
    m_scr[...] = m_new

    @pl.when(ki == pl.num_programs(2) - 1)
    def _():
        inv_l = pl.reciprocal(l_scr[...], approx=True)
        o_ref[0] = (acc_scr[...] * inv_l).astype(o_ref.dtype)


def cross_attention_core(y1, s1, wq, wk, wv):
    """Q=y1@Wq, K=y1@Wk, V=s1@Wv, out = softmax(QK^T/sqrt(C)) @ V, NCDHW layout."""
    B, C = y1.shape[:2]
    spatial = y1.shape[2:]
    L = int(np.prod(spatial))
    Lp = _round_up(L, _LANE)

    yf = _pad_last(y1.reshape(B, C, L), Lp)     # (B, C, Lp), zero-padded keys
    sf = _pad_last(s1.reshape(B, C, L), Lp)

    scale = 1.0 / math.sqrt(C)
    itemsize = jnp.dtype(y1.dtype).itemsize
    TL = _pick_tile(Lp, 2 * (2 * C * itemsize + 3 * C * 2),
                    candidates=(8192, 4096, 2048, 1024, 512, 256, 128))
    nl = Lp // TL

    wqT = jnp.transpose(wq).astype(jnp.float32)
    wkT = jnp.transpose(wk).astype(jnp.float32)
    wvT = jnp.transpose(wv).astype(jnp.float32)

    q, k, v = pl.pallas_call(
        functools.partial(_qkv_proj_kernel, scale=scale),
        out_shape=(jax.ShapeDtypeStruct((B, C, Lp), jnp.bfloat16),) * 3,
        grid=(B, nl),
        in_specs=[
            pl.BlockSpec((1, C, TL), lambda b, li: (b, 0, li)),
            pl.BlockSpec((1, C, TL), lambda b, li: (b, 0, li)),
            pl.BlockSpec((C, C), lambda b, li: (0, 0)),
            pl.BlockSpec((C, C), lambda b, li: (0, 0)),
            pl.BlockSpec((C, C), lambda b, li: (0, 0)),
        ],
        out_specs=(pl.BlockSpec((1, C, TL), lambda b, li: (b, 0, li)),) * 3,
        compiler_params=pltpu.CompilerParams(
            dimension_semantics=("parallel", "parallel")),
    )(yf, sf, wqT, wkT, wvT)

    # Decoupled query / key tiles (TQ large to cut K/V re-reads, TK moderate).
    TQ = max(t for t in (1024, 512, 256, 128) if Lp % t == 0)
    TK = max(t for t in (512, 256, 128) if Lp % t == 0)
    nq, nk = Lp // TQ, Lp // TK

    out = pl.pallas_call(
        functools.partial(_attn_kernel, l_actual=L, tk=TK,
                          needs_mask=(Lp != L)),
        out_shape=jax.ShapeDtypeStruct((B, C, Lp), y1.dtype),
        grid=(B, nq, nk),
        in_specs=[
            pl.BlockSpec((1, C, TQ), lambda b, qi, ki: (b, 0, qi)),
            pl.BlockSpec((1, C, TK), lambda b, qi, ki: (b, 0, ki)),
            pl.BlockSpec((1, C, TK), lambda b, qi, ki: (b, 0, ki)),
        ],
        out_specs=pl.BlockSpec((1, C, TQ), lambda b, qi, ki: (b, 0, qi)),
        scratch_shapes=[
            pltpu.VMEM((1, TQ), jnp.float32),   # running max
            pltpu.VMEM((1, TQ), jnp.float32),   # running denominator
            pltpu.VMEM((C, TQ), jnp.float32),   # output accumulator
        ],
        compiler_params=pltpu.CompilerParams(
            dimension_semantics=("parallel", "parallel", "arbitrary")),
    )(q, k, v)

    return out[:, :, :L].reshape(B, C, *spatial)


# ---------------------------------------------------------------------------
# Kernels 2+3: fused 1x1x1 Conv3d + GroupNorm + ReLU (two-phase reduction).
#   phase 1: spatial-tiled f32 sum / sum-of-squares of the *bias-free* conv
#            output (padded zero columns contribute exactly 0).
#   between: tiny per-(batch, group) stats + bias fold in plain jnp.
#   phase 2: recompute the conv per tile, apply folded affine + ReLU,
#            lane-dense full-width stores.
# ---------------------------------------------------------------------------
def _pwconv_stats_kernel(x_ref, w_ref, sum_ref, ssq_ref):
    si = pl.program_id(1)

    @pl.when(si == 0)
    def _():
        sum_ref[...] = jnp.zeros(sum_ref.shape, sum_ref.dtype)
        ssq_ref[...] = jnp.zeros(ssq_ref.shape, ssq_ref.dtype)

    h = jnp.dot(w_ref[...], x_ref[0], preferred_element_type=jnp.float32)
    sum_ref[0] += jnp.sum(h, axis=-1, keepdims=True)
    ssq_ref[0] += jnp.sum(h * h, axis=-1, keepdims=True)


def _pwconv_affine_relu_kernel(x_ref, w_ref, scale_ref, shift_ref, o_ref):
    h = jnp.dot(w_ref[...], x_ref[0], preferred_element_type=jnp.float32)
    y = h * scale_ref[0] + shift_ref[0]
    o_ref[0] = jnp.maximum(y, 0.0).astype(o_ref.dtype)


def pwconv_gn_relu(x, w, b, gamma, beta, num_groups, eps=1e-5):
    """ReLU(GroupNorm(Conv3d_1x1x1(x))); x: (B, Cin, D, H, W), w: (Cout, Cin)."""
    B, Cin = x.shape[:2]
    spatial = x.shape[2:]
    S = int(np.prod(spatial))
    Sp = _round_up(S, _LANE)
    Cout = w.shape[0]

    x2 = _pad_last(x.reshape(B, Cin, S), Sp)
    wf = w.astype(jnp.float32)

    TS = _pick_tile(Sp, 2 * (Cin + Cout) * 4)
    ns = Sp // TS

    sums, ssqs = pl.pallas_call(
        _pwconv_stats_kernel,
        out_shape=(jax.ShapeDtypeStruct((B, Cout, 1), jnp.float32),
                   jax.ShapeDtypeStruct((B, Cout, 1), jnp.float32)),
        grid=(B, ns),
        in_specs=[
            pl.BlockSpec((1, Cin, TS), lambda bi, si: (bi, 0, si)),
            pl.BlockSpec((Cout, Cin), lambda bi, si: (0, 0)),
        ],
        out_specs=(pl.BlockSpec((1, Cout, 1), lambda bi, si: (bi, 0, 0)),
                   pl.BlockSpec((1, Cout, 1), lambda bi, si: (bi, 0, 0))),
        compiler_params=pltpu.CompilerParams(
            dimension_semantics=("parallel", "arbitrary")),
    )(x2, wf)

    # Tiny per-(batch, group) statistics; fold the conv bias analytically so the
    # stats kernel never saw it (keeps zero-padded columns exactly neutral).
    bf = b.astype(jnp.float32)
    sum_nb = sums[..., 0]                                    # (B, Cout)
    ssq_nb = ssqs[..., 0]
    sum_h = sum_nb + bf[None, :] * S
    ssq_h = ssq_nb + 2.0 * bf[None, :] * sum_nb + (bf * bf)[None, :] * S

    cpg = Cout // num_groups
    count = cpg * S
    gsum = sum_h.reshape(B, num_groups, cpg).sum(axis=-1)
    gssq = ssq_h.reshape(B, num_groups, cpg).sum(axis=-1)
    mean = gsum / count
    var = gssq / count - mean * mean
    rstd = lax.rsqrt(jnp.maximum(var, 0.0) + eps)
    mean_c = jnp.repeat(mean, cpg, axis=1)                   # (B, Cout)
    rstd_c = jnp.repeat(rstd, cpg, axis=1)
    g = gamma.astype(jnp.float32)[None, :]
    scale_hat = (rstd_c * g).reshape(B, Cout, 1)
    shift_hat = (beta.astype(jnp.float32)[None, :]
                 + (bf[None, :] - mean_c) * rstd_c * g).reshape(B, Cout, 1)

    out = pl.pallas_call(
        _pwconv_affine_relu_kernel,
        out_shape=jax.ShapeDtypeStruct((B, Cout, Sp), x.dtype),
        grid=(B, ns),
        in_specs=[
            pl.BlockSpec((1, Cin, TS), lambda bi, si: (bi, 0, si)),
            pl.BlockSpec((Cout, Cin), lambda bi, si: (0, 0)),
            pl.BlockSpec((1, Cout, 1), lambda bi, si: (bi, 0, 0)),
            pl.BlockSpec((1, Cout, 1), lambda bi, si: (bi, 0, 0)),
        ],
        out_specs=pl.BlockSpec((1, Cout, TS), lambda bi, si: (bi, 0, si)),
        compiler_params=pltpu.CompilerParams(
            dimension_semantics=("parallel", "parallel")),
    )(x2, wf, scale_hat, shift_hat)

    return out[:, :, :S].reshape(B, Cout, *spatial)


# ---------------------------------------------------------------------------
# Kernel 4: fused z * s gating + channel concatenation ([z*s, y] along C).
# Output laid out as (B, 2, C, Sp) so every store is a full lane-dense slab;
# the trailing reshape to (B, 2C, ...) is a contiguous view.
# ---------------------------------------------------------------------------
def _gate_concat_kernel(z_ref, s_ref, y_ref, o_ref):
    o_ref[0, 0] = z_ref[0] * s_ref[0]
    o_ref[0, 1] = y_ref[0]


def gate_mul_concat(z, s, y):
    B, C = z.shape[:2]
    spatial = z.shape[2:]
    S = int(np.prod(spatial))
    Sp = _round_up(S, _LANE)
    itemsize = jnp.dtype(z.dtype).itemsize
    TS = _pick_tile(Sp, 2 * 5 * C * itemsize)
    ns = Sp // TS

    z2 = _pad_last(z.reshape(B, C, S), Sp)
    s2 = _pad_last(s.reshape(B, C, S), Sp)
    y2 = _pad_last(y.reshape(B, C, S), Sp)

    out = pl.pallas_call(
        _gate_concat_kernel,
        out_shape=jax.ShapeDtypeStruct((B, 2, C, Sp), z.dtype),
        grid=(B, ns),
        in_specs=[
            pl.BlockSpec((1, C, TS), lambda bi, si: (bi, 0, si)),
            pl.BlockSpec((1, C, TS), lambda bi, si: (bi, 0, si)),
            pl.BlockSpec((1, C, TS), lambda bi, si: (bi, 0, si)),
        ],
        out_specs=pl.BlockSpec((1, 2, C, TS), lambda bi, si: (bi, 0, 0, si)),
        compiler_params=pltpu.CompilerParams(
            dimension_semantics=("parallel", "parallel")),
    )(z2, s2, y2)

    return out[..., :S].reshape(B, 2 * C, *spatial)


# ---------------------------------------------------------------------------
# Plain-JAX building blocks (standard XLA ops; shared by kernel + reference path).
# ---------------------------------------------------------------------------
def positional_encoding_permute3d(b, c, dx, dy, dz, dtype=jnp.float32):
    """PositionalEncodingPermute3D(c) applied to a (b, c, dx, dy, dz) tensor."""
    ch = int(math.ceil(c / 6) * 2)
    if ch % 2:
        ch += 1
    inv_freq = 1.0 / (10000.0 ** (np.arange(0, ch, 2, dtype=np.float64) / ch))
    inv_freq = jnp.asarray(inv_freq, dtype)

    def axis_emb(n):
        ang = jnp.arange(n, dtype=dtype)[:, None] * inv_freq[None, :]
        return jnp.concatenate([jnp.sin(ang), jnp.cos(ang)], axis=-1)   # (n, ch)

    ex = axis_emb(dx)[:, None, None, :]
    ey = axis_emb(dy)[None, :, None, :]
    ez = axis_emb(dz)[None, None, :, :]
    emb = jnp.zeros((dx, dy, dz, 3 * ch), dtype)
    emb = emb.at[..., :ch].set(jnp.broadcast_to(ex, (dx, dy, dz, ch)))
    emb = emb.at[..., ch:2 * ch].set(jnp.broadcast_to(ey, (dx, dy, dz, ch)))
    emb = emb.at[..., 2 * ch:].set(jnp.broadcast_to(ez, (dx, dy, dz, ch)))
    pe = jnp.transpose(emb[None, ..., :c], (0, 4, 1, 2, 3))   # (1, c, dx, dy, dz)
    return jnp.broadcast_to(pe, (b, c, dx, dy, dz))


def maxpool3d_2(x):
    return lax.reduce_window(x, -jnp.inf, lax.max,
                             (1, 1, 2, 2, 2), (1, 1, 2, 2, 2), 'VALID')


def conv3d(x, w, b, padding):
    out = lax.conv_general_dilated(
        x, w, window_strides=(1, 1, 1),
        padding=[(padding, padding)] * 3,
        dimension_numbers=('NCDHW', 'OIDHW', 'NCDHW'),
        precision=lax.Precision.HIGHEST)
    return out + b[None, :, None, None, None]


def _upsample_axis_x2_align_corners(x, axis):
    n_in = x.shape[axis]
    n_out = 2 * n_in
    if n_in == 1:
        return jnp.repeat(x, 2, axis=axis)
    pos = jnp.arange(n_out, dtype=jnp.float32) * (n_in - 1) / (n_out - 1)
    lo = jnp.clip(jnp.floor(pos).astype(jnp.int32), 0, n_in - 2)
    frac = pos - lo.astype(jnp.float32)
    xl = jnp.take(x, lo, axis=axis)
    xh = jnp.take(x, lo + 1, axis=axis)
    shape = [1] * x.ndim
    shape[axis] = n_out
    frac = frac.reshape(shape)
    return xl * (1.0 - frac) + xh * frac


def upsample_trilinear_x2_ac(x):
    """nn.Upsample(scale_factor=2, mode='trilinear', align_corners=True)."""
    for ax in (2, 3, 4):
        x = _upsample_axis_x2_align_corners(x, ax)
    return x


def equalize_dimensions(x, target):
    pads = [(0, 0), (0, 0)]
    for ax in (2, 3, 4):
        diff = abs(x.shape[ax] - target.shape[ax])
        lo = diff // 2
        pads.append((lo, diff - lo))
    return jnp.pad(x, pads)


# ---------------------------------------------------------------------------
# Full CrossAttention forward (Pallas kernels + XLA plumbing).
# ---------------------------------------------------------------------------
def cross_attention_forward(y, s, p):
    B, Cy, Dy, Hy, Wy = y.shape
    _, Cs, Ds, Hs, Ws = s.shape

    s = s + positional_encoding_permute3d(B, Cs, Ds, Hs, Ws, s.dtype)
    y = y + positional_encoding_permute3d(B, Cy, Dy, Hy, Wy, y.dtype)

    # Sconv: MaxPool3d(2) -> Conv3d 1x1 -> GroupNorm(4) -> ReLU
    s1 = pwconv_gn_relu(maxpool3d_2(s), p['sconv_w'], p['sconv_b'],
                        p['sconv_gamma'], p['sconv_beta'], num_groups=4)
    # Yconv: Conv3d 1x1 -> GroupNorm(4) -> ReLU
    y1 = pwconv_gn_relu(y, p['yconv_w'], p['yconv_b'],
                        p['yconv_gamma'], p['yconv_beta'], num_groups=4)

    # Q/K from y1, V from s1, scaled-dot-product attention (fused Pallas kernels).
    z = cross_attention_core(y1, s1, p['wq'], p['wk'], p['wv'])

    # Zupsample: trilinear x2 (align_corners=True) -> Conv3d 3x3x3 (pad 1)
    z = conv3d(upsample_trilinear_x2_ac(z), p['zups_w'], p['zups_b'], padding=1)
    z = equalize_dimensions(z, s)

    # Yupsample: trilinear x2 -> Conv3d 3x3x3 -> Conv3d 1x1 -> GroupNorm(4) -> ReLU
    yu = conv3d(upsample_trilinear_x2_ac(y), p['yups3_w'], p['yups3_b'], padding=1)
    yu = pwconv_gn_relu(yu, p['yups1_w'], p['yups1_b'],
                        p['yups_gamma'], p['yups_beta'], num_groups=4)
    yu = equalize_dimensions(yu, s)

    # s = z * s ; x = concat([s, y], dim=1)   (fused Pallas kernel)
    return gate_mul_concat(z, s, yu)


# ---------------------------------------------------------------------------
# Pure-JAX reference (no Pallas) of the same forward, for correctness checks.
# ---------------------------------------------------------------------------
def _group_norm_ref(x, gamma, beta, num_groups, eps=1e-5):
    B, C = x.shape[:2]
    xg = x.reshape(B, num_groups, -1)
    mean = xg.mean(axis=-1, keepdims=True)
    var = ((xg - mean) ** 2).mean(axis=-1, keepdims=True)
    xn = ((xg - mean) / jnp.sqrt(var + eps)).reshape(x.shape)
    return xn * gamma.reshape(1, C, 1, 1, 1) + beta.reshape(1, C, 1, 1, 1)


def _pwconv_gn_relu_ref(x, w, b, gamma, beta, num_groups):
    h = jnp.einsum('oi,bidhw->bodhw', w, x,
                   precision=lax.Precision.HIGHEST) + b.reshape(1, -1, 1, 1, 1)
    return jax.nn.relu(_group_norm_ref(h, gamma, beta, num_groups))


def _reference_forward(y, s, p):
    B, Cy, Dy, Hy, Wy = y.shape
    _, Cs, Ds, Hs, Ws = s.shape
    s = s + positional_encoding_permute3d(B, Cs, Ds, Hs, Ws, s.dtype)
    y = y + positional_encoding_permute3d(B, Cy, Dy, Hy, Wy, y.dtype)

    s1 = _pwconv_gn_relu_ref(maxpool3d_2(s), p['sconv_w'], p['sconv_b'],
                             p['sconv_gamma'], p['sconv_beta'], 4)
    y1 = _pwconv_gn_relu_ref(y, p['yconv_w'], p['yconv_b'],
                             p['yconv_gamma'], p['yconv_beta'], 4)

    b, c, d, h, w = y1.shape
    L = d * h * w
    s1f = jnp.transpose(s1.reshape(b, c, L), (0, 2, 1))
    y1f = jnp.transpose(y1.reshape(b, c, L), (0, 2, 1))
    hp = lax.Precision.HIGHEST
    Q = jnp.einsum('blc,cd->bld', y1f, p['wq'], precision=hp)
    K = jnp.einsum('blc,cd->bld', y1f, p['wk'], precision=hp)
    V = jnp.einsum('blc,cd->bld', s1f, p['wv'], precision=hp)
    A = jax.nn.softmax(
        jnp.einsum('bqc,bkc->bqk', Q, K, precision=hp) / math.sqrt(c), axis=-1)
    z = jnp.einsum('bqk,bkc->bqc', A, V, precision=hp)
    z = jnp.transpose(z, (0, 2, 1)).reshape(b, c, d, h, w)

    z = conv3d(upsample_trilinear_x2_ac(z), p['zups_w'], p['zups_b'], padding=1)
    z = equalize_dimensions(z, s)
    yu = conv3d(upsample_trilinear_x2_ac(y), p['yups3_w'], p['yups3_b'], padding=1)
    yu = _pwconv_gn_relu_ref(yu, p['yups1_w'], p['yups1_b'],
                             p['yups_gamma'], p['yups_beta'], 4)
    yu = equalize_dimensions(yu, s)
    return jnp.concatenate([z * s, yu], axis=1)


if __name__ == "__main__":
    # s is the high-res skip feature, y the low-res decoder feature
    # (s spatial = 2x y spatial). Channels small but GroupNorm(4)-compatible.
    B = 2
    Cs, Cy = 8, 16              # in_channels_s, in_channels_y
    Dy = Hy = Wy = 4            # y spatial  -> L = 64 (exercises the 128-padding path)
    Ds, Hs, Ws = 2 * Dy, 2 * Hy, 2 * Wy

    key = jax.random.PRNGKey(0)
    keys = jax.random.split(key, 20)

    def uni(k, shape, fan_in):
        bnd = 1.0 / math.sqrt(fan_in)
        return jax.random.uniform(k, shape, jnp.float32, -bnd, bnd)

    y = jax.random.normal(keys[0], (B, Cy, Dy, Hy, Wy), jnp.float32)
    s = jax.random.normal(keys[1], (B, Cs, Ds, Hs, Ws), jnp.float32)

    params = {
        # Sconv: Conv3d(Cs, Cs, 1) + GroupNorm(4, Cs)
        'sconv_w': uni(keys[2], (Cs, Cs), Cs),
        'sconv_b': uni(keys[3], (Cs,), Cs),
        'sconv_gamma': 1.0 + 0.1 * jax.random.normal(keys[4], (Cs,), jnp.float32),
        'sconv_beta': 0.1 * jax.random.normal(keys[5], (Cs,), jnp.float32),
        # Yconv: Conv3d(Cy, Cs, 1) + GroupNorm(4, Cs)
        'yconv_w': uni(keys[6], (Cs, Cy), Cy),
        'yconv_b': uni(keys[7], (Cs,), Cy),
        'yconv_gamma': 1.0 + 0.1 * jax.random.normal(keys[8], (Cs,), jnp.float32),
        'yconv_beta': 0.1 * jax.random.normal(keys[9], (Cs,), jnp.float32),
        # query / key / value Embedding weights (x @ W)
        'wq': uni(keys[10], (Cs, Cs), Cs),
        'wk': uni(keys[11], (Cs, Cs), Cs),
        'wv': uni(keys[12], (Cs, Cs), Cs),
        # Zupsample: Conv3d(Cs, Cs, 3, padding=1)
        'zups_w': uni(keys[13], (Cs, Cs, 3, 3, 3), Cs * 27),
        'zups_b': uni(keys[14], (Cs,), Cs * 27),
        # Yupsample: Conv3d(Cy, Cs, 3, padding=1) -> Conv3d(Cs, Cs, 1) -> GN(4)
        'yups3_w': uni(keys[15], (Cs, Cy, 3, 3, 3), Cy * 27),
        'yups3_b': uni(keys[16], (Cs,), Cy * 27),
        'yups1_w': uni(keys[17], (Cs, Cs), Cs),
        'yups1_b': uni(keys[18], (Cs,), Cs),
        'yups_gamma': 1.0 + 0.1 * jax.random.normal(keys[19], (Cs,), jnp.float32),
        'yups_beta': jnp.zeros((Cs,), jnp.float32),
    }

    out = jax.jit(cross_attention_forward)(y, s, params)
    out = jax.block_until_ready(out)

    ref = _reference_forward(y, s, params)
    assert out.shape == (B, 2 * Cs, Ds, Hs, Ws), out.shape
    # The attention matmuls run with bf16 MXU operands (f32 accumulation), so the
    # comparison against the Precision.HIGHEST f32 reference uses a bf16-level
    # tolerance (~1% relative) rather than the original 2e-3.
    max_err = float(jnp.max(jnp.abs(out - ref)))
    assert jnp.allclose(out, ref, atol=5e-2, rtol=5e-2), max_err

    print("KERNEL_OK")
</pallas_src>

<mosaic_0001>
module attributes {stable_mosaic.version = 11 : i64} {
  func.func @_pwconv_stats_kernel(%arg0: i32, %arg1: i32, %arg2: memref<1x16x128xf32, #tpu.memory_space<vmem>>, %arg3: memref<8x16xf32, #tpu.memory_space<vmem>>, %arg4: memref<1x8x1xf32, #tpu.memory_space<vmem>>, %arg5: memref<1x8x1xf32, #tpu.memory_space<vmem>>) attributes {dimension_semantics = [#tpu.dimension_semantics<parallel>, #tpu.dimension_semantics<arbitrary>], iteration_bounds = array<i64: 2, 1>, scalar_prefetch = 0 : i64, scratch_operands = 0 : i64, tpu.core_type = #tpu.core_type<tc>, window_params = [{transform_indices = @transform_0, window_bounds = array<i64: 1, 16, 128>}, {pipeline_mode = #tpu.pipeline_mode<synchronous>, transform_indices = @transform_1, window_bounds = array<i64: 8, 16>}, {transform_indices = @transform_2, window_bounds = array<i64: 1, 8, 1>}, {transform_indices = @transform_3, window_bounds = array<i64: 1, 8, 1>}]} {
    %c0_i32 = arith.constant 0 : i32
    %0 = arith.cmpi eq, %arg1, %c0_i32 : i32
    %1 = arith.extui %0 : i1 to i32
    %c0_i32_0 = arith.constant 0 : i32
    %2 = arith.cmpi ne, %1, %c0_i32_0 : i32
    scf.if %2 {
      %cst_19 = arith.constant 0.000000e+00 : f32
      %24 = vector.broadcast %cst_19 : f32 to vector<1x8x1xf32>
      %c0_20 = arith.constant 0 : index
      %c0_21 = arith.constant 0 : index
      %c0_22 = arith.constant 0 : index
      %25 = vector.load %arg4[%c0_20, %c0_21, %c0_22] : memref<1x8x1xf32, #tpu.memory_space<vmem>>, vector<1x8x1xf32>
      tpu.vector_store %arg4[%c0_20, %c0_21, %c0_22], %24 {strides = array<i32>} : memref<1x8x1xf32, #tpu.memory_space<vmem>>, vector<1x8x1xf32>,
      %cst_23 = arith.constant 0.000000e+00 : f32
      %26 = vector.broadcast %cst_23 : f32 to vector<1x8x1xf32>
      %c0_24 = arith.constant 0 : index
      %c0_25 = arith.constant 0 : index
      %c0_26 = arith.constant 0 : index
      %27 = vector.load %arg5[%c0_24, %c0_25, %c0_26] : memref<1x8x1xf32, #tpu.memory_space<vmem>>, vector<1x8x1xf32>
      tpu.vector_store %arg5[%c0_24, %c0_25, %c0_26], %26 {strides = array<i32>} : memref<1x8x1xf32, #tpu.memory_space<vmem>>, vector<1x8x1xf32>,
    } else {
    }
    %c0 = arith.constant 0 : index
    %c0_1 = arith.constant 0 : index
    %3 = vector.load %arg3[%c0, %c0_1] : memref<8x16xf32, #tpu.memory_space<vmem>>, vector<8x16xf32>
    %c0_2 = arith.constant 0 : index
    %c0_3 = arith.constant 0 : index
    %c0_4 = arith.constant 0 : index
    %4 = vector.load %arg2[%c0_2, %c0_3, %c0_4] : memref<1x16x128xf32, #tpu.memory_space<vmem>>, vector<1x16x128xf32>
    %5 = vector.shape_cast %4 : vector<1x16x128xf32> to vector<16x128xf32>
    %cst = arith.constant dense<0.000000e+00> : vector<8x128xf32>
    %6 = tpu.matmul %3, %5, %cst {dimension_numbers = #tpu.dot_dimension_numbers<[1], [0], [0], [1], [0, 0, 1, 1], [], []>} : vector<8x16xf32>, vector<16x128xf32>, vector<8x128xf32> -> vector<8x128xf32>
    %c0_5 = arith.constant 0 : index
    %c0_6 = arith.constant 0 : index
    %c0_7 = arith.constant 0 : index
    %7 = vector.load %arg4[%c0_5, %c0_6, %c0_7] : memref<1x8x1xf32, #tpu.memory_space<vmem>>, vector<1x8x1xf32>
    %8 = vector.shape_cast %7 : vector<1x8x1xf32> to vector<8x1xf32>
    %cst_8 = arith.constant dense<0.000000e+00> : vector<8xf32>
    %9 = vector.multi_reduction <add>, %6, %cst_8 [1] : vector<8x128xf32> to vector<8xf32>
    %10 = vector.shape_cast %9 : vector<8xf32> to vector<8x1xf32>
    %11 = arith.addf %8, %10 : vector<8x1xf32>
    %c0_9 = arith.constant 0 : index
    %c0_10 = arith.constant 0 : index
    %c0_11 = arith.constant 0 : index
    %12 = vector.load %arg4[%c0_9, %c0_10, %c0_11] : memref<1x8x1xf32, #tpu.memory_space<vmem>>, vector<1x8x1xf32>
    %13 = vector.shape_cast %12 : vector<1x8x1xf32> to vector<8x1xf32>
    %14 = vector.shape_cast %11 : vector<8x1xf32> to vector<1x8x1xf32>
    tpu.vector_store %arg4[%c0_9, %c0_10, %c0_11], %14 {strides = array<i32>} : memref<1x8x1xf32, #tpu.memory_space<vmem>>, vector<1x8x1xf32>,
    %c0_12 = arith.constant 0 : index
    %c0_13 = arith.constant 0 : index
    %c0_14 = arith.constant 0 : index
    %15 = vector.load %arg5[%c0_12, %c0_13, %c0_14] : memref<1x8x1xf32, #tpu.memory_space<vmem>>, vector<1x8x1xf32>
    %16 = vector.shape_cast %15 : vector<1x8x1xf32> to vector<8x1xf32>
    %17 = arith.mulf %6, %6 : vector<8x128xf32>
    %cst_15 = arith.constant dense<0.000000e+00> : vector<8xf32>
    %18 = vector.multi_reduction <add>, %17, %cst_15 [1] : vector<8x128xf32> to vector<8xf32>
    %19 = vector.shape_cast %18 : vector<8xf32> to vector<8x1xf32>
    %20 = arith.addf %16, %19 : vector<8x1xf32>
    %c0_16 = arith.constant 0 : index
    %c0_17 = arith.constant 0 : index
    %c0_18 = arith.constant 0 : index
    %21 = vector.load %arg5[%c0_16, %c0_17, %c0_18] : memref<1x8x1xf32, #tpu.memory_space<vmem>>, vector<1x8x1xf32>
    %22 = vector.shape_cast %21 : vector<1x8x1xf32> to vector<8x1xf32>
    %23 = vector.shape_cast %20 : vector<8x1xf32> to vector<1x8x1xf32>
    tpu.vector_store %arg5[%c0_16, %c0_17, %c0_18], %23 {strides = array<i32>} : memref<1x8x1xf32, #tpu.memory_space<vmem>>, vector<1x8x1xf32>,
    return
  }
  func.func @transform_0(%arg0: i32, %arg1: i32) -> (i32, i32, i32) {
    %c0_i32 = arith.constant 0 : i32
    %c0_i32_0 = arith.constant 0 : i32
    return %arg0, %c0_i32, %arg1 : i32, i32, i32
  }
  func.func @transform_1(%arg0: i32, %arg1: i32) -> (i32, i32) {
    %c0_i32 = arith.constant 0 : i32
    %c0_i32_0 = arith.constant 0 : i32
    %c0_i32_1 = arith.constant 0 : i32
    return %c0_i32, %c0_i32_0 : i32, i32
  }
  func.func @transform_2(%arg0: i32, %arg1: i32) -> (i32, i32, i32) {
    %c0_i32 = arith.constant 0 : i32
    %c0_i32_0 = arith.constant 0 : i32
    %c0_i32_1 = arith.constant 0 : i32
    return %arg0, %c0_i32, %c0_i32_0 : i32, i32, i32
  }
  func.func @transform_3(%arg0: i32, %arg1: i32) -> (i32, i32, i32) {
    %c0_i32 = arith.constant 0 : i32
    %c0_i32_0 = arith.constant 0 : i32
    %c0_i32_1 = arith.constant 0 : i32
    return %arg0, %c0_i32, %c0_i32_0 : i32, i32, i32
  }
}

module attributes {stable_mosaic.version = 11 : i64} {
  func.func @_pwconv_affine_relu_kernel(%arg0: i32, %arg1: i32, %arg2: memref<1x16x128xf32, #tpu.memory_space<vmem>>, %arg3: memref<8x16xf32, #tpu.memory_space<vmem>>, %arg4: memref<1x8x1xf32, #tpu.memory_space<vmem>>, %arg5: memref<1x8x1xf32, #tpu.memory_space<vmem>>, %arg6: memref<1x8x128xf32, #tpu.memory_space<vmem>>) attributes {dimension_semantics = [#tpu.dimension_semantics<parallel>, #tpu.dimension_semantics<parallel>], iteration_bounds = array<i64: 2, 1>, scalar_prefetch = 0 : i64, scratch_operands = 0 : i64, tpu.core_type = #tpu.core_type<tc>, window_params = [{transform_indices = @transform_0, window_bounds = array<i64: 1, 16, 128>}, {pipeline_mode = #tpu.pipeline_mode<synchronous>, transform_indices = @transform_1, window_bounds = array<i64: 8, 16>}, {transform_indices = @transform_2, window_bounds = array<i64: 1, 8, 1>}, {transform_indices = @transform_3, window_bounds = array<i64: 1, 8, 1>}, {transform_indices = @transform_4, window_bounds = array<i64: 1, 8, 128>}]} {
    %c0 = arith.constant 0 : index
    %c0_0 = arith.constant 0 : index
    %0 = vector.load %arg3[%c0, %c0_0] : memref<8x16xf32, #tpu.memory_space<vmem>>, vector<8x16xf32>
    %c0_1 = arith.constant 0 : index
    %c0_2 = arith.constant 0 : index
    %c0_3 = arith.constant 0 : index
    %1 = vector.load %arg2[%c0_1, %c0_2, %c0_3] : memref<1x16x128xf32, #tpu.memory_space<vmem>>, vector<1x16x128xf32>
    %2 = vector.shape_cast %1 : vector<1x16x128xf32> to vector<16x128xf32>
    %cst = arith.constant dense<0.000000e+00> : vector<8x128xf32>
    %3 = tpu.matmul %0, %2, %cst {dimension_numbers = #tpu.dot_dimension_numbers<[1], [0], [0], [1], [0, 0, 1, 1], [], []>} : vector<8x16xf32>, vector<16x128xf32>, vector<8x128xf32> -> vector<8x128xf32>
    %c0_4 = arith.constant 0 : index
    %c0_5 = arith.constant 0 : index
    %c0_6 = arith.constant 0 : index
    %4 = vector.load %arg4[%c0_4, %c0_5, %c0_6] : memref<1x8x1xf32, #tpu.memory_space<vmem>>, vector<1x8x1xf32>
    %5 = vector.shape_cast %4 : vector<1x8x1xf32> to vector<8x1xf32>
    %6 = vector.broadcast %5 : vector<8x1xf32> to vector<8x128xf32>
    %7 = arith.mulf %3, %6 : vector<8x128xf32>
    %c0_7 = arith.constant 0 : index
    %c0_8 = arith.constant 0 : index
    %c0_9 = arith.constant 0 : index
    %8 = vector.load %arg5[%c0_7, %c0_8, %c0_9] : memref<1x8x1xf32, #tpu.memory_space<vmem>>, vector<1x8x1xf32>
    %9 = vector.shape_cast %8 : vector<1x8x1xf32> to vector<8x1xf32>
    %10 = vector.broadcast %9 : vector<8x1xf32> to vector<8x128xf32>
    %11 = arith.addf %7, %10 : vector<8x128xf32>
    %cst_10 = arith.constant 0.000000e+00 : f32
    %12 = vector.broadcast %cst_10 : f32 to vector<8x128xf32>
    %13 = arith.maximumf %11, %12 : vector<8x128xf32>
    %c0_11 = arith.constant 0 : index
    %c0_12 = arith.constant 0 : index
    %c0_13 = arith.constant 0 : index
    %14 = vector.load %arg6[%c0_11, %c0_12, %c0_13] : memref<1x8x128xf32, #tpu.memory_space<vmem>>, vector<1x8x128xf32>
    %15 = vector.shape_cast %14 : vector<1x8x128xf32> to vector<8x128xf32>
    %16 = vector.shape_cast %13 : vector<8x128xf32> to vector<1x8x128xf32>
    tpu.vector_store %arg6[%c0_11, %c0_12, %c0_13], %16 {strides = array<i32>} : memref<1x8x128xf32, #tpu.memory_space<vmem>>, vector<1x8x128xf32>,
    return
  }
  func.func @transform_0(%arg0: i32, %arg1: i32) -> (i32, i32, i32) {
    %c0_i32 = arith.constant 0 : i32
    %c0_i32_0 = arith.constant 0 : i32
    return %arg0, %c0_i32, %arg1 : i32, i32, i32
  }
  func.func @transform_1(%arg0: i32, %arg1: i32) -> (i32, i32) {
    %c0_i32 = arith.constant 0 : i32
    %c0_i32_0 = arith.constant 0 : i32
    %c0_i32_1 = arith.constant 0 : i32
    return %c0_i32, %c0_i32_0 : i32, i32
  }
  func.func @transform_2(%arg0: i32, %arg1: i32) -> (i32, i32, i32) {
    %c0_i32 = arith.constant 0 : i32
    %c0_i32_0 = arith.constant 0 : i32
    %c0_i32_1 = arith.constant 0 : i32
    return %arg0, %c0_i32, %c0_i32_0 : i32, i32, i32
  }
  func.func @transform_3(%arg0: i32, %arg1: i32) -> (i32, i32, i32) {
    %c0_i32 = arith.constant 0 : i32
    %c0_i32_0 = arith.constant 0 : i32
    %c0_i32_1 = arith.constant 0 : i32
    return %arg0, %c0_i32, %c0_i32_0 : i32, i32, i32
  }
  func.func @transform_4(%arg0: i32, %arg1: i32) -> (i32, i32, i32) {
    %c0_i32 = arith.constant 0 : i32
    %c0_i32_0 = arith.constant 0 : i32
    return %arg0, %c0_i32, %arg1 : i32, i32, i32
  }
}

module attributes {stable_mosaic.version = 11 : i64} {
  func.func @_pwconv_stats_kernel(%arg0: i32, %arg1: i32, %arg2: memref<1x8x128xf32, #tpu.memory_space<vmem>>, %arg3: memref<8x8xf32, #tpu.memory_space<vmem>>, %arg4: memref<1x8x1xf32, #tpu.memory_space<vmem>>, %arg5: memref<1x8x1xf32, #tpu.memory_space<vmem>>) attributes {dimension_semantics = [#tpu.dimension_semantics<parallel>, #tpu.dimension_semantics<arbitrary>], iteration_bounds = array<i64: 2, 1>, scalar_prefetch = 0 : i64, scratch_operands = 0 : i64, tpu.core_type = #tpu.core_type<tc>, window_params = [{transform_indices = @transform_0, window_bounds = array<i64: 1, 8, 128>}, {pipeline_mode = #tpu.pipeline_mode<synchronous>, transform_indices = @transform_1, window_bounds = array<i64: 8, 8>}, {transform_indices = @transform_2, window_bounds = array<i64: 1, 8, 1>}, {transform_indices = @transform_3, window_bounds = array<i64: 1, 8, 1>}]} {
    %c0_i32 = arith.constant 0 : i32
    %0 = arith.cmpi eq, %arg1, %c0_i32 : i32
    %1 = arith.extui %0 : i1 to i32
    %c0_i32_0 = arith.constant 0 : i32
    %2 = arith.cmpi ne, %1, %c0_i32_0 : i32
    scf.if %2 {
      %cst_19 = arith.constant 0.000000e+00 : f32
      %24 = vector.broadcast %cst_19 : f32 to vector<1x8x1xf32>
      %c0_20 = arith.constant 0 : index
      %c0_21 = arith.constant 0 : index
      %c0_22 = arith.constant 0 : index
      %25 = vector.load %arg4[%c0_20, %c0_21, %c0_22] : memref<1x8x1xf32, #tpu.memory_space<vmem>>, vector<1x8x1xf32>
      tpu.vector_store %arg4[%c0_20, %c0_21, %c0_22], %24 {strides = array<i32>} : memref<1x8x1xf32, #tpu.memory_space<vmem>>, vector<1x8x1xf32>,
      %cst_23 = arith.constant 0.000000e+00 : f32
      %26 = vector.broadcast %cst_23 : f32 to vector<1x8x1xf32>
      %c0_24 = arith.constant 0 : index
      %c0_25 = arith.constant 0 : index
      %c0_26 = arith.constant 0 : index
      %27 = vector.load %arg5[%c0_24, %c0_25, %c0_26] : memref<1x8x1xf32, #tpu.memory_space<vmem>>, vector<1x8x1xf32>
      tpu.vector_store %arg5[%c0_24, %c0_25, %c0_26], %26 {strides = array<i32>} : memref<1x8x1xf32, #tpu.memory_space<vmem>>, vector<1x8x1xf32>,
    } else {
    }
    %c0 = arith.constant 0 : index
    %c0_1 = arith.constant 0 : index
    %3 = vector.load %arg3[%c0, %c0_1] : memref<8x8xf32, #tpu.memory_space<vmem>>, vector<8x8xf32>
    %c0_2 = arith.constant 0 : index
    %c0_3 = arith.constant 0 : index
    %c0_4 = arith.constant 0 : index
    %4 = vector.load %arg2[%c0_2, %c0_3, %c0_4] : memref<1x8x128xf32, #tpu.memory_space<vmem>>, vector<1x8x128xf32>
    %5 = vector.shape_cast %4 : vector<1x8x128xf32> to vector<8x128xf32>
    %cst = arith.constant dense<0.000000e+00> : vector<8x128xf32>
    %6 = tpu.matmul %3, %5, %cst {dimension_numbers = #tpu.dot_dimension_numbers<[1], [0], [0], [1], [0, 0, 1, 1], [], []>} : vector<8x8xf32>, vector<8x128xf32>, vector<8x128xf32> -> vector<8x128xf32>
    %c0_5 = arith.constant 0 : index
    %c0_6 = arith.constant 0 : index
    %c0_7 = arith.constant 0 : index
    %7 = vector.load %arg4[%c0_5, %c0_6, %c0_7] : memref<1x8x1xf32, #tpu.memory_space<vmem>>, vector<1x8x1xf32>
    %8 = vector.shape_cast %7 : vector<1x8x1xf32> to vector<8x1xf32>
    %cst_8 = arith.constant dense<0.000000e+00> : vector<8xf32>
    %9 = vector.multi_reduction <add>, %6, %cst_8 [1] : vector<8x128xf32> to vector<8xf32>
    %10 = vector.shape_cast %9 : vector<8xf32> to vector<8x1xf32>
    %11 = arith.addf %8, %10 : vector<8x1xf32>
    %c0_9 = arith.constant 0 : index
    %c0_10 = arith.constant 0 : index
    %c0_11 = arith.constant 0 : index
    %12 = vector.load %arg4[%c0_9, %c0_10, %c0_11] : memref<1x8x1xf32, #tpu.memory_space<vmem>>, vector<1x8x1xf32>
    %13 = vector.shape_cast %12 : vector<1x8x1xf32> to vector<8x1xf32>
    %14 = vector.shape_cast %11 : vector<8x1xf32> to vector<1x8x1xf32>
    tpu.vector_store %arg4[%c0_9, %c0_10, %c0_11], %14 {strides = array<i32>} : memref<1x8x1xf32, #tpu.memory_space<vmem>>, vector<1x8x1xf32>,
    %c0_12 = arith.constant 0 : index
    %c0_13 = arith.constant 0 : index
    %c0_14 = arith.constant 0 : index
    %15 = vector.load %arg5[%c0_12, %c0_13, %c0_14] : memref<1x8x1xf32, #tpu.memory_space<vmem>>, vector<1x8x1xf32>
    %16 = vector.shape_cast %15 : vector<1x8x1xf32> to vector<8x1xf32>
    %17 = arith.mulf %6, %6 : vector<8x128xf32>
    %cst_15 = arith.constant dense<0.000000e+00> : vector<8xf32>
    %18 = vector.multi_reduction <add>, %17, %cst_15 [1] : vector<8x128xf32> to vector<8xf32>
    %19 = vector.shape_cast %18 : vector<8xf32> to vector<8x1xf32>
    %20 = arith.addf %16, %19 : vector<8x1xf32>
    %c0_16 = arith.constant 0 : index
    %c0_17 = arith.constant 0 : index
    %c0_18 = arith.constant 0 : index
    %21 = vector.load %arg5[%c0_16, %c0_17, %c0_18] : memref<1x8x1xf32, #tpu.memory_space<vmem>>, vector<1x8x1xf32>
    %22 = vector.shape_cast %21 : vector<1x8x1xf32> to vector<8x1xf32>
    %23 = vector.shape_cast %20 : vector<8x1xf32> to vector<1x8x1xf32>
    tpu.vector_store %arg5[%c0_16, %c0_17, %c0_18], %23 {strides = array<i32>} : memref<1x8x1xf32, #tpu.memory_space<vmem>>, vector<1x8x1xf32>,
    return
  }
  func.func @transform_0(%arg0: i32, %arg1: i32) -> (i32, i32, i32) {
    %c0_i32 = arith.constant 0 : i32
    %c0_i32_0 = arith.constant 0 : i32
    return %arg0, %c0_i32, %arg1 : i32, i32, i32
  }
  func.func @transform_1(%arg0: i32, %arg1: i32) -> (i32, i32) {
    %c0_i32 = arith.constant 0 : i32
    %c0_i32_0 = arith.constant 0 : i32
    %c0_i32_1 = arith.constant 0 : i32
    return %c0_i32, %c0_i32_0 : i32, i32
  }
  func.func @transform_2(%arg0: i32, %arg1: i32) -> (i32, i32, i32) {
    %c0_i32 = arith.constant 0 : i32
    %c0_i32_0 = arith.constant 0 : i32
    %c0_i32_1 = arith.constant 0 : i32
    return %arg0, %c0_i32, %c0_i32_0 : i32, i32, i32
  }
  func.func @transform_3(%arg0: i32, %arg1: i32) -> (i32, i32, i32) {
    %c0_i32 = arith.constant 0 : i32
    %c0_i32_0 = arith.constant 0 : i32
    %c0_i32_1 = arith.constant 0 : i32
    return %arg0, %c0_i32, %c0_i32_0 : i32, i32, i32
  }
}

module attributes {stable_mosaic.version = 11 : i64} {
  func.func @_pwconv_affine_relu_kernel(%arg0: i32, %arg1: i32, %arg2: memref<1x8x128xf32, #tpu.memory_space<vmem>>, %arg3: memref<8x8xf32, #tpu.memory_space<vmem>>, %arg4: memref<1x8x1xf32, #tpu.memory_space<vmem>>, %arg5: memref<1x8x1xf32, #tpu.memory_space<vmem>>, %arg6: memref<1x8x128xf32, #tpu.memory_space<vmem>>) attributes {dimension_semantics = [#tpu.dimension_semantics<parallel>, #tpu.dimension_semantics<parallel>], iteration_bounds = array<i64: 2, 1>, scalar_prefetch = 0 : i64, scratch_operands = 0 : i64, tpu.core_type = #tpu.core_type<tc>, window_params = [{transform_indices = @transform_0, window_bounds = array<i64: 1, 8, 128>}, {pipeline_mode = #tpu.pipeline_mode<synchronous>, transform_indices = @transform_1, window_bounds = array<i64: 8, 8>}, {transform_indices = @transform_2, window_bounds = array<i64: 1, 8, 1>}, {transform_indices = @transform_3, window_bounds = array<i64: 1, 8, 1>}, {transform_indices = @transform_4, window_bounds = array<i64: 1, 8, 128>}]} {
    %c0 = arith.constant 0 : index
    %c0_0 = arith.constant 0 : index
    %0 = vector.load %arg3[%c0, %c0_0] : memref<8x8xf32, #tpu.memory_space<vmem>>, vector<8x8xf32>
    %c0_1 = arith.constant 0 : index
    %c0_2 = arith.constant 0 : index
    %c0_3 = arith.constant 0 : index
    %1 = vector.load %arg2[%c0_1, %c0_2, %c0_3] : memref<1x8x128xf32, #tpu.memory_space<vmem>>, vector<1x8x128xf32>
    %2 = vector.shape_cast %1 : vector<1x8x128xf32> to vector<8x128xf32>
    %cst = arith.constant dense<0.000000e+00> : vector<8x128xf32>
    %3 = tpu.matmul %0, %2, %cst {dimension_numbers = #tpu.dot_dimension_numbers<[1], [0], [0], [1], [0, 0, 1, 1], [], []>} : vector<8x8xf32>, vector<8x128xf32>, vector<8x128xf32> -> vector<8x128xf32>
    %c0_4 = arith.constant 0 : index
    %c0_5 = arith.constant 0 : index
    %c0_6 = arith.constant 0 : index
    %4 = vector.load %arg4[%c0_4, %c0_5, %c0_6] : memref<1x8x1xf32, #tpu.memory_space<vmem>>, vector<1x8x1xf32>
    %5 = vector.shape_cast %4 : vector<1x8x1xf32> to vector<8x1xf32>
    %6 = vector.broadcast %5 : vector<8x1xf32> to vector<8x128xf32>
    %7 = arith.mulf %3, %6 : vector<8x128xf32>
    %c0_7 = arith.constant 0 : index
    %c0_8 = arith.constant 0 : index
    %c0_9 = arith.constant 0 : index
    %8 = vector.load %arg5[%c0_7, %c0_8, %c0_9] : memref<1x8x1xf32, #tpu.memory_space<vmem>>, vector<1x8x1xf32>
    %9 = vector.shape_cast %8 : vector<1x8x1xf32> to vector<8x1xf32>
    %10 = vector.broadcast %9 : vector<8x1xf32> to vector<8x128xf32>
    %11 = arith.addf %7, %10 : vector<8x128xf32>
    %cst_10 = arith.constant 0.000000e+00 : f32
    %12 = vector.broadcast %cst_10 : f32 to vector<8x128xf32>
    %13 = arith.maximumf %11, %12 : vector<8x128xf32>
    %c0_11 = arith.constant 0 : index
    %c0_12 = arith.constant 0 : index
    %c0_13 = arith.constant 0 : index
    %14 = vector.load %arg6[%c0_11, %c0_12, %c0_13] : memref<1x8x128xf32, #tpu.memory_space<vmem>>, vector<1x8x128xf32>
    %15 = vector.shape_cast %14 : vector<1x8x128xf32> to vector<8x128xf32>
    %16 = vector.shape_cast %13 : vector<8x128xf32> to vector<1x8x128xf32>
    tpu.vector_store %arg6[%c0_11, %c0_12, %c0_13], %16 {strides = array<i32>} : memref<1x8x128xf32, #tpu.memory_space<vmem>>, vector<1x8x128xf32>,
    return
  }
  func.func @transform_0(%arg0: i32, %arg1: i32) -> (i32, i32, i32) {
    %c0_i32 = arith.constant 0 : i32
    %c0_i32_0 = arith.constant 0 : i32
    return %arg0, %c0_i32, %arg1 : i32, i32, i32
  }
  func.func @transform_1(%arg0: i32, %arg1: i32) -> (i32, i32) {
    %c0_i32 = arith.constant 0 : i32
    %c0_i32_0 = arith.constant 0 : i32
    %c0_i32_1 = arith.constant 0 : i32
    return %c0_i32, %c0_i32_0 : i32, i32
  }
  func.func @transform_2(%arg0: i32, %arg1: i32) -> (i32, i32, i32) {
    %c0_i32 = arith.constant 0 : i32
    %c0_i32_0 = arith.constant 0 : i32
    %c0_i32_1 = arith.constant 0 : i32
    return %arg0, %c0_i32, %c0_i32_0 : i32, i32, i32
  }
  func.func @transform_3(%arg0: i32, %arg1: i32) -> (i32, i32, i32) {
    %c0_i32 = arith.constant 0 : i32
    %c0_i32_0 = arith.constant 0 : i32
    %c0_i32_1 = arith.constant 0 : i32
    return %arg0, %c0_i32, %c0_i32_0 : i32, i32, i32
  }
  func.func @transform_4(%arg0: i32, %arg1: i32) -> (i32, i32, i32) {
    %c0_i32 = arith.constant 0 : i32
    %c0_i32_0 = arith.constant 0 : i32
    return %arg0, %c0_i32, %arg1 : i32, i32, i32
  }
}

module attributes {stable_mosaic.version = 11 : i64} {
  func.func @_qkv_proj_kernel(%arg0: i32, %arg1: i32, %arg2: memref<1x8x128xf32, #tpu.memory_space<vmem>>, %arg3: memref<1x8x128xf32, #tpu.memory_space<vmem>>, %arg4: memref<8x8xf32, #tpu.memory_space<vmem>>, %arg5: memref<8x8xf32, #tpu.memory_space<vmem>>, %arg6: memref<8x8xf32, #tpu.memory_space<vmem>>, %arg7: memref<1x8x128xbf16, #tpu.memory_space<vmem>>, %arg8: memref<1x8x128xbf16, #tpu.memory_space<vmem>>, %arg9: memref<1x8x128xbf16, #tpu.memory_space<vmem>>) attributes {dimension_semantics = [#tpu.dimension_semantics<parallel>, #tpu.dimension_semantics<parallel>], iteration_bounds = array<i64: 2, 1>, scalar_prefetch = 0 : i64, scratch_operands = 0 : i64, tpu.core_type = #tpu.core_type<tc>, window_params = [{transform_indices = @transform_0, window_bounds = array<i64: 1, 8, 128>}, {transform_indices = @transform_1, window_bounds = array<i64: 1, 8, 128>}, {pipeline_mode = #tpu.pipeline_mode<synchronous>, transform_indices = @transform_2, window_bounds = array<i64: 8, 8>}, {pipeline_mode = #tpu.pipeline_mode<synchronous>, transform_indices = @transform_3, window_bounds = array<i64: 8, 8>}, {pipeline_mode = #tpu.pipeline_mode<synchronous>, transform_indices = @transform_4, window_bounds = array<i64: 8, 8>}, {transform_indices = @transform_5, window_bounds = array<i64: 1, 8, 128>}, {transform_indices = @transform_6, window_bounds = array<i64: 1, 8, 128>}, {transform_indices = @transform_7, window_bounds = array<i64: 1, 8, 128>}]} {
    %c0 = arith.constant 0 : index
    %c0_0 = arith.constant 0 : index
    %c0_1 = arith.constant 0 : index
    %0 = vector.load %arg2[%c0, %c0_0, %c0_1] : memref<1x8x128xf32, #tpu.memory_space<vmem>>, vector<1x8x128xf32>
    %1 = vector.shape_cast %0 : vector<1x8x128xf32> to vector<8x128xf32>
    %c0_2 = arith.constant 0 : index
    %c0_3 = arith.constant 0 : index
    %c0_4 = arith.constant 0 : index
    %2 = vector.load %arg3[%c0_2, %c0_3, %c0_4] : memref<1x8x128xf32, #tpu.memory_space<vmem>>, vector<1x8x128xf32>
    %3 = vector.shape_cast %2 : vector<1x8x128xf32> to vector<8x128xf32>
    %c0_5 = arith.constant 0 : index
    %c0_6 = arith.constant 0 : index
    %4 = vector.load %arg4[%c0_5, %c0_6] : memref<8x8xf32, #tpu.memory_space<vmem>>, vector<8x8xf32>
    %cst = arith.constant dense<0.000000e+00> : vector<8x128xf32>
    %5 = tpu.matmul %4, %1, %cst {dimension_numbers = #tpu.dot_dimension_numbers<[1], [0], [0], [1], [0, 0, 1, 1], [], []>} : vector<8x8xf32>, vector<8x128xf32>, vector<8x128xf32> -> vector<8x128xf32>
    %c0_7 = arith.constant 0 : index
    %c0_8 = arith.constant 0 : index
    %6 = vector.load %arg5[%c0_7, %c0_8] : memref<8x8xf32, #tpu.memory_space<vmem>>, vector<8x8xf32>
    %cst_9 = arith.constant dense<0.000000e+00> : vector<8x128xf32>
    %7 = tpu.matmul %6, %1, %cst_9 {dimension_numbers = #tpu.dot_dimension_numbers<[1], [0], [0], [1], [0, 0, 1, 1], [], []>} : vector<8x8xf32>, vector<8x128xf32>, vector<8x128xf32> -> vector<8x128xf32>
    %c0_10 = arith.constant 0 : index
    %c0_11 = arith.constant 0 : index
    %8 = vector.load %arg6[%c0_10, %c0_11] : memref<8x8xf32, #tpu.memory_space<vmem>>, vector<8x8xf32>
    %cst_12 = arith.constant dense<0.000000e+00> : vector<8x128xf32>
    %9 = tpu.matmul %8, %3, %cst_12 {dimension_numbers = #tpu.dot_dimension_numbers<[1], [0], [0], [1], [0, 0, 1, 1], [], []>} : vector<8x8xf32>, vector<8x128xf32>, vector<8x128xf32> -> vector<8x128xf32>
    %cst_13 = arith.constant 0.353553385 : f32
    %10 = vector.broadcast %cst_13 : f32 to vector<8x128xf32>
    %11 = arith.mulf %5, %10 : vector<8x128xf32>
    %12 = arith.truncf %11 : vector<8x128xf32> to vector<8x128xbf16>
    %c0_14 = arith.constant 0 : index
    %c0_15 = arith.constant 0 : index
    %c0_16 = arith.constant 0 : index
    %13 = vector.load %arg7[%c0_14, %c0_15, %c0_16] : memref<1x8x128xbf16, #tpu.memory_space<vmem>>, vector<1x8x128xbf16>
    %14 = vector.shape_cast %13 : vector<1x8x128xbf16> to vector<8x128xbf16>
    %15 = vector.shape_cast %12 : vector<8x128xbf16> to vector<1x8x128xbf16>
    tpu.vector_store %arg7[%c0_14, %c0_15, %c0_16], %15 {strides = array<i32>} : memref<1x8x128xbf16, #tpu.memory_space<vmem>>, vector<1x8x128xbf16>,
    %16 = arith.truncf %7 : vector<8x128xf32> to vector<8x128xbf16>
    %c0_17 = arith.constant 0 : index
    %c0_18 = arith.constant 0 : index
    %c0_19 = arith.constant 0 : index
    %17 = vector.load %arg8[%c0_17, %c0_18, %c0_19] : memref<1x8x128xbf16, #tpu.memory_space<vmem>>, vector<1x8x128xbf16>
    %18 = vector.shape_cast %17 : vector<1x8x128xbf16> to vector<8x128xbf16>
    %19 = vector.shape_cast %16 : vector<8x128xbf16> to vector<1x8x128xbf16>
    tpu.vector_store %arg8[%c0_17, %c0_18, %c0_19], %19 {strides = array<i32>} : memref<1x8x128xbf16, #tpu.memory_space<vmem>>, vector<1x8x128xbf16>,
    %20 = arith.truncf %9 : vector<8x128xf32> to vector<8x128xbf16>
    %c0_20 = arith.constant 0 : index
    %c0_21 = arith.constant 0 : index
    %c0_22 = arith.constant 0 : index
    %21 = vector.load %arg9[%c0_20, %c0_21, %c0_22] : memref<1x8x128xbf16, #tpu.memory_space<vmem>>, vector<1x8x128xbf16>
    %22 = vector.shape_cast %21 : vector<1x8x128xbf16> to vector<8x128xbf16>
    %23 = vector.shape_cast %20 : vector<8x128xbf16> to vector<1x8x128xbf16>
    tpu.vector_store %arg9[%c0_20, %c0_21, %c0_22], %23 {strides = array<i32>} : memref<1x8x128xbf16, #tpu.memory_space<vmem>>, vector<1x8x128xbf16>,
    return
  }
  func.func @transform_0(%arg0: i32, %arg1: i32) -> (i32, i32, i32) {
    %c0_i32 = arith.constant 0 : i32
    %c0_i32_0 = arith.constant 0 : i32
    return %arg0, %c0_i32, %arg1 : i32, i32, i32
  }
  func.func @transform_1(%arg0: i32, %arg1: i32) -> (i32, i32, i32) {
    %c0_i32 = arith.constant 0 : i32
    %c0_i32_0 = arith.constant 0 : i32
    return %arg0, %c0_i32, %arg1 : i32, i32, i32
  }
  func.func @transform_2(%arg0: i32, %arg1: i32) -> (i32, i32) {
    %c0_i32 = arith.constant 0 : i32
    %c0_i32_0 = arith.constant 0 : i32
    %c0_i32_1 = arith.constant 0 : i32
    return %c0_i32, %c0_i32_0 : i32, i32
  }
  func.func @transform_3(%arg0: i32, %arg1: i32) -> (i32, i32) {
    %c0_i32 = arith.constant 0 : i32
    %c0_i32_0 = arith.constant 0 : i32
    %c0_i32_1 = arith.constant 0 : i32
    return %c0_i32, %c0_i32_0 : i32, i32
  }
  func.func @transform_4(%arg0: i32, %arg1: i32) -> (i32, i32) {
    %c0_i32 = arith.constant 0 : i32
    %c0_i32_0 = arith.constant 0 : i32
    %c0_i32_1 = arith.constant 0 : i32
    return %c0_i32, %c0_i32_0 : i32, i32
  }
  func.func @transform_5(%arg0: i32, %arg1: i32) -> (i32, i32, i32) {
    %c0_i32 = arith.constant 0 : i32
    %c0_i32_0 = arith.constant 0 : i32
    return %arg0, %c0_i32, %arg1 : i32, i32, i32
  }
  func.func @transform_6(%arg0: i32, %arg1: i32) -> (i32, i32, i32) {
    %c0_i32 = arith.constant 0 : i32
    %c0_i32_0 = arith.constant 0 : i32
    return %arg0, %c0_i32, %arg1 : i32, i32, i32
  }
  func.func @transform_7(%arg0: i32, %arg1: i32) -> (i32, i32, i32) {
    %c0_i32 = arith.constant 0 : i32
    %c0_i32_0 = arith.constant 0 : i32
    return %arg0, %c0_i32, %arg1 : i32, i32, i32
  }
}

module attributes {stable_mosaic.version = 11 : i64} {
  func.func @_attn_kernel(%arg0: i32, %arg1: i32, %arg2: i32, %arg3: memref<1x8x128xbf16, #tpu.memory_space<vmem>>, %arg4: memref<1x8x128xbf16, #tpu.memory_space<vmem>>, %arg5: memref<1x8x128xbf16, #tpu.memory_space<vmem>>, %arg6: memref<1x8x128xf32, #tpu.memory_space<vmem>>, %arg7: memref<1x128xf32, #tpu.memory_space<vmem>>, %arg8: memref<1x128xf32, #tpu.memory_space<vmem>>, %arg9: memref<8x128xf32, #tpu.memory_space<vmem>>) attributes {dimension_semantics = [#tpu.dimension_semantics<parallel>, #tpu.dimension_semantics<parallel>, #tpu.dimension_semantics<arbitrary>], iteration_bounds = array<i64: 2, 1, 1>, scalar_prefetch = 0 : i64, scratch_operands = 3 : i64, tpu.core_type = #tpu.core_type<tc>, window_params = [{transform_indices = @transform_0, window_bounds = array<i64: 1, 8, 128>}, {transform_indices = @transform_1, window_bounds = array<i64: 1, 8, 128>}, {transform_indices = @transform_2, window_bounds = array<i64: 1, 8, 128>}, {transform_indices = @transform_3, window_bounds = array<i64: 1, 8, 128>}]} {
    %c0_i32 = arith.constant 0 : i32
    %0 = arith.cmpi eq, %arg2, %c0_i32 : i32
    %1 = arith.extui %0 : i1 to i32
    %c0_i32_0 = arith.constant 0 : i32
    %2 = arith.cmpi ne, %1, %c0_i32_0 : i32
    scf.if %2 {
      %cst_29 = arith.constant 0xFF800000 : f32
      %47 = vector.broadcast %cst_29 : f32 to vector<1x128xf32>
      %c0_30 = arith.constant 0 : index
      %c0_31 = arith.constant 0 : index
      %48 = vector.load %arg7[%c0_30, %c0_31] : memref<1x128xf32, #tpu.memory_space<vmem>>, vector<1x128xf32>
      tpu.vector_store %arg7[%c0_30, %c0_31], %47 {strides = array<i32>} : memref<1x128xf32, #tpu.memory_space<vmem>>, vector<1x128xf32>,
      %cst_32 = arith.constant 0.000000e+00 : f32
      %49 = vector.broadcast %cst_32 : f32 to vector<1x128xf32>
      %c0_33 = arith.constant 0 : index
      %c0_34 = arith.constant 0 : index
      %50 = vector.load %arg8[%c0_33, %c0_34] : memref<1x128xf32, #tpu.memory_space<vmem>>, vector<1x128xf32>
      tpu.vector_store %arg8[%c0_33, %c0_34], %49 {strides = array<i32>} : memref<1x128xf32, #tpu.memory_space<vmem>>, vector<1x128xf32>,
      %cst_35 = arith.constant 0.000000e+00 : f32
      %51 = vector.broadcast %cst_35 : f32 to vector<8x128xf32>
      %c0_36 = arith.constant 0 : index
      %c0_37 = arith.constant 0 : index
      %52 = vector.load %arg9[%c0_36, %c0_37] : memref<8x128xf32, #tpu.memory_space<vmem>>, vector<8x128xf32>
      tpu.vector_store %arg9[%c0_36, %c0_37], %51 {strides = array<i32>} : memref<8x128xf32, #tpu.memory_space<vmem>>, vector<8x128xf32>,
    } else {
    }
    %c0 = arith.constant 0 : index
    %c0_1 = arith.constant 0 : index
    %c0_2 = arith.constant 0 : index
    %3 = vector.load %arg3[%c0, %c0_1, %c0_2] : memref<1x8x128xbf16, #tpu.memory_space<vmem>>, vector<1x8x128xbf16>
    %4 = vector.shape_cast %3 : vector<1x8x128xbf16> to vector<8x128xbf16>
    %c0_3 = arith.constant 0 : index
    %c0_4 = arith.constant 0 : index
    %c0_5 = arith.constant 0 : index
    %5 = vector.load %arg4[%c0_3, %c0_4, %c0_5] : memref<1x8x128xbf16, #tpu.memory_space<vmem>>, vector<1x8x128xbf16>
    %6 = vector.shape_cast %5 : vector<1x8x128xbf16> to vector<8x128xbf16>
    %c0_6 = arith.constant 0 : index
    %c0_7 = arith.constant 0 : index
    %c0_8 = arith.constant 0 : index
    %7 = vector.load %arg5[%c0_6, %c0_7, %c0_8] : memref<1x8x128xbf16, #tpu.memory_space<vmem>>, vector<1x8x128xbf16>
    %8 = vector.shape_cast %7 : vector<1x8x128xbf16> to vector<8x128xbf16>
    %cst = arith.constant dense<0.000000e+00> : vector<128x128xf32>
    %9 = tpu.matmul %6, %4, %cst {dimension_numbers = #tpu.dot_dimension_numbers<[0], [0], [1], [1], [0, 1, 1, 1], [], []>} : vector<8x128xbf16>, vector<8x128xbf16>, vector<128x128xf32> -> vector<128x128xf32>
    %c128_i32 = arith.constant 128 : i32
    %10 = arith.muli %arg2, %c128_i32 : i32
    %11 = tpu.iota {dimensions = array<i32: 0>} : vector<128x1xi32>
    %12 = vector.broadcast %10 : i32 to vector<128x1xi32>
    %13 = arith.addi %12, %11 : vector<128x1xi32>
    %c64_i32 = arith.constant 64 : i32
    %14 = vector.broadcast %c64_i32 : i32 to vector<128x1xi32>
    %15 = arith.cmpi slt, %13, %14 : vector<128x1xi32>
    %cst_9 = arith.constant 0xFF800000 : f32
    %16 = vector.shape_cast %15 : vector<128x1xi1> to vector<128x1xi1>
    %17 = vector.broadcast %16 : vector<128x1xi1> to vector<128x128xi1>
    %18 = vector.broadcast %cst_9 : f32 to vector<128x128xf32>
    %19 = arith.select %17, %9, %18 : vector<128x128xi1>, vector<128x128xf32>
    %c0_10 = arith.constant 0 : index
    %c0_11 = arith.constant 0 : index
    %20 = vector.load %arg7[%c0_10, %c0_11] : memref<1x128xf32, #tpu.memory_space<vmem>>, vector<1x128xf32>
    %cst_12 = arith.constant dense<0xFF800000> : vector<128xf32>
    %21 = vector.multi_reduction <maximumf>, %19, %cst_12 [0] : vector<128x128xf32> to vector<128xf32>
    %22 = vector.shape_cast %21 : vector<128xf32> to vector<1x128xf32>
    %23 = arith.maximumf %20, %22 : vector<1x128xf32>
    %c0_13 = arith.constant 0 : index
    %c0_14 = arith.constant 0 : index
    %24 = vector.load %arg7[%c0_13, %c0_14] : memref<1x128xf32, #tpu.memory_space<vmem>>, vector<1x128xf32>
    %25 = arith.subf %24, %23 : vector<1x128xf32>
    %26 = math.exp %25 : vector<1x128xf32>
    %27 = vector.broadcast %23 : vector<1x128xf32> to vector<128x128xf32>
    %28 = arith.subf %19, %27 : vector<128x128xf32>
    %29 = math.exp %28 : vector<128x128xf32>
    %c0_15 = arith.constant 0 : index
    %c0_16 = arith.constant 0 : index
    %30 = vector.load %arg8[%c0_15, %c0_16] : memref<1x128xf32, #tpu.memory_space<vmem>>, vector<1x128xf32>
    %31 = arith.mulf %26, %30 : vector<1x128xf32>
    %cst_17 = arith.constant dense<0.000000e+00> : vector<128xf32>
    %32 = vector.multi_reduction <add>, %29, %cst_17 [0] : vector<128x128xf32> to vector<128xf32>
    %33 = vector.shape_cast %32 : vector<128xf32> to vector<1x128xf32>
    %34 = arith.addf %31, %33 : vector<1x128xf32>
    %c0_18 = arith.constant 0 : index
    %c0_19 = arith.constant 0 : index
    %35 = vector.load %arg8[%c0_18, %c0_19] : memref<1x128xf32, #tpu.memory_space<vmem>>, vector<1x128xf32>
    tpu.vector_store %arg8[%c0_18, %c0_19], %34 {strides = array<i32>} : memref<1x128xf32, #tpu.memory_space<vmem>>, vector<1x128xf32>,
    %c0_20 = arith.constant 0 : index
    %c0_21 = arith.constant 0 : index
    %36 = vector.load %arg9[%c0_20, %c0_21] : memref<8x128xf32, #tpu.memory_space<vmem>>, vector<8x128xf32>
    %37 = vector.broadcast %26 : vector<1x128xf32> to vector<8x128xf32>
    %38 = arith.mulf %37, %36 : vector<8x128xf32>
    %39 = arith.truncf %29 : vector<128x128xf32> to vector<128x128xbf16>
    %cst_22 = arith.constant dense<0.000000e+00> : vector<8x128xf32>
    %40 = tpu.matmul %8, %39, %cst_22 {dimension_numbers = #tpu.dot_dimension_numbers<[1], [0], [0], [1], [0, 0, 1, 1], [], []>} : vector<8x128xbf16>, vector<128x128xbf16>, vector<8x128xf32> -> vector<8x128xf32>
    %41 = arith.addf %38, %40 : vector<8x128xf32>
    %c0_23 = arith.constant 0 : index
    %c0_24 = arith.constant 0 : index
    %42 = vector.load %arg9[%c0_23, %c0_24] : memref<8x128xf32, #tpu.memory_space<vmem>>, vector<8x128xf32>
    tpu.vector_store %arg9[%c0_23, %c0_24], %41 {strides = array<i32>} : memref<8x128xf32, #tpu.memory_space<vmem>>, vector<8x128xf32>,
    %c0_25 = arith.constant 0 : index
    %c0_26 = arith.constant 0 : index
    %43 = vector.load %arg7[%c0_25, %c0_26] : memref<1x128xf32, #tpu.memory_space<vmem>>, vector<1x128xf32>
    tpu.vector_store %arg7[%c0_25, %c0_26], %23 {strides = array<i32>} : memref<1x128xf32, #tpu.memory_space<vmem>>, vector<1x128xf32>,
    %c0_i32_27 = arith.constant 0 : i32
    %44 = arith.cmpi eq, %arg2, %c0_i32_27 : i32
    %45 = arith.extui %44 : i1 to i32
    %c0_i32_28 = arith.constant 0 : i32
    %46 = arith.cmpi ne, %45, %c0_i32_28 : i32
    scf.if %46 {
      %c0_29 = arith.constant 0 : index
      %c0_30 = arith.constant 0 : index
      %47 = vector.load %arg8[%c0_29, %c0_30] : memref<1x128xf32, #tpu.memory_space<vmem>>, vector<1x128xf32>
      %48 = tpu.reciprocal %47 {approx = true} : vector<1x128xf32> -> vector<1x128xf32>
      %c0_31 = arith.constant 0 : index
      %c0_32 = arith.constant 0 : index
      %49 = vector.load %arg9[%c0_31, %c0_32] : memref<8x128xf32, #tpu.memory_space<vmem>>, vector<8x128xf32>
      %50 = vector.broadcast %48 : vector<1x128xf32> to vector<8x128xf32>
      %51 = arith.mulf %49, %50 : vector<8x128xf32>
      %c0_33 = arith.constant 0 : index
      %c0_34 = arith.constant 0 : index
      %c0_35 = arith.constant 0 : index
      %52 = vector.load %arg6[%c0_33, %c0_34, %c0_35] : memref<1x8x128xf32, #tpu.memory_space<vmem>>, vector<1x8x128xf32>
      %53 = vector.shape_cast %52 : vector<1x8x128xf32> to vector<8x128xf32>
      %54 = vector.shape_cast %51 : vector<8x128xf32> to vector<1x8x128xf32>
      tpu.vector_store %arg6[%c0_33, %c0_34, %c0_35], %54 {strides = array<i32>} : memref<1x8x128xf32, #tpu.memory_space<vmem>>, vector<1x8x128xf32>,
    } else {
    }
    return
  }
  func.func @transform_0(%arg0: i32, %arg1: i32, %arg2: i32) -> (i32, i32, i32) {
    %c0_i32 = arith.constant 0 : i32
    %c0_i32_0 = arith.constant 0 : i32
    return %arg0, %c0_i32, %arg1 : i32, i32, i32
  }
  func.func @transform_1(%arg0: i32, %arg1: i32, %arg2: i32) -> (i32, i32, i32) {
    %c0_i32 = arith.constant 0 : i32
    %c0_i32_0 = arith.constant 0 : i32
    return %arg0, %c0_i32, %arg2 : i32, i32, i32
  }
  func.func @transform_2(%arg0: i32, %arg1: i32, %arg2: i32) -> (i32, i32, i32) {
    %c0_i32 = arith.constant 0 : i32
    %c0_i32_0 = arith.constant 0 : i32
    return %arg0, %c0_i32, %arg2 : i32, i32, i32
  }
  func.func @transform_3(%arg0: i32, %arg1: i32, %arg2: i32) -> (i32, i32, i32) {
    %c0_i32 = arith.constant 0 : i32
    %c0_i32_0 = arith.constant 0 : i32
    return %arg0, %c0_i32, %arg1 : i32, i32, i32
  }
}

module attributes {stable_mosaic.version = 11 : i64} {
  func.func @_pwconv_stats_kernel(%arg0: i32, %arg1: i32, %arg2: memref<1x8x512xf32, #tpu.memory_space<vmem>>, %arg3: memref<8x8xf32, #tpu.memory_space<vmem>>, %arg4: memref<1x8x1xf32, #tpu.memory_space<vmem>>, %arg5: memref<1x8x1xf32, #tpu.memory_space<vmem>>) attributes {dimension_semantics = [#tpu.dimension_semantics<parallel>, #tpu.dimension_semantics<arbitrary>], iteration_bounds = array<i64: 2, 1>, scalar_prefetch = 0 : i64, scratch_operands = 0 : i64, tpu.core_type = #tpu.core_type<tc>, window_params = [{transform_indices = @transform_0, window_bounds = array<i64: 1, 8, 512>}, {pipeline_mode = #tpu.pipeline_mode<synchronous>, transform_indices = @transform_1, window_bounds = array<i64: 8, 8>}, {transform_indices = @transform_2, window_bounds = array<i64: 1, 8, 1>}, {transform_indices = @transform_3, window_bounds = array<i64: 1, 8, 1>}]} {
    %c0_i32 = arith.constant 0 : i32
    %0 = arith.cmpi eq, %arg1, %c0_i32 : i32
    %1 = arith.extui %0 : i1 to i32
    %c0_i32_0 = arith.constant 0 : i32
    %2 = arith.cmpi ne, %1, %c0_i32_0 : i32
    scf.if %2 {
      %cst_19 = arith.constant 0.000000e+00 : f32
      %24 = vector.broadcast %cst_19 : f32 to vector<1x8x1xf32>
      %c0_20 = arith.constant 0 : index
      %c0_21 = arith.constant 0 : index
      %c0_22 = arith.constant 0 : index
      %25 = vector.load %arg4[%c0_20, %c0_21, %c0_22] : memref<1x8x1xf32, #tpu.memory_space<vmem>>, vector<1x8x1xf32>
      tpu.vector_store %arg4[%c0_20, %c0_21, %c0_22], %24 {strides = array<i32>} : memref<1x8x1xf32, #tpu.memory_space<vmem>>, vector<1x8x1xf32>,
      %cst_23 = arith.constant 0.000000e+00 : f32
      %26 = vector.broadcast %cst_23 : f32 to vector<1x8x1xf32>
      %c0_24 = arith.constant 0 : index
      %c0_25 = arith.constant 0 : index
      %c0_26 = arith.constant 0 : index
      %27 = vector.load %arg5[%c0_24, %c0_25, %c0_26] : memref<1x8x1xf32, #tpu.memory_space<vmem>>, vector<1x8x1xf32>
      tpu.vector_store %arg5[%c0_24, %c0_25, %c0_26], %26 {strides = array<i32>} : memref<1x8x1xf32, #tpu.memory_space<vmem>>, vector<1x8x1xf32>,
    } else {
    }
    %c0 = arith.constant 0 : index
    %c0_1 = arith.constant 0 : index
    %3 = vector.load %arg3[%c0, %c0_1] : memref<8x8xf32, #tpu.memory_space<vmem>>, vector<8x8xf32>
    %c0_2 = arith.constant 0 : index
    %c0_3 = arith.constant 0 : index
    %c0_4 = arith.constant 0 : index
    %4 = vector.load %arg2[%c0_2, %c0_3, %c0_4] : memref<1x8x512xf32, #tpu.memory_space<vmem>>, vector<1x8x512xf32>
    %5 = vector.shape_cast %4 : vector<1x8x512xf32> to vector<8x512xf32>
    %cst = arith.constant dense<0.000000e+00> : vector<8x512xf32>
    %6 = tpu.matmul %3, %5, %cst {dimension_numbers = #tpu.dot_dimension_numbers<[1], [0], [0], [1], [0, 0, 1, 1], [], []>} : vector<8x8xf32>, vector<8x512xf32>, vector<8x512xf32> -> vector<8x512xf32>
    %c0_5 = arith.constant 0 : index
    %c0_6 = arith.constant 0 : index
    %c0_7 = arith.constant 0 : index
    %7 = vector.load %arg4[%c0_5, %c0_6, %c0_7] : memref<1x8x1xf32, #tpu.memory_space<vmem>>, vector<1x8x1xf32>
    %8 = vector.shape_cast %7 : vector<1x8x1xf32> to vector<8x1xf32>
    %cst_8 = arith.constant dense<0.000000e+00> : vector<8xf32>
    %9 = vector.multi_reduction <add>, %6, %cst_8 [1] : vector<8x512xf32> to vector<8xf32>
    %10 = vector.shape_cast %9 : vector<8xf32> to vector<8x1xf32>
    %11 = arith.addf %8, %10 : vector<8x1xf32>
    %c0_9 = arith.constant 0 : index
    %c0_10 = arith.constant 0 : index
    %c0_11 = arith.constant 0 : index
    %12 = vector.load %arg4[%c0_9, %c0_10, %c0_11] : memref<1x8x1xf32, #tpu.memory_space<vmem>>, vector<1x8x1xf32>
    %13 = vector.shape_cast %12 : vector<1x8x1xf32> to vector<8x1xf32>
    %14 = vector.shape_cast %11 : vector<8x1xf32> to vector<1x8x1xf32>
    tpu.vector_store %arg4[%c0_9, %c0_10, %c0_11], %14 {strides = array<i32>} : memref<1x8x1xf32, #tpu.memory_space<vmem>>, vector<1x8x1xf32>,
    %c0_12 = arith.constant 0 : index
    %c0_13 = arith.constant 0 : index
    %c0_14 = arith.constant 0 : index
    %15 = vector.load %arg5[%c0_12, %c0_13, %c0_14] : memref<1x8x1xf32, #tpu.memory_space<vmem>>, vector<1x8x1xf32>
    %16 = vector.shape_cast %15 : vector<1x8x1xf32> to vector<8x1xf32>
    %17 = arith.mulf %6, %6 : vector<8x512xf32>
    %cst_15 = arith.constant dense<0.000000e+00> : vector<8xf32>
    %18 = vector.multi_reduction <add>, %17, %cst_15 [1] : vector<8x512xf32> to vector<8xf32>
    %19 = vector.shape_cast %18 : vector<8xf32> to vector<8x1xf32>
    %20 = arith.addf %16, %19 : vector<8x1xf32>
    %c0_16 = arith.constant 0 : index
    %c0_17 = arith.constant 0 : index
    %c0_18 = arith.constant 0 : index
    %21 = vector.load %arg5[%c0_16, %c0_17, %c0_18] : memref<1x8x1xf32, #tpu.memory_space<vmem>>, vector<1x8x1xf32>
    %22 = vector.shape_cast %21 : vector<1x8x1xf32> to vector<8x1xf32>
    %23 = vector.shape_cast %20 : vector<8x1xf32> to vector<1x8x1xf32>
    tpu.vector_store %arg5[%c0_16, %c0_17, %c0_18], %23 {strides = array<i32>} : memref<1x8x1xf32, #tpu.memory_space<vmem>>, vector<1x8x1xf32>,
    return
  }
  func.func @transform_0(%arg0: i32, %arg1: i32) -> (i32, i32, i32) {
    %c0_i32 = arith.constant 0 : i32
    %c0_i32_0 = arith.constant 0 : i32
    return %arg0, %c0_i32, %arg1 : i32, i32, i32
  }
  func.func @transform_1(%arg0: i32, %arg1: i32) -> (i32, i32) {
    %c0_i32 = arith.constant 0 : i32
    %c0_i32_0 = arith.constant 0 : i32
    %c0_i32_1 = arith.constant 0 : i32
    return %c0_i32, %c0_i32_0 : i32, i32
  }
  func.func @transform_2(%arg0: i32, %arg1: i32) -> (i32, i32, i32) {
    %c0_i32 = arith.constant 0 : i32
    %c0_i32_0 = arith.constant 0 : i32
    %c0_i32_1 = arith.constant 0 : i32
    return %arg0, %c0_i32, %c0_i32_0 : i32, i32, i32
  }
  func.func @transform_3(%arg0: i32, %arg1: i32) -> (i32, i32, i32) {
    %c0_i32 = arith.constant 0 : i32
    %c0_i32_0 = arith.constant 0 : i32
    %c0_i32_1 = arith.constant 0 : i32
    return %arg0, %c0_i32, %c0_i32_0 : i32, i32, i32
  }
}

module attributes {stable_mosaic.version = 11 : i64} {
  func.func @_pwconv_affine_relu_kernel(%arg0: i32, %arg1: i32, %arg2: memref<1x8x512xf32, #tpu.memory_space<vmem>>, %arg3: memref<8x8xf32, #tpu.memory_space<vmem>>, %arg4: memref<1x8x1xf32, #tpu.memory_space<vmem>>, %arg5: memref<1x8x1xf32, #tpu.memory_space<vmem>>, %arg6: memref<1x8x512xf32, #tpu.memory_space<vmem>>) attributes {dimension_semantics = [#tpu.dimension_semantics<parallel>, #tpu.dimension_semantics<parallel>], iteration_bounds = array<i64: 2, 1>, scalar_prefetch = 0 : i64, scratch_operands = 0 : i64, tpu.core_type = #tpu.core_type<tc>, window_params = [{transform_indices = @transform_0, window_bounds = array<i64: 1, 8, 512>}, {pipeline_mode = #tpu.pipeline_mode<synchronous>, transform_indices = @transform_1, window_bounds = array<i64: 8, 8>}, {transform_indices = @transform_2, window_bounds = array<i64: 1, 8, 1>}, {transform_indices = @transform_3, window_bounds = array<i64: 1, 8, 1>}, {transform_indices = @transform_4, window_bounds = array<i64: 1, 8, 512>}]} {
    %c0 = arith.constant 0 : index
    %c0_0 = arith.constant 0 : index
    %0 = vector.load %arg3[%c0, %c0_0] : memref<8x8xf32, #tpu.memory_space<vmem>>, vector<8x8xf32>
    %c0_1 = arith.constant 0 : index
    %c0_2 = arith.constant 0 : index
    %c0_3 = arith.constant 0 : index
    %1 = vector.load %arg2[%c0_1, %c0_2, %c0_3] : memref<1x8x512xf32, #tpu.memory_space<vmem>>, vector<1x8x512xf32>
    %2 = vector.shape_cast %1 : vector<1x8x512xf32> to vector<8x512xf32>
    %cst = arith.constant dense<0.000000e+00> : vector<8x512xf32>
    %3 = tpu.matmul %0, %2, %cst {dimension_numbers = #tpu.dot_dimension_numbers<[1], [0], [0], [1], [0, 0, 1, 1], [], []>} : vector<8x8xf32>, vector<8x512xf32>, vector<8x512xf32> -> vector<8x512xf32>
    %c0_4 = arith.constant 0 : index
    %c0_5 = arith.constant 0 : index
    %c0_6 = arith.constant 0 : index
    %4 = vector.load %arg4[%c0_4, %c0_5, %c0_6] : memref<1x8x1xf32, #tpu.memory_space<vmem>>, vector<1x8x1xf32>
    %5 = vector.shape_cast %4 : vector<1x8x1xf32> to vector<8x1xf32>
    %6 = vector.broadcast %5 : vector<8x1xf32> to vector<8x512xf32>
    %7 = arith.mulf %3, %6 : vector<8x512xf32>
    %c0_7 = arith.constant 0 : index
    %c0_8 = arith.constant 0 : index
    %c0_9 = arith.constant 0 : index
    %8 = vector.load %arg5[%c0_7, %c0_8, %c0_9] : memref<1x8x1xf32, #tpu.memory_space<vmem>>, vector<1x8x1xf32>
    %9 = vector.shape_cast %8 : vector<1x8x1xf32> to vector<8x1xf32>
    %10 = vector.broadcast %9 : vector<8x1xf32> to vector<8x512xf32>
    %11 = arith.addf %7, %10 : vector<8x512xf32>
    %cst_10 = arith.constant 0.000000e+00 : f32
    %12 = vector.broadcast %cst_10 : f32 to vector<8x512xf32>
    %13 = arith.maximumf %11, %12 : vector<8x512xf32>
    %c0_11 = arith.constant 0 : index
    %c0_12 = arith.constant 0 : index
    %c0_13 = arith.constant 0 : index
    %14 = vector.load %arg6[%c0_11, %c0_12, %c0_13] : memref<1x8x512xf32, #tpu.memory_space<vmem>>, vector<1x8x512xf32>
    %15 = vector.shape_cast %14 : vector<1x8x512xf32> to vector<8x512xf32>
    %16 = vector.shape_cast %13 : vector<8x512xf32> to vector<1x8x512xf32>
    tpu.vector_store %arg6[%c0_11, %c0_12, %c0_13], %16 {strides = array<i32>} : memref<1x8x512xf32, #tpu.memory_space<vmem>>, vector<1x8x512xf32>,
    return
  }
  func.func @transform_0(%arg0: i32, %arg1: i32) -> (i32, i32, i32) {
    %c0_i32 = arith.constant 0 : i32
    %c0_i32_0 = arith.constant 0 : i32
    return %arg0, %c0_i32, %arg1 : i32, i32, i32
  }
  func.func @transform_1(%arg0: i32, %arg1: i32) -> (i32, i32) {
    %c0_i32 = arith.constant 0 : i32
    %c0_i32_0 = arith.constant 0 : i32
    %c0_i32_1 = arith.constant 0 : i32
    return %c0_i32, %c0_i32_0 : i32, i32
  }
  func.func @transform_2(%arg0: i32, %arg1: i32) -> (i32, i32, i32) {
    %c0_i32 = arith.constant 0 : i32
    %c0_i32_0 = arith.constant 0 : i32
    %c0_i32_1 = arith.constant 0 : i32
    return %arg0, %c0_i32, %c0_i32_0 : i32, i32, i32
  }
  func.func @transform_3(%arg0: i32, %arg1: i32) -> (i32, i32, i32) {
    %c0_i32 = arith.constant 0 : i32
    %c0_i32_0 = arith.constant 0 : i32
    %c0_i32_1 = arith.constant 0 : i32
    return %arg0, %c0_i32, %c0_i32_0 : i32, i32, i32
  }
  func.func @transform_4(%arg0: i32, %arg1: i32) -> (i32, i32, i32) {
    %c0_i32 = arith.constant 0 : i32
    %c0_i32_0 = arith.constant 0 : i32
    return %arg0, %c0_i32, %arg1 : i32, i32, i32
  }
}

module attributes {stable_mosaic.version = 11 : i64} {
  func.func @_gate_concat_kernel(%arg0: i32, %arg1: i32, %arg2: memref<1x8x512xf32, #tpu.memory_space<vmem>>, %arg3: memref<1x8x512xf32, #tpu.memory_space<vmem>>, %arg4: memref<1x8x512xf32, #tpu.memory_space<vmem>>, %arg5: memref<1x2x8x512xf32, #tpu.memory_space<vmem>>) attributes {dimension_semantics = [#tpu.dimension_semantics<parallel>, #tpu.dimension_semantics<parallel>], iteration_bounds = array<i64: 2, 1>, scalar_prefetch = 0 : i64, scratch_operands = 0 : i64, tpu.core_type = #tpu.core_type<tc>, window_params = [{transform_indices = @transform_0, window_bounds = array<i64: 1, 8, 512>}, {transform_indices = @transform_1, window_bounds = array<i64: 1, 8, 512>}, {transform_indices = @transform_2, window_bounds = array<i64: 1, 8, 512>}, {transform_indices = @transform_3, window_bounds = array<i64: 1, 2, 8, 512>}]} {
    %c0 = arith.constant 0 : index
    %c0_0 = arith.constant 0 : index
    %c0_1 = arith.constant 0 : index
    %0 = vector.load %arg2[%c0, %c0_0, %c0_1] : memref<1x8x512xf32, #tpu.memory_space<vmem>>, vector<1x8x512xf32>
    %1 = vector.shape_cast %0 : vector<1x8x512xf32> to vector<8x512xf32>
    %c0_2 = arith.constant 0 : index
    %c0_3 = arith.constant 0 : index
    %c0_4 = arith.constant 0 : index
    %2 = vector.load %arg3[%c0_2, %c0_3, %c0_4] : memref<1x8x512xf32, #tpu.memory_space<vmem>>, vector<1x8x512xf32>
    %3 = vector.shape_cast %2 : vector<1x8x512xf32> to vector<8x512xf32>
    %4 = arith.mulf %1, %3 : vector<8x512xf32>
    %c0_5 = arith.constant 0 : index
    %c0_6 = arith.constant 0 : index
    %c0_7 = arith.constant 0 : index
    %c0_8 = arith.constant 0 : index
    %5 = vector.load %arg5[%c0_5, %c0_6, %c0_7, %c0_8] : memref<1x2x8x512xf32, #tpu.memory_space<vmem>>, vector<1x1x8x512xf32>
    %6 = vector.shape_cast %5 : vector<1x1x8x512xf32> to vector<8x512xf32>
    %7 = vector.shape_cast %4 : vector<8x512xf32> to vector<1x1x8x512xf32>
    tpu.vector_store %arg5[%c0_5, %c0_6, %c0_7, %c0_8], %7 {strides = array<i32>} : memref<1x2x8x512xf32, #tpu.memory_space<vmem>>, vector<1x1x8x512xf32>,
    %c0_9 = arith.constant 0 : index
    %c0_10 = arith.constant 0 : index
    %c0_11 = arith.constant 0 : index
    %8 = vector.load %arg4[%c0_9, %c0_10, %c0_11] : memref<1x8x512xf32, #tpu.memory_space<vmem>>, vector<1x8x512xf32>
    %9 = vector.shape_cast %8 : vector<1x8x512xf32> to vector<8x512xf32>
    %c0_12 = arith.constant 0 : index
    %c1 = arith.constant 1 : index
    %c0_13 = arith.constant 0 : index
    %c0_14 = arith.constant 0 : index
    %10 = vector.load %arg5[%c0_12, %c1, %c0_13, %c0_14] : memref<1x2x8x512xf32, #tpu.memory_space<vmem>>, vector<1x1x8x512xf32>
    %11 = vector.shape_cast %10 : vector<1x1x8x512xf32> to vector<8x512xf32>
    %12 = vector.shape_cast %9 : vector<8x512xf32> to vector<1x1x8x512xf32>
    tpu.vector_store %arg5[%c0_12, %c1, %c0_13, %c0_14], %12 {strides = array<i32>} : memref<1x2x8x512xf32, #tpu.memory_space<vmem>>, vector<1x1x8x512xf32>,
    return
  }
  func.func @transform_0(%arg0: i32, %arg1: i32) -> (i32, i32, i32) {
    %c0_i32 = arith.constant 0 : i32
    %c0_i32_0 = arith.constant 0 : i32
    return %arg0, %c0_i32, %arg1 : i32, i32, i32
  }
  func.func @transform_1(%arg0: i32, %arg1: i32) -> (i32, i32, i32) {
    %c0_i32 = arith.constant 0 : i32
    %c0_i32_0 = arith.constant 0 : i32
    return %arg0, %c0_i32, %arg1 : i32, i32, i32
  }
  func.func @transform_2(%arg0: i32, %arg1: i32) -> (i32, i32, i32) {
    %c0_i32 = arith.constant 0 : i32
    %c0_i32_0 = arith.constant 0 : i32
    return %arg0, %c0_i32, %arg1 : i32, i32, i32
  }
  func.func @transform_3(%arg0: i32, %arg1: i32) -> (i32, i32, i32, i32) {
    %c0_i32 = arith.constant 0 : i32
    %c0_i32_0 = arith.constant 0 : i32
    %c0_i32_1 = arith.constant 0 : i32
    return %arg0, %c0_i32, %c0_i32_0, %arg1 : i32, i32, i32, i32
  }
}

</mosaic_0001>

<llo_original>
// kernel: cross_attention_forward.11
$region0: #{cross_attention_forward.11}
  #allocation0 [shape = 'u32[]', space=smem, size = 0x4, offset = 0x4, fixed_abs, tag = 'smem constant byte address 0x4 - core index']
  #allocation1 [shape = 'u32[72,128]{1,0:T(1,128)}', space=vmem, size = 0x9000, scoped, tag = 'internal scratch']
  %s0 = inlined_call_operand.vmem [shape: f32[2,16,128], index: 0, kind: input, shape index: {}]
  %s1 = inlined_call_operand.vmem [shape: f32[8,16], index: 1, kind: input, shape index: {}]
  %s2 = inlined_call_operand.vmem [shape: f32[2,8,1], index: 2, kind: output, shape index: {0}]
  %s3 = inlined_call_operand.vmem [shape: f32[2,8,1], index: 3, kind: output, shape index: {1}]
  %4 = xla_tuple %s2, %s3
  %s5 = sld [smem:[#allocation0]]
  $region53: #{cross_attention_forward.11} parent=0
    _
  %s7 = ssub.s32 1, %s5
  %s8 = scalar_select 0, %s7, %s5
  loop: start=0, step=1, limit=4
  $region2: #{cross_attention_forward.11} parent=0 // loop_pre_header
    _
  $region3: #{cross_attention_forward.11} parent=0 // loop_header
    %s10 = sphi 0, %s14
    %p11 = scmp.ge.s32.totalorder %s10, 4
    %s17 = sphi 0, %s29
    %s18 = sphi 0, %s25
    %s19 = sphi 0, %s17
    %s20 = sphi 0, %s18
    %s21 = sphi 0, %s19
    %s22 = sphi 0, %s20
    %s34 = sphi 0, %s36
    %s37 = sphi 0, %s34
    %s38 = sphi 0, %s37
    %s54 = sphi 0, %s38
    %s58 = sphi 0, %s58
    %s60 = sphi 0, %s58
    %s61 = sphi 0, %s60
    %s75 = sphi 0, %s61
    %s81 = sphi 0, %s83
    %s84 = sphi 0, %s81
    %s85 = sphi 0, %s84
    %s101 = sphi 0, %s85
    %s107 = sphi 0, %s109
    %s110 = sphi 0, %s107
    %s111 = sphi 0, %s110
    %s127 = sphi 0, %s111
  $region4: #{cross_attention_forward.11} parent=0 // loop_header_branch
    %13 = sbr.rel (%p11) target = $region8
  $region5: #{cross_attention_forward.11} parent=0 // loop_body
    %s15 = ssub.s32 %s10, 1
    %s16 = ssub.s32 %s10, 2
    %s23 = sadd.s32 1, %s18
    %p24 = scmp.ge.s32.totalorder %s23, 1
    %s25 = scalar_select %p24, 0, %s23
    %s26 = sadd.s32 1, %s17
    %s27 = scalar_select %p24, %s26, %s17
    %p28 = scmp.ge.s32.totalorder %s27, 2
    %s29 = scalar_select %p28, 0, %s27
    %s30 = ssub.s32 %s17, %s29
    %s31 = ssub.s32 %s18, %s25
    %s32 = sor.u32 %s30, %s31
    %p33 = scmp.eq.s32.totalorder %s32, 0
    %s35 = sadd.s32 %s34, 1
    %s36 = scalar_select %p33, %s34, %s35
    %p39 = pneg %p33
    %p40 = scmp.eq.s32.totalorder %s10, 1
    %p41 = por %p39, %p40
    %p42 = scmp.ne.s32.totalorder %s34, %s37
    %p43 = scmp.eq.s32.totalorder %s10, 0
    %p44 = por %p42, %p43
    %p45 = scmp.ne.s32.totalorder %s34, %s37
    %p46 = scmp.eq.s32.totalorder %s15, 1
    %p47 = por %p45, %p46
    %p48 = scmp.ne.s32.totalorder %s37, %s38
    %p49 = scmp.eq.s32.totalorder %s15, 0
    %p50 = por %p48, %p49
    %p51 = scmp.ne.s32.totalorder %s37, %s38
    %p52 = scmp.eq.s32.totalorder %s16, 1
    %p53 = por %p51, %p52
    %p55 = scmp.ne.s32.totalorder %s38, %s54
    %p56 = scmp.eq.s32.totalorder %s16, 0
    %p57 = por %p55, %p56
    %s59 = sadd.s32 %s58, 1
    %p62 = scmp.eq.s32.totalorder %s10, 1
    %p63 = scmp.ne.s32.totalorder %s58, %s60
    %p64 = scmp.eq.s32.totalorder %s10, 0
    %p65 = por %p63, %p64
    %p66 = scmp.ne.s32.totalorder %s58, %s60
    %p67 = scmp.eq.s32.totalorder %s15, 1
    %p68 = por %p66, %p67
    %p69 = scmp.ne.s32.totalorder %s60, %s61
    %p70 = scmp.eq.s32.totalorder %s15, 0
    %p71 = por %p69, %p70
    %p72 = scmp.ne.s32.totalorder %s60, %s61
    %p73 = scmp.eq.s32.totalorder %s16, 1
    %p74 = por %p72, %p73
    %p76 = scmp.ne.s32.totalorder %s61, %s75
    %p77 = scmp.eq.s32.totalorder %s16, 0
    %p78 = por %p76, %p77
    %s79 = ssub.s32 %s17, %s29
    %p80 = scmp.eq.s32.totalorder %s79, 0
    %s82 = sadd.s32 %s81, 1
    %s83 = scalar_select %p80, %s81, %s82
    %p86 = pneg %p80
    %p87 = scmp.eq.s32.totalorder %s10, 1
    %p88 = por %p86, %p87
    %p89 = scmp.ne.s32.totalorder %s81, %s84
    %p90 = scmp.eq.s32.totalorder %s10, 0
    %p91 = por %p89, %p90
    %p92 = scmp.ne.s32.totalorder %s81, %s84
    %p93 = scmp.eq.s32.totalorder %s15, 1
    %p94 = por %p92, %p93
    %p95 = scmp.ne.s32.totalorder %s84, %s85
    %p96 = scmp.eq.s32.totalorder %s15, 0
    %p97 = por %p95, %p96
    %p98 = scmp.ne.s32.totalorder %s84, %s85
    %p99 = scmp.eq.s32.totalorder %s16, 1
    %p100 = por %p98, %p99
    %p102 = scmp.ne.s32.totalorder %s85, %s101
    %p103 = scmp.eq.s32.totalorder %s16, 0
    %p104 = por %p102, %p103
    %s105 = ssub.s32 %s17, %s29
    %p106 = scmp.eq.s32.totalorder %s105, 0
    %s108 = sadd.s32 %s107, 1
    %s109 = scalar_select %p106, %s107, %s108
    %p112 = pneg %p106
    %p113 = scmp.eq.s32.totalorder %s10, 1
    %p114 = por %p112, %p113
    %p115 = scmp.ne.s32.totalorder %s107, %s110
    %p116 = scmp.eq.s32.totalorder %s10, 0
    %p117 = por %p115, %p116
    %p118 = scmp.ne.s32.totalorder %s107, %s110
    %p119 = scmp.eq.s32.totalorder %s15, 1
    %p120 = por %p118, %p119
    %p121 = scmp.ne.s32.totalorder %s110, %s111
    %p122 = scmp.eq.s32.totalorder %s15, 0
    %p123 = por %p121, %p122
    %p124 = scmp.ne.s32.totalorder %s110, %s111
    %p125 = scmp.eq.s32.totalorder %s16, 1
    %p126 = por %p124, %p125
    %p128 = scmp.ne.s32.totalorder %s111, %s127
    %p129 = scmp.eq.s32.totalorder %s16, 0
    %p130 = por %p128, %p129
    %p131 = scmp.le.s32.totalorder 1, %s10
    %p132 = scmp.lt.s32.totalorder %s10, 3
    %p133 = pnand %p131, %p132
    %p134 = pneg %p133
    // Predicated region
    $region9: #{cross_attention_forward.11} parent=5 // pred_check
      _
    $region10: #{cross_attention_forward.11} parent=5 // pred_check_branch
      %136 = sbr.rel (%p133) target = $region12
    $region11: #{cross_attention_forward.11} parent=5 // pred_region
      %s137 = ssub.s32 %s10, 1
      // Predicated region
      $region13: #{cross_attention_forward.11} parent=11 // pred_check
        %p138 = pneg %p71
      $region14: #{cross_attention_forward.11} parent=11 // pred_check_branch
        %140 = sbr.rel (%p138) target = $region16
      $region15: #{cross_attention_forward.11} parent=11 // pred_region
        _
      $region16: #{cross_attention_forward.11} parent=11 // pred_fallthru
        _
    $region12: #{cross_attention_forward.11} parent=5 // pred_fallthru
      _
    %p141 = scmp.lt.s32.totalorder %s10, 2
    // Predicated region
    $region17: #{cross_attention_forward.11} parent=5 // pred_check
      %p142 = pneg %p141
    $region18: #{cross_attention_forward.11} parent=5 // pred_check_branch
      %144 = sbr.rel (%p142) target = $region20
    $region19: #{cross_attention_forward.11} parent=5 // pred_region
      // Predicated region
      $region21: #{cross_attention_forward.11} parent=19 // pred_check
        %p145 = pneg %p44
      $region22: #{cross_attention_forward.11} parent=19 // pred_check_branch
        %147 = sbr.rel (%p145) target = $region24
      $region23: #{cross_attention_forward.11} parent=19 // pred_region
        %p148 = scmp.lt.s32.totalorder %s17, 1
        %s149 = scalar_select %p148, %s17, 1
        %p150 = scmp.lt.s32.totalorder %s18, 0
        %s151 = scalar_select %p150, %s18, 0
        %s152 = smul.addr %s149, 2
        %s153 = sadd.s32 %s151, %s152
        %s154 = smul.addr %s153, 8
        %s155 = scalar_lea.vmem %s0, %s154
      $region24: #{cross_attention_forward.11} parent=19 // pred_fallthru
        _
    $region20: #{cross_attention_forward.11} parent=5 // pred_fallthru
      _
    %p156 = scmp.le.s32.totalorder 1, %s10
    %p157 = scmp.lt.s32.totalorder %s10, 3
    %p158 = pnand %p156, %p157
    %p159 = pneg %p158
    // Predicated region
    $region25: #{cross_attention_forward.11} parent=5 // pred_check
      _
    $region26: #{cross_attention_forward.11} parent=5 // pred_check_branch
      %161 = sbr.rel (%p158) target = $region28
    $region27: #{cross_attention_forward.11} parent=5 // pred_region
      %s162 = ssub.s32 %s10, 1
      %p163 = scmp.lt.s32.totalorder %s19, 1
      %s164 = scalar_select %p163, %s19, 1
      %p165 = scmp.lt.s32.totalorder %s20, 0
      %s166 = scalar_select %p165, %s20, 0
      %s167 = smul.addr %s164, 2
      %s168 = sadd.s32 %s166, %s167
      %s169 = smul.addr %s168, 8
      %s170 = scalar_lea.vmem %s0, %s169
      %p171 = pneg %p50
      %p172 = pneg %p47
      %p173 = pneg %p71
      %p174 = pneg %p68
      %p175 = pneg %p97
      %p176 = pneg %p94
      %p177 = scmp.lt.s32.totalorder %s19, 1
      %s178 = scalar_select %p177, %s19, 1
      %s179 = smul.addr %s178, 8
      %s180 = scalar_lea.vmem %s2, %s179
      %p181 = pneg %p123
      %p182 = pneg %p120
      %p183 = scmp.lt.s32.totalorder %s19, 1
      %s184 = scalar_select %p183, %s19, 1
      %s185 = smul.addr %s184, 8
      %s186 = scalar_lea.vmem %s3, %s185
      %p187 = scmp.lt.s32.totalorder %s19, 1
      %s188 = scalar_select %p187, %s19, 1
      %p189 = scmp.lt.s32.totalorder %s20, 0
      %s190 = scalar_select %p189, %s20, 0
      %s191 = smul.addr %s188, 2
      %s192 = sadd.s32 %s190, %s191
      %s193 = smul.addr %s192, 8
      %s194 = scalar_lea.vmem %s0, %s193
      %p195 = scmp.lt.s32.totalorder %s19, 1
      %s196 = scalar_select %p195, %s19, 1
      %s197 = smul.addr %s196, 8
      %s198 = scalar_lea.vmem %s2, %s197
      %p199 = scmp.lt.s32.totalorder %s19, 1
      %s200 = scalar_select %p199, %s19, 1
      %s201 = smul.addr %s200, 8
      %s202 = scalar_lea.vmem %s3, %s201
      %p203 = scmp.eq.s32.totalorder %s20, 0
      // Predicated region
      $region29: #{cross_attention_forward.11} parent=27 // pred_check
        %p204 = pneg %p203
      $region30: #{cross_attention_forward.11} parent=27 // pred_check_branch
        %206 = sbr.rel (%p204) target = $region32
      $region31: #{cross_attention_forward.11} parent=27 // pred_region
        %vm207 = vcmask 7168
        %208 = vst.msk [vmem:[%s198] sm:$0xff] %vm207, 0.0
        %209 = vst.msk [vmem:[%s202] sm:$0xff] %vm207, 0.0
      $region32: #{cross_attention_forward.11} parent=27 // pred_fallthru
        _
      %v210 = vld [vmem:[%s1] sm:$0xff]
      %v211 = vld [vmem:[%s194] sm:$0xff]
      %v212 = vld [vmem:[%s194 + $0x8] sm:$0xff]
      %vm213 = vcmask 130048
      %v215 = vsel %vm213, %v210, 0
      %217 = vmatpush.msra.mxu0 0.0
      %218 = vmatpush.msra.mxu0 0.0
      %219 = vmatpush.msra.mxu0 0.0
      %220 = vmatpush.msra.mxu0 0.0
      %221 = vmatpush.msra.mxu0 0.0
      %222 = vmatpush.msra.mxu0 0.0
      %223 = vmatpush.msra.mxu0 0.0
      %224 = vmatpush.msra.mxu0 0.0
      %225 = vmatpush.msra.mxu0 0.0
      %226 = vmatpush.msra.mxu0 0.0
      %227 = vmatpush.msra.mxu0 0.0
      %228 = vmatpush.msra.mxu0 0.0
      %229 = vmatpush.msra.mxu0 0.0
      %230 = vmatpush.msra.mxu0 0.0
      %231 = vmatpush.msra.mxu0 %v212
      %232 = vmatpush.msra.mxu0 %v211
      %233 = vmatmul.f32.gmra.mxu0 %v215
      %v234 = vpop.f32.mrf.mxu0
      %v235 = vadd.f32 0.0, %v234
      %236 = vdwg.mxu0
      %v237 = vld [vmem:[%s198] sm:$0xff]
      %238 = vadd.xlane.f32.xlu0 %v235
      %v239 = vpop.xlane.xlu0 %238
      %v240 = vadd.f32 %v237, %v239
      %vm241 = vcmask 7168
      %242 = vst.msk [vmem:[%s198] sm:$0xff] %vm241, %v240
      %v243 = vld [vmem:[%s202] sm:$0xff]
      %v244 = vmul.f32 %v235, %v235
      %245 = vadd.xlane.f32.xlu0 %v244
      %v246 = vpop.xlane.xlu0 %245
      %v247 = vadd.f32 %v243, %v246
      %248 = vst.msk [vmem:[%s202] sm:$0xff] %vm241, %v247
      %p249 = scmp.lt.s32.totalorder %s19, 1
      %s250 = scalar_select %p249, %s19, 1
      %s251 = smul.addr %s250, 8
      %s252 = scalar_lea.vmem %s2, %s251
      %p253 = scmp.lt.s32.totalorder %s19, 1
      %s254 = scalar_select %p253, %s19, 1
      %s255 = smul.addr %s254, 8
      %s256 = scalar_lea.vmem %s3, %s255
      // Predicated region
      $region33: #{cross_attention_forward.11} parent=27 // pred_check
        %p257 = pneg %p94
      $region34: #{cross_attention_forward.11} parent=27 // pred_check_branch
        %259 = sbr.rel (%p257) target = $region36
      $region35: #{cross_attention_forward.11} parent=27 // pred_region
        _
      $region36: #{cross_attention_forward.11} parent=27 // pred_fallthru
        _
      // Predicated region
      $region37: #{cross_attention_forward.11} parent=27 // pred_check
        %p260 = pneg %p120
      $region38: #{cross_attention_forward.11} parent=27 // pred_check_branch
        %262 = sbr.rel (%p260) target = $region40
      $region39: #{cross_attention_forward.11} parent=27 // pred_region
        _
      $region40: #{cross_attention_forward.11} parent=27 // pred_fallthru
        _
    $region28: #{cross_attention_forward.11} parent=5 // pred_fallthru
      _
    %p263 = scmp.le.s32.totalorder 2, %s10
    // Predicated region
    $region41: #{cross_attention_forward.11} parent=5 // pred_check
      %p264 = pneg %p263
    $region42: #{cross_attention_forward.11} parent=5 // pred_check_branch
      %266 = sbr.rel (%p264) target = $region44
    $region43: #{cross_attention_forward.11} parent=5 // pred_region
      %s267 = ssub.s32 %s10, 2
      // Predicated region
      $region45: #{cross_attention_forward.11} parent=43 // pred_check
        %p268 = pneg %p100
      $region46: #{cross_attention_forward.11} parent=43 // pred_check_branch
        %270 = sbr.rel (%p268) target = $region48
      $region47: #{cross_attention_forward.11} parent=43 // pred_region
        %p271 = scmp.lt.s32.totalorder %s21, 1
        %s272 = scalar_select %p271, %s21, 1
        %s273 = smul.addr %s272, 8
        %s274 = scalar_lea.vmem %s2, %s273
      $region48: #{cross_attention_forward.11} parent=43 // pred_fallthru
        _
      // Predicated region
      $region49: #{cross_attention_forward.11} parent=43 // pred_check
        %p275 = pneg %p126
      $region50: #{cross_attention_forward.11} parent=43 // pred_check_branch
        %277 = sbr.rel (%p275) target = $region52
      $region51: #{cross_attention_forward.11} parent=43 // pred_region
        %p278 = scmp.lt.s32.totalorder %s21, 1
        %s279 = scalar_select %p278, %s21, 1
        %s280 = smul.addr %s279, 8
        %s281 = scalar_lea.vmem %s3, %s280
      $region52: #{cross_attention_forward.11} parent=43 // pred_fallthru
        _
    $region44: #{cross_attention_forward.11} parent=5 // pred_fallthru
      _
  $region6: #{cross_attention_forward.11} parent=0 // loop_footer
    %s14 = sadd.s32 1, %s10
  $region7: #{cross_attention_forward.11} parent=0 // loop_footer_branch
    %9 = sbr.rel target = $region3
  $region8: #{cross_attention_forward.11} parent=0 // loop_exit
    _

// kernel: cross_attention_forward.12
$region0: #{cross_attention_forward.12}
  #allocation0 [shape = 'u32[]', space=smem, size = 0x4, offset = 0x4, fixed_abs, tag = 'smem constant byte address 0x4 - core index']
  #allocation1 [shape = 'u32[72,128]{1,0:T(1,128)}', space=vmem, size = 0x9000, scoped, tag = 'internal scratch']
  %s0 = inlined_call_operand.vmem [shape: f32[2,16,128], index: 0, kind: input, shape index: {}]
  %s1 = inlined_call_operand.vmem [shape: f32[8,16], index: 1, kind: input, shape index: {}]
  %s2 = inlined_call_operand.vmem [shape: f32[2,8,1], index: 2, kind: input, shape index: {}]
  %s3 = inlined_call_operand.vmem [shape: f32[2,8,1], index: 3, kind: input, shape index: {}]
  %s4 = inlined_call_operand.vmem [shape: f32[2,8,128], index: 4, kind: output, shape index: {}]
  %s5 = sld [smem:[#allocation0]]
  $region49: #{cross_attention_forward.12} parent=0
    _
  %s7 = ssub.s32 1, %s5
  %s8 = scalar_select 0, %s7, %s5
  loop: start=0, step=1, limit=4
  $region2: #{cross_attention_forward.12} parent=0 // loop_pre_header
    _
  $region3: #{cross_attention_forward.12} parent=0 // loop_header
    %s10 = sphi 0, %s14
    %p11 = scmp.ge.s32.totalorder %s10, 4
    %s17 = sphi 0, %s29
    %s18 = sphi 0, %s25
    %s19 = sphi 0, %s17
    %s20 = sphi 0, %s18
    %s21 = sphi 0, %s19
    %s22 = sphi 0, %s20
    %s34 = sphi 0, %s36
    %s37 = sphi 0, %s34
    %s38 = sphi 0, %s37
    %s54 = sphi 0, %s38
    %s58 = sphi 0, %s58
    %s60 = sphi 0, %s58
    %s61 = sphi 0, %s60
    %s75 = sphi 0, %s61
    %s81 = sphi 0, %s83
    %s84 = sphi 0, %s81
    %s85 = sphi 0, %s84
    %s101 = sphi 0, %s85
    %s107 = sphi 0, %s109
    %s110 = sphi 0, %s107
    %s111 = sphi 0, %s110
    %s127 = sphi 0, %s111
    %s135 = sphi 0, %s137
    %s138 = sphi 0, %s135
    %s139 = sphi 0, %s138
    %s155 = sphi 0, %s139
  $region4: #{cross_attention_forward.12} parent=0 // loop_header_branch
    %13 = sbr.rel (%p11) target = $region8
  $region5: #{cross_attention_forward.12} parent=0 // loop_body
    %s15 = ssub.s32 %s10, 1
    %s16 = ssub.s32 %s10, 2
    %s23 = sadd.s32 1, %s18
    %p24 = scmp.ge.s32.totalorder %s23, 1
    %s25 = scalar_select %p24, 0, %s23
    %s26 = sadd.s32 1, %s17
    %s27 = scalar_select %p24, %s26, %s17
    %p28 = scmp.ge.s32.totalorder %s27, 2
    %s29 = scalar_select %p28, 0, %s27
    %s30 = ssub.s32 %s17, %s29
    %s31 = ssub.s32 %s18, %s25
    %s32 = sor.u32 %s30, %s31
    %p33 = scmp.eq.s32.totalorder %s32, 0
    %s35 = sadd.s32 %s34, 1
    %s36 = scalar_select %p33, %s34, %s35
    %p39 = pneg %p33
    %p40 = scmp.eq.s32.totalorder %s10, 1
    %p41 = por %p39, %p40
    %p42 = scmp.ne.s32.totalorder %s34, %s37
    %p43 = scmp.eq.s32.totalorder %s10, 0
    %p44 = por %p42, %p43
    %p45 = scmp.ne.s32.totalorder %s34, %s37
    %p46 = scmp.eq.s32.totalorder %s15, 1
    %p47 = por %p45, %p46
    %p48 = scmp.ne.s32.totalorder %s37, %s38
    %p49 = scmp.eq.s32.totalorder %s15, 0
    %p50 = por %p48, %p49
    %p51 = scmp.ne.s32.totalorder %s37, %s38
    %p52 = scmp.eq.s32.totalorder %s16, 1
    %p53 = por %p51, %p52
    %p55 = scmp.ne.s32.totalorder %s38, %s54
    %p56 = scmp.eq.s32.totalorder %s16, 0
    %p57 = por %p55, %p56
    %s59 = sadd.s32 %s58, 1
    %p62 = scmp.eq.s32.totalorder %s10, 1
    %p63 = scmp.ne.s32.totalorder %s58, %s60
    %p64 = scmp.eq.s32.totalorder %s10, 0
    %p65 = por %p63, %p64
    %p66 = scmp.ne.s32.totalorder %s58, %s60
    %p67 = scmp.eq.s32.totalorder %s15, 1
    %p68 = por %p66, %p67
    %p69 = scmp.ne.s32.totalorder %s60, %s61
    %p70 = scmp.eq.s32.totalorder %s15, 0
    %p71 = por %p69, %p70
    %p72 = scmp.ne.s32.totalorder %s60, %s61
    %p73 = scmp.eq.s32.totalorder %s16, 1
    %p74 = por %p72, %p73
    %p76 = scmp.ne.s32.totalorder %s61, %s75
    %p77 = scmp.eq.s32.totalorder %s16, 0
    %p78 = por %p76, %p77
    %s79 = ssub.s32 %s17, %s29
    %p80 = scmp.eq.s32.totalorder %s79, 0
    %s82 = sadd.s32 %s81, 1
    %s83 = scalar_select %p80, %s81, %s82
    %p86 = pneg %p80
    %p87 = scmp.eq.s32.totalorder %s10, 1
    %p88 = por %p86, %p87
    %p89 = scmp.ne.s32.totalorder %s81, %s84
    %p90 = scmp.eq.s32.totalorder %s10, 0
    %p91 = por %p89, %p90
    %p92 = scmp.ne.s32.totalorder %s81, %s84
    %p93 = scmp.eq.s32.totalorder %s15, 1
    %p94 = por %p92, %p93
    %p95 = scmp.ne.s32.totalorder %s84, %s85
    %p96 = scmp.eq.s32.totalorder %s15, 0
    %p97 = por %p95, %p96
    %p98 = scmp.ne.s32.totalorder %s84, %s85
    %p99 = scmp.eq.s32.totalorder %s16, 1
    %p100 = por %p98, %p99
    %p102 = scmp.ne.s32.totalorder %s85, %s101
    %p103 = scmp.eq.s32.totalorder %s16, 0
    %p104 = por %p102, %p103
    %s105 = ssub.s32 %s17, %s29
    %p106 = scmp.eq.s32.totalorder %s105, 0
    %s108 = sadd.s32 %s107, 1
    %s109 = scalar_select %p106, %s107, %s108
    %p112 = pneg %p106
    %p113 = scmp.eq.s32.totalorder %s10, 1
    %p114 = por %p112, %p113
    %p115 = scmp.ne.s32.totalorder %s107, %s110
    %p116 = scmp.eq.s32.totalorder %s10, 0
    %p117 = por %p115, %p116
    %p118 = scmp.ne.s32.totalorder %s107, %s110
    %p119 = scmp.eq.s32.totalorder %s15, 1
    %p120 = por %p118, %p119
    %p121 = scmp.ne.s32.totalorder %s110, %s111
    %p122 = scmp.eq.s32.totalorder %s15, 0
    %p123 = por %p121, %p122
    %p124 = scmp.ne.s32.totalorder %s110, %s111
    %p125 = scmp.eq.s32.totalorder %s16, 1
    %p126 = por %p124, %p125
    %p128 = scmp.ne.s32.totalorder %s111, %s127
    %p129 = scmp.eq.s32.totalorder %s16, 0
    %p130 = por %p128, %p129
    %s131 = ssub.s32 %s17, %s29
    %s132 = ssub.s32 %s18, %s25
    %s133 = sor.u32 %s131, %s132
    %p134 = scmp.eq.s32.totalorder %s133, 0
    %s136 = sadd.s32 %s135, 1
    %s137 = scalar_select %p134, %s135, %s136
    %p140 = pneg %p134
    %p141 = scmp.eq.s32.totalorder %s10, 1
    %p142 = por %p140, %p141
    %p143 = scmp.ne.s32.totalorder %s135, %s138
    %p144 = scmp.eq.s32.totalorder %s10, 0
    %p145 = por %p143, %p144
    %p146 = scmp.ne.s32.totalorder %s135, %s138
    %p147 = scmp.eq.s32.totalorder %s15, 1
    %p148 = por %p146, %p147
    %p149 = scmp.ne.s32.totalorder %s138, %s139
    %p150 = scmp.eq.s32.totalorder %s15, 0
    %p151 = por %p149, %p150
    %p152 = scmp.ne.s32.totalorder %s138, %s139
    %p153 = scmp.eq.s32.totalorder %s16, 1
    %p154 = por %p152, %p153
    %p156 = scmp.ne.s32.totalorder %s139, %s155
    %p157 = scmp.eq.s32.totalorder %s16, 0
    %p158 = por %p156, %p157
    %p159 = scmp.le.s32.totalorder 1, %s10
    %p160 = scmp.lt.s32.totalorder %s10, 3
    %p161 = pnand %p159, %p160
    %p162 = pneg %p161
    // Predicated region
    $region9: #{cross_attention_forward.12} parent=5 // pred_check
      _
    $region10: #{cross_attention_forward.12} parent=5 // pred_check_branch
      %164 = sbr.rel (%p161) target = $region12
    $region11: #{cross_attention_forward.12} parent=5 // pred_region
      %s165 = ssub.s32 %s10, 1
      // Predicated region
      $region13: #{cross_attention_forward.12} parent=11 // pred_check
        %p166 = pneg %p71
      $region14: #{cross_attention_forward.12} parent=11 // pred_check_branch
        %168 = sbr.rel (%p166) target = $region16
      $region15: #{cross_attention_forward.12} parent=11 // pred_region
        _
      $region16: #{cross_attention_forward.12} parent=11 // pred_fallthru
        _
    $region12: #{cross_attention_forward.12} parent=5 // pred_fallthru
      _
    %p169 = scmp.lt.s32.totalorder %s10, 2
    // Predicated region
    $region17: #{cross_attention_forward.12} parent=5 // pred_check
      %p170 = pneg %p169
    $region18: #{cross_attention_forward.12} parent=5 // pred_check_branch
      %172 = sbr.rel (%p170) target = $region20
    $region19: #{cross_attention_forward.12} parent=5 // pred_region
      // Predicated region
      $region21: #{cross_attention_forward.12} parent=19 // pred_check
        %p173 = pneg %p44
      $region22: #{cross_attention_forward.12} parent=19 // pred_check_branch
        %175 = sbr.rel (%p173) target = $region24
      $region23: #{cross_attention_forward.12} parent=19 // pred_region
        %p176 = scmp.lt.s32.totalorder %s17, 1
        %s177 = scalar_select %p176, %s17, 1
        %p178 = scmp.lt.s32.totalorder %s18, 0
        %s179 = scalar_select %p178, %s18, 0
        %s180 = smul.addr %s177, 2
        %s181 = sadd.s32 %s179, %s180
        %s182 = smul.addr %s181, 8
        %s183 = scalar_lea.vmem %s0, %s182
      $region24: #{cross_attention_forward.12} parent=19 // pred_fallthru
        _
      // Predicated region
      $region25: #{cross_attention_forward.12} parent=19 // pred_check
        %p184 = pneg %p91
      $region26: #{cross_attention_forward.12} parent=19 // pred_check_branch
        %186 = sbr.rel (%p184) target = $region28
      $region27: #{cross_attention_forward.12} parent=19 // pred_region
        %p187 = scmp.lt.s32.totalorder %s17, 1
        %s188 = scalar_select %p187, %s17, 1
        %s189 = smul.addr %s188, 8
        %s190 = scalar_lea.vmem %s2, %s189
      $region28: #{cross_attention_forward.12} parent=19 // pred_fallthru
        _
      // Predicated region
      $region29: #{cross_attention_forward.12} parent=19 // pred_check
        %p191 = pneg %p117
      $region30: #{cross_attention_forward.12} parent=19 // pred_check_branch
        %193 = sbr.rel (%p191) target = $region32
      $region31: #{cross_attention_forward.12} parent=19 // pred_region
        %p194 = scmp.lt.s32.totalorder %s17, 1
        %s195 = scalar_select %p194, %s17, 1
        %s196 = smul.addr %s195, 8
        %s197 = scalar_lea.vmem %s3, %s196
      $region32: #{cross_attention_forward.12} parent=19 // pred_fallthru
        _
    $region20: #{cross_attention_forward.12} parent=5 // pred_fallthru
      _
    %p198 = scmp.le.s32.totalorder 1, %s10
    %p199 = scmp.lt.s32.totalorder %s10, 3
    %p200 = pnand %p198, %p199
    %p201 = pneg %p200
    // Predicated region
    $region33: #{cross_attention_forward.12} parent=5 // pred_check
      _
    $region34: #{cross_attention_forward.12} parent=5 // pred_check_branch
      %203 = sbr.rel (%p200) target = $region36
    $region35: #{cross_attention_forward.12} parent=5 // pred_region
      %s204 = ssub.s32 %s10, 1
      %p205 = scmp.lt.s32.totalorder %s19, 1
      %s206 = scalar_select %p205, %s19, 1
      %p207 = scmp.lt.s32.totalorder %s20, 0
      %s208 = scalar_select %p207, %s20, 0
      %s209 = smul.addr %s206, 2
      %s210 = sadd.s32 %s208, %s209
      %s211 = smul.addr %s210, 8
      %s212 = scalar_lea.vmem %s0, %s211
      %p213 = pneg %p50
      %p214 = pneg %p47
      %p215 = pneg %p71
      %p216 = pneg %p68
      %p217 = scmp.lt.s32.totalorder %s19, 1
      %s218 = scalar_select %p217, %s19, 1
      %s219 = smul.addr %s218, 8
      %s220 = scalar_lea.vmem %s2, %s219
      %p221 = pneg %p97
      %p222 = pneg %p94
      %p223 = scmp.lt.s32.totalorder %s19, 1
      %s224 = scalar_select %p223, %s19, 1
      %s225 = smul.addr %s224, 8
      %s226 = scalar_lea.vmem %s3, %s225
      %p227 = pneg %p123
      %p228 = pneg %p120
      %p229 = pneg %p151
      %p230 = pneg %p148
      %p231 = scmp.lt.s32.totalorder %s19, 1
      %s232 = scalar_select %p231, %s19, 1
      %p233 = scmp.lt.s32.totalorder %s20, 0
      %s234 = scalar_select %p233, %s20, 0
      %s235 = sadd.s32 %s234, %s232
      %s236 = smul.addr %s235, 8
      %s237 = scalar_lea.vmem %s4, %s236
      %p238 = scmp.lt.s32.totalorder %s19, 1
      %s239 = scalar_select %p238, %s19, 1
      %p240 = scmp.lt.s32.totalorder %s20, 0
      %s241 = scalar_select %p240, %s20, 0
      %s242 = smul.addr %s239, 2
      %s243 = sadd.s32 %s241, %s242
      %s244 = smul.addr %s243, 8
      %s245 = scalar_lea.vmem %s0, %s244
      %p246 = scmp.lt.s32.totalorder %s19, 1
      %s247 = scalar_select %p246, %s19, 1
      %s248 = smul.addr %s247, 8
      %s249 = scalar_lea.vmem %s2, %s248
      %p250 = scmp.lt.s32.totalorder %s19, 1
      %s251 = scalar_select %p250, %s19, 1
      %s252 = smul.addr %s251, 8
      %s253 = scalar_lea.vmem %s3, %s252
      %p254 = scmp.lt.s32.totalorder %s19, 1
      %s255 = scalar_select %p254, %s19, 1
      %p256 = scmp.lt.s32.totalorder %s20, 0
      %s257 = scalar_select %p256, %s20, 0
      %s258 = sadd.s32 %s257, %s255
      %s259 = smul.addr %s258, 8
      %s260 = scalar_lea.vmem %s4, %s259
      %v261 = vld [vmem:[%s1] sm:$0xff]
      %v262 = vld [vmem:[%s245] sm:$0xff]
      %v263 = vld [vmem:[%s245 + $0x8] sm:$0xff]
      %vm264 = vcmask 130048
      %v266 = vsel %vm264, %v261, 0
      %268 = vmatpush.msra.mxu0 0.0
      %269 = vmatpush.msra.mxu0 0.0
      %270 = vmatpush.msra.mxu0 0.0
      %271 = vmatpush.msra.mxu0 0.0
      %272 = vmatpush.msra.mxu0 0.0
      %273 = vmatpush.msra.mxu0 0.0
      %274 = vmatpush.msra.mxu0 0.0
      %275 = vmatpush.msra.mxu0 0.0
      %276 = vmatpush.msra.mxu0 0.0
      %277 = vmatpush.msra.mxu0 0.0
      %278 = vmatpush.msra.mxu0 0.0
      %279 = vmatpush.msra.mxu0 0.0
      %280 = vmatpush.msra.mxu0 0.0
      %281 = vmatpush.msra.mxu0 0.0
      %282 = vmatpush.msra.mxu0 %v263
      %283 = vmatpush.msra.mxu0 %v262
      %284 = vmatmul.f32.gmra.mxu0 %v266
      %v285 = vpop.f32.mrf.mxu0
      %v286 = vadd.f32 0.0, %v285
      %287 = vdwg.mxu0
      %v288 = vld [vmem:[%s249] sm:$0xff]
      %290 = vset.pattern.permute.xlu0 0
      %291 = vperm.xlu0 %290, %v288
      %v292 = vpop.permute.xlu0 %291
      %v294 = vmul.f32 %v286, %v292
      %v295 = vld [vmem:[%s253] sm:$0xff]
      %297 = vset.pattern.permute.xlu0 0
      %298 = vperm.xlu0 %297, %v295
      %v299 = vpop.permute.xlu0 %298
      %v301 = vadd.f32 %v294, %v299
      %v302 = vmax.f32 %v301, 0.0
      %303 = vst [vmem:[%s260] sm:$0xff] %v302
      %p304 = scmp.lt.s32.totalorder %s19, 1
      %s305 = scalar_select %p304, %s19, 1
      %p306 = scmp.lt.s32.totalorder %s20, 0
      %s307 = scalar_select %p306, %s20, 0
      %s308 = sadd.s32 %s307, %s305
      %s309 = smul.addr %s308, 8
      %s310 = scalar_lea.vmem %s4, %s309
      // Predicated region
      $region37: #{cross_attention_forward.12} parent=35 // pred_check
        %p311 = pneg %p148
      $region38: #{cross_attention_forward.12} parent=35 // pred_check_branch
        %313 = sbr.rel (%p311) target = $region40
      $region39: #{cross_attention_forward.12} parent=35 // pred_region
        _
      $region40: #{cross_attention_forward.12} parent=35 // pred_fallthru
        _
    $region36: #{cross_attention_forward.12} parent=5 // pred_fallthru
      _
    %p314 = scmp.le.s32.totalorder 2, %s10
    // Predicated region
    $region41: #{cross_attention_forward.12} parent=5 // pred_check
      %p315 = pneg %p314
    $region42: #{cross_attention_forward.12} parent=5 // pred_check_branch
      %317 = sbr.rel (%p315) target = $region44
    $region43: #{cross_attention_forward.12} parent=5 // pred_region
      %s318 = ssub.s32 %s10, 2
      // Predicated region
      $region45: #{cross_attention_forward.12} parent=43 // pred_check
        %p319 = pneg %p154
      $region46: #{cross_attention_forward.12} parent=43 // pred_check_branch
        %321 = sbr.rel (%p319) target = $region48
      $region47: #{cross_attention_forward.12} parent=43 // pred_region
        %p322 = scmp.lt.s32.totalorder %s21, 1
        %s323 = scalar_select %p322, %s21, 1
        %p324 = scmp.lt.s32.totalorder %s22, 0
        %s325 = scalar_select %p324, %s22, 0
        %s326 = sadd.s32 %s325, %s323
        %s327 = smul.addr %s326, 8
        %s328 = scalar_lea.vmem %s4, %s327
      $region48: #{cross_attention_forward.12} parent=43 // pred_fallthru
        _
    $region44: #{cross_attention_forward.12} parent=5 // pred_fallthru
      _
  $region6: #{cross_attention_forward.12} parent=0 // loop_footer
    %s14 = sadd.s32 1, %s10
  $region7: #{cross_attention_forward.12} parent=0 // loop_footer_branch
    %9 = sbr.rel target = $region3
  $region8: #{cross_attention_forward.12} parent=0 // loop_exit
    _

// kernel: cross_attention_forward.9
$region0: #{cross_attention_forward.9}
  #allocation0 [shape = 'u32[]', space=smem, size = 0x4, offset = 0x4, fixed_abs, tag = 'smem constant byte address 0x4 - core index']
  #allocation1 [shape = 'u32[72,128]{1,0:T(1,128)}', space=vmem, size = 0x9000, scoped, tag = 'internal scratch']
  %s0 = inlined_call_operand.vmem [shape: f32[2,8,128], index: 0, kind: input, shape index: {}]
  %s1 = inlined_call_operand.vmem [shape: f32[8,8], index: 1, kind: input, shape index: {}]
  %s2 = inlined_call_operand.vmem [shape: f32[2,8,1], index: 2, kind: output, shape index: {0}]
  %s3 = inlined_call_operand.vmem [shape: f32[2,8,1], index: 3, kind: output, shape index: {1}]
  %4 = xla_tuple %s2, %s3
  %s5 = sld [smem:[#allocation0]]
  $region53: #{cross_attention_forward.9} parent=0
    _
  %s7 = ssub.s32 1, %s5
  %s8 = scalar_select 0, %s7, %s5
  loop: start=0, step=1, limit=4
  $region2: #{cross_attention_forward.9} parent=0 // loop_pre_header
    _
  $region3: #{cross_attention_forward.9} parent=0 // loop_header
    %s10 = sphi 0, %s14
    %p11 = scmp.ge.s32.totalorder %s10, 4
    %s17 = sphi 0, %s29
    %s18 = sphi 0, %s25
    %s19 = sphi 0, %s17
    %s20 = sphi 0, %s18
    %s21 = sphi 0, %s19
    %s22 = sphi 0, %s20
    %s34 = sphi 0, %s36
    %s37 = sphi 0, %s34
    %s38 = sphi 0, %s37
    %s54 = sphi 0, %s38
    %s58 = sphi 0, %s58
    %s60 = sphi 0, %s58
    %s61 = sphi 0, %s60
    %s75 = sphi 0, %s61
    %s81 = sphi 0, %s83
    %s84 = sphi 0, %s81
    %s85 = sphi 0, %s84
    %s101 = sphi 0, %s85
    %s107 = sphi 0, %s109
    %s110 = sphi 0, %s107
    %s111 = sphi 0, %s110
    %s127 = sphi 0, %s111
  $region4: #{cross_attention_forward.9} parent=0 // loop_header_branch
    %13 = sbr.rel (%p11) target = $region8
  $region5: #{cross_attention_forward.9} parent=0 // loop_body
    %s15 = ssub.s32 %s10, 1
    %s16 = ssub.s32 %s10, 2
    %s23 = sadd.s32 1, %s18
    %p24 = scmp.ge.s32.totalorder %s23, 1
    %s25 = scalar_select %p24, 0, %s23
    %s26 = sadd.s32 1, %s17
    %s27 = scalar_select %p24, %s26, %s17
    %p28 = scmp.ge.s32.totalorder %s27, 2
    %s29 = scalar_select %p28, 0, %s27
    %s30 = ssub.s32 %s17, %s29
    %s31 = ssub.s32 %s18, %s25
    %s32 = sor.u32 %s30, %s31
    %p33 = scmp.eq.s32.totalorder %s32, 0
    %s35 = sadd.s32 %s34, 1
    %s36 = scalar_select %p33, %s34, %s35
    %p39 = pneg %p33
    %p40 = scmp.eq.s32.totalorder %s10, 1
    %p41 = por %p39, %p40
    %p42 = scmp.ne.s32.totalorder %s34, %s37
    %p43 = scmp.eq.s32.totalorder %s10, 0
    %p44 = por %p42, %p43
    %p45 = scmp.ne.s32.totalorder %s34, %s37
    %p46 = scmp.eq.s32.totalorder %s15, 1
    %p47 = por %p45, %p46
    %p48 = scmp.ne.s32.totalorder %s37, %s38
    %p49 = scmp.eq.s32.totalorder %s15, 0
    %p50 = por %p48, %p49
    %p51 = scmp.ne.s32.totalorder %s37, %s38
    %p52 = scmp.eq.s32.totalorder %s16, 1
    %p53 = por %p51, %p52
    %p55 = scmp.ne.s32.totalorder %s38, %s54
    %p56 = scmp.eq.s32.totalorder %s16, 0
    %p57 = por %p55, %p56
    %s59 = sadd.s32 %s58, 1
    %p62 = scmp.eq.s32.totalorder %s10, 1
    %p63 = scmp.ne.s32.totalorder %s58, %s60
    %p64 = scmp.eq.s32.totalorder %s10, 0
    %p65 = por %p63, %p64
    %p66 = scmp.ne.s32.totalorder %s58, %s60
    %p67 = scmp.eq.s32.totalorder %s15, 1
    %p68 = por %p66, %p67
    %p69 = scmp.ne.s32.totalorder %s60, %s61
    %p70 = scmp.eq.s32.totalorder %s15, 0
    %p71 = por %p69, %p70
    %p72 = scmp.ne.s32.totalorder %s60, %s61
    %p73 = scmp.eq.s32.totalorder %s16, 1
    %p74 = por %p72, %p73
    %p76 = scmp.ne.s32.totalorder %s61, %s75
    %p77 = scmp.eq.s32.totalorder %s16, 0
    %p78 = por %p76, %p77
    %s79 = ssub.s32 %s17, %s29
    %p80 = scmp.eq.s32.totalorder %s79, 0
    %s82 = sadd.s32 %s81, 1
    %s83 = scalar_select %p80, %s81, %s82
    %p86 = pneg %p80
    %p87 = scmp.eq.s32.totalorder %s10, 1
    %p88 = por %p86, %p87
    %p89 = scmp.ne.s32.totalorder %s81, %s84
    %p90 = scmp.eq.s32.totalorder %s10, 0
    %p91 = por %p89, %p90
    %p92 = scmp.ne.s32.totalorder %s81, %s84
    %p93 = scmp.eq.s32.totalorder %s15, 1
    %p94 = por %p92, %p93
    %p95 = scmp.ne.s32.totalorder %s84, %s85
    %p96 = scmp.eq.s32.totalorder %s15, 0
    %p97 = por %p95, %p96
    %p98 = scmp.ne.s32.totalorder %s84, %s85
    %p99 = scmp.eq.s32.totalorder %s16, 1
    %p100 = por %p98, %p99
    %p102 = scmp.ne.s32.totalorder %s85, %s101
    %p103 = scmp.eq.s32.totalorder %s16, 0
    %p104 = por %p102, %p103
    %s105 = ssub.s32 %s17, %s29
    %p106 = scmp.eq.s32.totalorder %s105, 0
    %s108 = sadd.s32 %s107, 1
    %s109 = scalar_select %p106, %s107, %s108
    %p112 = pneg %p106
    %p113 = scmp.eq.s32.totalorder %s10, 1
    %p114 = por %p112, %p113
    %p115 = scmp.ne.s32.totalorder %s107, %s110
    %p116 = scmp.eq.s32.totalorder %s10, 0
    %p117 = por %p115, %p116
    %p118 = scmp.ne.s32.totalorder %s107, %s110
    %p119 = scmp.eq.s32.totalorder %s15, 1
    %p120 = por %p118, %p119
    %p121 = scmp.ne.s32.totalorder %s110, %s111
    %p122 = scmp.eq.s32.totalorder %s15, 0
    %p123 = por %p121, %p122
    %p124 = scmp.ne.s32.totalorder %s110, %s111
    %p125 = scmp.eq.s32.totalorder %s16, 1
    %p126 = por %p124, %p125
    %p128 = scmp.ne.s32.totalorder %s111, %s127
    %p129 = scmp.eq.s32.totalorder %s16, 0
    %p130 = por %p128, %p129
    %p131 = scmp.le.s32.totalorder 1, %s10
    %p132 = scmp.lt.s32.totalorder %s10, 3
    %p133 = pnand %p131, %p132
    %p134 = pneg %p133
    // Predicated region
    $region9: #{cross_attention_forward.9} parent=5 // pred_check
      _
    $region10: #{cross_attention_forward.9} parent=5 // pred_check_branch
      %136 = sbr.rel (%p133) target = $region12
    $region11: #{cross_attention_forward.9} parent=5 // pred_region
      %s137 = ssub.s32 %s10, 1
      // Predicated region
      $region13: #{cross_attention_forward.9} parent=11 // pred_check
        %p138 = pneg %p71
      $region14: #{cross_attention_forward.9} parent=11 // pred_check_branch
        %140 = sbr.rel (%p138) target = $region16
      $region15: #{cross_attention_forward.9} parent=11 // pred_region
        _
      $region16: #{cross_attention_forward.9} parent=11 // pred_fallthru
        _
    $region12: #{cross_attention_forward.9} parent=5 // pred_fallthru
      _
    %p141 = scmp.lt.s32.totalorder %s10, 2
    // Predicated region
    $region17: #{cross_attention_forward.9} parent=5 // pred_check
      %p142 = pneg %p141
    $region18: #{cross_attention_forward.9} parent=5 // pred_check_branch
      %144 = sbr.rel (%p142) target = $region20
    $region19: #{cross_attention_forward.9} parent=5 // pred_region
      // Predicated region
      $region21: #{cross_attention_forward.9} parent=19 // pred_check
        %p145 = pneg %p44
      $region22: #{cross_attention_forward.9} parent=19 // pred_check_branch
        %147 = sbr.rel (%p145) target = $region24
      $region23: #{cross_attention_forward.9} parent=19 // pred_region
        %p148 = scmp.lt.s32.totalorder %s17, 1
        %s149 = scalar_select %p148, %s17, 1
        %p150 = scmp.lt.s32.totalorder %s18, 0
        %s151 = scalar_select %p150, %s18, 0
        %s152 = sadd.s32 %s151, %s149
        %s153 = smul.addr %s152, 8
        %s154 = scalar_lea.vmem %s0, %s153
      $region24: #{cross_attention_forward.9} parent=19 // pred_fallthru
        _
    $region20: #{cross_attention_forward.9} parent=5 // pred_fallthru
      _
    %p155 = scmp.le.s32.totalorder 1, %s10
    %p156 = scmp.lt.s32.totalorder %s10, 3
    %p157 = pnand %p155, %p156
    %p158 = pneg %p157
    // Predicated region
    $region25: #{cross_attention_forward.9} parent=5 // pred_check
      _
    $region26: #{cross_attention_forward.9} parent=5 // pred_check_branch
      %160 = sbr.rel (%p157) target = $region28
    $region27: #{cross_attention_forward.9} parent=5 // pred_region
      %s161 = ssub.s32 %s10, 1
      %p162 = scmp.lt.s32.totalorder %s19, 1
      %s163 = scalar_select %p162, %s19, 1
      %p164 = scmp.lt.s32.totalorder %s20, 0
      %s165 = scalar_select %p164, %s20, 0
      %s166 = sadd.s32 %s165, %s163
      %s167 = smul.addr %s166, 8
      %s168 = scalar_lea.vmem %s0, %s167
      %p169 = pneg %p50
      %p170 = pneg %p47
      %p171 = pneg %p71
      %p172 = pneg %p68
      %p173 = pneg %p97
      %p174 = pneg %p94
      %p175 = scmp.lt.s32.totalorder %s19, 1
      %s176 = scalar_select %p175, %s19, 1
      %s177 = smul.addr %s176, 8
      %s178 = scalar_lea.vmem %s2, %s177
      %p179 = pneg %p123
      %p180 = pneg %p120
      %p181 = scmp.lt.s32.totalorder %s19, 1
      %s182 = scalar_select %p181, %s19, 1
      %s183 = smul.addr %s182, 8
      %s184 = scalar_lea.vmem %s3, %s183
      %p185 = scmp.lt.s32.totalorder %s19, 1
      %s186 = scalar_select %p185, %s19, 1
      %p187 = scmp.lt.s32.totalorder %s20, 0
      %s188 = scalar_select %p187, %s20, 0
      %s189 = sadd.s32 %s188, %s186
      %s190 = smul.addr %s189, 8
      %s191 = scalar_lea.vmem %s0, %s190
      %p192 = scmp.lt.s32.totalorder %s19, 1
      %s193 = scalar_select %p192, %s19, 1
      %s194 = smul.addr %s193, 8
      %s195 = scalar_lea.vmem %s2, %s194
      %p196 = scmp.lt.s32.totalorder %s19, 1
      %s197 = scalar_select %p196, %s19, 1
      %s198 = smul.addr %s197, 8
      %s199 = scalar_lea.vmem %s3, %s198
      %p200 = scmp.eq.s32.totalorder %s20, 0
      // Predicated region
      $region29: #{cross_attention_forward.9} parent=27 // pred_check
        %p201 = pneg %p200
      $region30: #{cross_attention_forward.9} parent=27 // pred_check_branch
        %203 = sbr.rel (%p201) target = $region32
      $region31: #{cross_attention_forward.9} parent=27 // pred_region
        %vm204 = vcmask 7168
        %205 = vst.msk [vmem:[%s195] sm:$0xff] %vm204, 0.0
        %206 = vst.msk [vmem:[%s199] sm:$0xff] %vm204, 0.0
      $region32: #{cross_attention_forward.9} parent=27 // pred_fallthru
        _
      %v207 = vld [vmem:[%s1] sm:$0xff]
      %v208 = vld [vmem:[%s191] sm:$0xff]
      %vm209 = vcmask 64512
      %v211 = vsel %vm209, %v207, 0
      %213 = vmatpush.msra.mxu0 0.0
      %214 = vmatpush.msra.mxu0 0.0
      %215 = vmatpush.msra.mxu0 0.0
      %216 = vmatpush.msra.mxu0 0.0
      %217 = vmatpush.msra.mxu0 0.0
      %218 = vmatpush.msra.mxu0 0.0
      %219 = vmatpush.msra.mxu0 0.0
      %220 = vmatpush.msra.mxu0 0.0
      %221 = vmatpush.msra.mxu0 0.0
      %222 = vmatpush.msra.mxu0 0.0
      %223 = vmatpush.msra.mxu0 0.0
      %224 = vmatpush.msra.mxu0 0.0
      %225 = vmatpush.msra.mxu0 0.0
      %226 = vmatpush.msra.mxu0 0.0
      %227 = vmatpush.msra.mxu0 0.0
      %228 = vmatpush.msra.mxu0 %v208
      %229 = vmatmul.f32.gmra.mxu0 %v211
      %v230 = vpop.f32.mrf.mxu0
      %v231 = vadd.f32 0.0, %v230
      %232 = vdwg.mxu0
      %v233 = vld [vmem:[%s195] sm:$0xff]
      %234 = vadd.xlane.f32.xlu0 %v231
      %v235 = vpop.xlane.xlu0 %234
      %v236 = vadd.f32 %v233, %v235
      %vm237 = vcmask 7168
      %238 = vst.msk [vmem:[%s195] sm:$0xff] %vm237, %v236
      %v239 = vld [vmem:[%s199] sm:$0xff]
      %v240 = vmul.f32 %v231, %v231
      %241 = vadd.xlane.f32.xlu0 %v240
      %v242 = vpop.xlane.xlu0 %241
      %v243 = vadd.f32 %v239, %v242
      %244 = vst.msk [vmem:[%s199] sm:$0xff] %vm237, %v243
      %p245 = scmp.lt.s32.totalorder %s19, 1
      %s246 = scalar_select %p245, %s19, 1
      %s247 = smul.addr %s246, 8
      %s248 = scalar_lea.vmem %s2, %s247
      %p249 = scmp.lt.s32.totalorder %s19, 1
      %s250 = scalar_select %p249, %s19, 1
      %s251 = smul.addr %s250, 8
      %s252 = scalar_lea.vmem %s3, %s251
      // Predicated region
      $region33: #{cross_attention_forward.9} parent=27 // pred_check
        %p253 = pneg %p94
      $region34: #{cross_attention_forward.9} parent=27 // pred_check_branch
        %255 = sbr.rel (%p253) target = $region36
      $region35: #{cross_attention_forward.9} parent=27 // pred_region
        _
      $region36: #{cross_attention_forward.9} parent=27 // pred_fallthru
        _
      // Predicated region
      $region37: #{cross_attention_forward.9} parent=27 // pred_check
        %p256 = pneg %p120
      $region38: #{cross_attention_forward.9} parent=27 // pred_check_branch
        %258 = sbr.rel (%p256) target = $region40
      $region39: #{cross_attention_forward.9} parent=27 // pred_region
        _
      $region40: #{cross_attention_forward.9} parent=27 // pred_fallthru
        _
    $region28: #{cross_attention_forward.9} parent=5 // pred_fallthru
      _
    %p259 = scmp.le.s32.totalorder 2, %s10
    // Predicated region
    $region41: #{cross_attention_forward.9} parent=5 // pred_check
      %p260 = pneg %p259
    $region42: #{cross_attention_forward.9} parent=5 // pred_check_branch
      %262 = sbr.rel (%p260) target = $region44
    $region43: #{cross_attention_forward.9} parent=5 // pred_region
      %s263 = ssub.s32 %s10, 2
      // Predicated region
      $region45: #{cross_attention_forward.9} parent=43 // pred_check
        %p264 = pneg %p100
      $region46: #{cross_attention_forward.9} parent=43 // pred_check_branch
        %266 = sbr.rel (%p264) target = $region48
      $region47: #{cross_attention_forward.9} parent=43 // pred_region
        %p267 = scmp.lt.s32.totalorder %s21, 1
        %s268 = scalar_select %p267, %s21, 1
        %s269 = smul.addr %s268, 8
        %s270 = scalar_lea.vmem %s2, %s269
      $region48: #{cross_attention_forward.9} parent=43 // pred_fallthru
        _
      // Predicated region
      $region49: #{cross_attention_forward.9} parent=43 // pred_check
        %p271 = pneg %p126
      $region50: #{cross_attention_forward.9} parent=43 // pred_check_branch
        %273 = sbr.rel (%p271) target = $region52
      $region51: #{cross_attention_forward.9} parent=43 // pred_region
        %p274 = scmp.lt.s32.totalorder %s21, 1
        %s275 = scalar_select %p274, %s21, 1
        %s276 = smul.addr %s275, 8
        %s277 = scalar_lea.vmem %s3, %s276
      $region52: #{cross_attention_forward.9} parent=43 // pred_fallthru
        _
    $region44: #{cross_attention_forward.9} parent=5 // pred_fallthru
      _
  $region6: #{cross_attention_forward.9} parent=0 // loop_footer
    %s14 = sadd.s32 1, %s10
  $region7: #{cross_attention_forward.9} parent=0 // loop_footer_branch
    %9 = sbr.rel target = $region3
  $region8: #{cross_attention_forward.9} parent=0 // loop_exit
    _

// kernel: cross_attention_forward.10
$region0: #{cross_attention_forward.10}
  #allocation0 [shape = 'u32[]', space=smem, size = 0x4, offset = 0x4, fixed_abs, tag = 'smem constant byte address 0x4 - core index']
  #allocation1 [shape = 'u32[72,128]{1,0:T(1,128)}', space=vmem, size = 0x9000, scoped, tag = 'internal scratch']
  %s0 = inlined_call_operand.vmem [shape: f32[2,8,128], index: 0, kind: input, shape index: {}]
  %s1 = inlined_call_operand.vmem [shape: f32[8,8], index: 1, kind: input, shape index: {}]
  %s2 = inlined_call_operand.vmem [shape: f32[2,8,1], index: 2, kind: input, shape index: {}]
  %s3 = inlined_call_operand.vmem [shape: f32[2,8,1], index: 3, kind: input, shape index: {}]
  %s4 = inlined_call_operand.vmem [shape: f32[2,8,128], index: 4, kind: output, shape index: {}]
  %s5 = sld [smem:[#allocation0]]
  $region49: #{cross_attention_forward.10} parent=0
    _
  %s7 = ssub.s32 1, %s5
  %s8 = scalar_select 0, %s7, %s5
  loop: start=0, step=1, limit=4
  $region2: #{cross_attention_forward.10} parent=0 // loop_pre_header
    _
  $region3: #{cross_attention_forward.10} parent=0 // loop_header
    %s10 = sphi 0, %s14
    %p11 = scmp.ge.s32.totalorder %s10, 4
    %s17 = sphi 0, %s29
    %s18 = sphi 0, %s25
    %s19 = sphi 0, %s17
    %s20 = sphi 0, %s18
    %s21 = sphi 0, %s19
    %s22 = sphi 0, %s20
    %s34 = sphi 0, %s36
    %s37 = sphi 0, %s34
    %s38 = sphi 0, %s37
    %s54 = sphi 0, %s38
    %s58 = sphi 0, %s58
    %s60 = sphi 0, %s58
    %s61 = sphi 0, %s60
    %s75 = sphi 0, %s61
    %s81 = sphi 0, %s83
    %s84 = sphi 0, %s81
    %s85 = sphi 0, %s84
    %s101 = sphi 0, %s85
    %s107 = sphi 0, %s109
    %s110 = sphi 0, %s107
    %s111 = sphi 0, %s110
    %s127 = sphi 0, %s111
    %s135 = sphi 0, %s137
    %s138 = sphi 0, %s135
    %s139 = sphi 0, %s138
    %s155 = sphi 0, %s139
  $region4: #{cross_attention_forward.10} parent=0 // loop_header_branch
    %13 = sbr.rel (%p11) target = $region8
  $region5: #{cross_attention_forward.10} parent=0 // loop_body
    %s15 = ssub.s32 %s10, 1
    %s16 = ssub.s32 %s10, 2
    %s23 = sadd.s32 1, %s18
    %p24 = scmp.ge.s32.totalorder %s23, 1
    %s25 = scalar_select %p24, 0, %s23
    %s26 = sadd.s32 1, %s17
    %s27 = scalar_select %p24, %s26, %s17
    %p28 = scmp.ge.s32.totalorder %s27, 2
    %s29 = scalar_select %p28, 0, %s27
    %s30 = ssub.s32 %s17, %s29
    %s31 = ssub.s32 %s18, %s25
    %s32 = sor.u32 %s30, %s31
    %p33 = scmp.eq.s32.totalorder %s32, 0
    %s35 = sadd.s32 %s34, 1
    %s36 = scalar_select %p33, %s34, %s35
    %p39 = pneg %p33
    %p40 = scmp.eq.s32.totalorder %s10, 1
    %p41 = por %p39, %p40
    %p42 = scmp.ne.s32.totalorder %s34, %s37
    %p43 = scmp.eq.s32.totalorder %s10, 0
    %p44 = por %p42, %p43
    %p45 = scmp.ne.s32.totalorder %s34, %s37
    %p46 = scmp.eq.s32.totalorder %s15, 1
    %p47 = por %p45, %p46
    %p48 = scmp.ne.s32.totalorder %s37, %s38
    %p49 = scmp.eq.s32.totalorder %s15, 0
    %p50 = por %p48, %p49
    %p51 = scmp.ne.s32.totalorder %s37, %s38
    %p52 = scmp.eq.s32.totalorder %s16, 1
    %p53 = por %p51, %p52
    %p55 = scmp.ne.s32.totalorder %s38, %s54
    %p56 = scmp.eq.s32.totalorder %s16, 0
    %p57 = por %p55, %p56
    %s59 = sadd.s32 %s58, 1
    %p62 = scmp.eq.s32.totalorder %s10, 1
    %p63 = scmp.ne.s32.totalorder %s58, %s60
    %p64 = scmp.eq.s32.totalorder %s10, 0
    %p65 = por %p63, %p64
    %p66 = scmp.ne.s32.totalorder %s58, %s60
    %p67 = scmp.eq.s32.totalorder %s15, 1
    %p68 = por %p66, %p67
    %p69 = scmp.ne.s32.totalorder %s60, %s61
    %p70 = scmp.eq.s32.totalorder %s15, 0
    %p71 = por %p69, %p70
    %p72 = scmp.ne.s32.totalorder %s60, %s61
    %p73 = scmp.eq.s32.totalorder %s16, 1
    %p74 = por %p72, %p73
    %p76 = scmp.ne.s32.totalorder %s61, %s75
    %p77 = scmp.eq.s32.totalorder %s16, 0
    %p78 = por %p76, %p77
    %s79 = ssub.s32 %s17, %s29
    %p80 = scmp.eq.s32.totalorder %s79, 0
    %s82 = sadd.s32 %s81, 1
    %s83 = scalar_select %p80, %s81, %s82
    %p86 = pneg %p80
    %p87 = scmp.eq.s32.totalorder %s10, 1
    %p88 = por %p86, %p87
    %p89 = scmp.ne.s32.totalorder %s81, %s84
    %p90 = scmp.eq.s32.totalorder %s10, 0
    %p91 = por %p89, %p90
    %p92 = scmp.ne.s32.totalorder %s81, %s84
    %p93 = scmp.eq.s32.totalorder %s15, 1
    %p94 = por %p92, %p93
    %p95 = scmp.ne.s32.totalorder %s84, %s85
    %p96 = scmp.eq.s32.totalorder %s15, 0
    %p97 = por %p95, %p96
    %p98 = scmp.ne.s32.totalorder %s84, %s85
    %p99 = scmp.eq.s32.totalorder %s16, 1
    %p100 = por %p98, %p99
    %p102 = scmp.ne.s32.totalorder %s85, %s101
    %p103 = scmp.eq.s32.totalorder %s16, 0
    %p104 = por %p102, %p103
    %s105 = ssub.s32 %s17, %s29
    %p106 = scmp.eq.s32.totalorder %s105, 0
    %s108 = sadd.s32 %s107, 1
    %s109 = scalar_select %p106, %s107, %s108
    %p112 = pneg %p106
    %p113 = scmp.eq.s32.totalorder %s10, 1
    %p114 = por %p112, %p113
    %p115 = scmp.ne.s32.totalorder %s107, %s110
    %p116 = scmp.eq.s32.totalorder %s10, 0
    %p117 = por %p115, %p116
    %p118 = scmp.ne.s32.totalorder %s107, %s110
    %p119 = scmp.eq.s32.totalorder %s15, 1
    %p120 = por %p118, %p119
    %p121 = scmp.ne.s32.totalorder %s110, %s111
    %p122 = scmp.eq.s32.totalorder %s15, 0
    %p123 = por %p121, %p122
    %p124 = scmp.ne.s32.totalorder %s110, %s111
    %p125 = scmp.eq.s32.totalorder %s16, 1
    %p126 = por %p124, %p125
    %p128 = scmp.ne.s32.totalorder %s111, %s127
    %p129 = scmp.eq.s32.totalorder %s16, 0
    %p130 = por %p128, %p129
    %s131 = ssub.s32 %s17, %s29
    %s132 = ssub.s32 %s18, %s25
    %s133 = sor.u32 %s131, %s132
    %p134 = scmp.eq.s32.totalorder %s133, 0
    %s136 = sadd.s32 %s135, 1
    %s137 = scalar_select %p134, %s135, %s136
    %p140 = pneg %p134
    %p141 = scmp.eq.s32.totalorder %s10, 1
    %p142 = por %p140, %p141
    %p143 = scmp.ne.s32.totalorder %s135, %s138
    %p144 = scmp.eq.s32.totalorder %s10, 0
    %p145 = por %p143, %p144
    %p146 = scmp.ne.s32.totalorder %s135, %s138
    %p147 = scmp.eq.s32.totalorder %s15, 1
    %p148 = por %p146, %p147
    %p149 = scmp.ne.s32.totalorder %s138, %s139
    %p150 = scmp.eq.s32.totalorder %s15, 0
    %p151 = por %p149, %p150
    %p152 = scmp.ne.s32.totalorder %s138, %s139
    %p153 = scmp.eq.s32.totalorder %s16, 1
    %p154 = por %p152, %p153
    %p156 = scmp.ne.s32.totalorder %s139, %s155
    %p157 = scmp.eq.s32.totalorder %s16, 0
    %p158 = por %p156, %p157
    %p159 = scmp.le.s32.totalorder 1, %s10
    %p160 = scmp.lt.s32.totalorder %s10, 3
    %p161 = pnand %p159, %p160
    %p162 = pneg %p161
    // Predicated region
    $region9: #{cross_attention_forward.10} parent=5 // pred_check
      _
    $region10: #{cross_attention_forward.10} parent=5 // pred_check_branch
      %164 = sbr.rel (%p161) target = $region12
    $region11: #{cross_attention_forward.10} parent=5 // pred_region
      %s165 = ssub.s32 %s10, 1
      // Predicated region
      $region13: #{cross_attention_forward.10} parent=11 // pred_check
        %p166 = pneg %p71
      $region14: #{cross_attention_forward.10} parent=11 // pred_check_branch
        %168 = sbr.rel (%p166) target = $region16
      $region15: #{cross_attention_forward.10} parent=11 // pred_region
        _
      $region16: #{cross_attention_forward.10} parent=11 // pred_fallthru
        _
    $region12: #{cross_attention_forward.10} parent=5 // pred_fallthru
      _
    %p169 = scmp.lt.s32.totalorder %s10, 2
    // Predicated region
    $region17: #{cross_attention_forward.10} parent=5 // pred_check
      %p170 = pneg %p169
    $region18: #{cross_attention_forward.10} parent=5 // pred_check_branch
      %172 = sbr.rel (%p170) target = $region20
    $region19: #{cross_attention_forward.10} parent=5 // pred_region
      // Predicated region
      $region21: #{cross_attention_forward.10} parent=19 // pred_check
        %p173 = pneg %p44
      $region22: #{cross_attention_forward.10} parent=19 // pred_check_branch
        %175 = sbr.rel (%p173) target = $region24
      $region23: #{cross_attention_forward.10} parent=19 // pred_region
        %p176 = scmp.lt.s32.totalorder %s17, 1
        %s177 = scalar_select %p176, %s17, 1
        %p178 = scmp.lt.s32.totalorder %s18, 0
        %s179 = scalar_select %p178, %s18, 0
        %s180 = sadd.s32 %s179, %s177
        %s181 = smul.addr %s180, 8
        %s182 = scalar_lea.vmem %s0, %s181
      $region24: #{cross_attention_forward.10} parent=19 // pred_fallthru
        _
      // Predicated region
      $region25: #{cross_attention_forward.10} parent=19 // pred_check
        %p183 = pneg %p91
      $region26: #{cross_attention_forward.10} parent=19 // pred_check_branch
        %185 = sbr.rel (%p183) target = $region28
      $region27: #{cross_attention_forward.10} parent=19 // pred_region
        %p186 = scmp.lt.s32.totalorder %s17, 1
        %s187 = scalar_select %p186, %s17, 1
        %s188 = smul.addr %s187, 8
        %s189 = scalar_lea.vmem %s2, %s188
      $region28: #{cross_attention_forward.10} parent=19 // pred_fallthru
        _
      // Predicated region
      $region29: #{cross_attention_forward.10} parent=19 // pred_check
        %p190 = pneg %p117
      $region30: #{cross_attention_forward.10} parent=19 // pred_check_branch
        %192 = sbr.rel (%p190) target = $region32
      $region31: #{cross_attention_forward.10} parent=19 // pred_region
        %p193 = scmp.lt.s32.totalorder %s17, 1
        %s194 = scalar_select %p193, %s17, 1
        %s195 = smul.addr %s194, 8
        %s196 = scalar_lea.vmem %s3, %s195
      $region32: #{cross_attention_forward.10} parent=19 // pred_fallthru
        _
    $region20: #{cross_attention_forward.10} parent=5 // pred_fallthru
      _
    %p197 = scmp.le.s32.totalorder 1, %s10
    %p198 = scmp.lt.s32.totalorder %s10, 3
    %p199 = pnand %p197, %p198
    %p200 = pneg %p199
    // Predicated region
    $region33: #{cross_attention_forward.10} parent=5 // pred_check
      _
    $region34: #{cross_attention_forward.10} parent=5 // pred_check_branch
      %202 = sbr.rel (%p199) target = $region36
    $region35: #{cross_attention_forward.10} parent=5 // pred_region
      %s203 = ssub.s32 %s10, 1
      %p204 = scmp.lt.s32.totalorder %s19, 1
      %s205 = scalar_select %p204, %s19, 1
      %p206 = scmp.lt.s32.totalorder %s20, 0
      %s207 = scalar_select %p206, %s20, 0
      %s208 = sadd.s32 %s207, %s205
      %s209 = smul.addr %s208, 8
      %s210 = scalar_lea.vmem %s0, %s209
      %p211 = pneg %p50
      %p212 = pneg %p47
      %p213 = pneg %p71
      %p214 = pneg %p68
      %p215 = scmp.lt.s32.totalorder %s19, 1
      %s216 = scalar_select %p215, %s19, 1
      %s217 = smul.addr %s216, 8
      %s218 = scalar_lea.vmem %s2, %s217
      %p219 = pneg %p97
      %p220 = pneg %p94
      %p221 = scmp.lt.s32.totalorder %s19, 1
      %s222 = scalar_select %p221, %s19, 1
      %s223 = smul.addr %s222, 8
      %s224 = scalar_lea.vmem %s3, %s223
      %p225 = pneg %p123
      %p226 = pneg %p120
      %p227 = pneg %p151
      %p228 = pneg %p148
      %p229 = scmp.lt.s32.totalorder %s19, 1
      %s230 = scalar_select %p229, %s19, 1
      %p231 = scmp.lt.s32.totalorder %s20, 0
      %s232 = scalar_select %p231, %s20, 0
      %s233 = sadd.s32 %s232, %s230
      %s234 = smul.addr %s233, 8
      %s235 = scalar_lea.vmem %s4, %s234
      %p236 = scmp.lt.s32.totalorder %s19, 1
      %s237 = scalar_select %p236, %s19, 1
      %p238 = scmp.lt.s32.totalorder %s20, 0
      %s239 = scalar_select %p238, %s20, 0
      %s240 = sadd.s32 %s239, %s237
      %s241 = smul.addr %s240, 8
      %s242 = scalar_lea.vmem %s0, %s241
      %p243 = scmp.lt.s32.totalorder %s19, 1
      %s244 = scalar_select %p243, %s19, 1
      %s245 = smul.addr %s244, 8
      %s246 = scalar_lea.vmem %s2, %s245
      %p247 = scmp.lt.s32.totalorder %s19, 1
      %s248 = scalar_select %p247, %s19, 1
      %s249 = smul.addr %s248, 8
      %s250 = scalar_lea.vmem %s3, %s249
      %p251 = scmp.lt.s32.totalorder %s19, 1
      %s252 = scalar_select %p251, %s19, 1
      %p253 = scmp.lt.s32.totalorder %s20, 0
      %s254 = scalar_select %p253, %s20, 0
      %s255 = sadd.s32 %s254, %s252
      %s256 = smul.addr %s255, 8
      %s257 = scalar_lea.vmem %s4, %s256
      %v258 = vld [vmem:[%s1] sm:$0xff]
      %v259 = vld [vmem:[%s242] sm:$0xff]
      %vm260 = vcmask 64512
      %v262 = vsel %vm260, %v258, 0
      %264 = vmatpush.msra.mxu0 0.0
      %265 = vmatpush.msra.mxu0 0.0
      %266 = vmatpush.msra.mxu0 0.0
      %267 = vmatpush.msra.mxu0 0.0
      %268 = vmatpush.msra.mxu0 0.0
      %269 = vmatpush.msra.mxu0 0.0
      %270 = vmatpush.msra.mxu0 0.0
      %271 = vmatpush.msra.mxu0 0.0
      %272 = vmatpush.msra.mxu0 0.0
      %273 = vmatpush.msra.mxu0 0.0
      %274 = vmatpush.msra.mxu0 0.0
      %275 = vmatpush.msra.mxu0 0.0
      %276 = vmatpush.msra.mxu0 0.0
      %277 = vmatpush.msra.mxu0 0.0
      %278 = vmatpush.msra.mxu0 0.0
      %279 = vmatpush.msra.mxu0 %v259
      %280 = vmatmul.f32.gmra.mxu0 %v262
      %v281 = vpop.f32.mrf.mxu0
      %v282 = vadd.f32 0.0, %v281
      %283 = vdwg.mxu0
      %v284 = vld [vmem:[%s246] sm:$0xff]
      %286 = vset.pattern.permute.xlu0 0
      %287 = vperm.xlu0 %286, %v284
      %v288 = vpop.permute.xlu0 %287
      %v290 = vmul.f32 %v282, %v288
      %v291 = vld [vmem:[%s250] sm:$0xff]
      %293 = vset.pattern.permute.xlu0 0
      %294 = vperm.xlu0 %293, %v291
      %v295 = vpop.permute.xlu0 %294
      %v297 = vadd.f32 %v290, %v295
      %v298 = vmax.f32 %v297, 0.0
      %299 = vst [vmem:[%s257] sm:$0xff] %v298
      %p300 = scmp.lt.s32.totalorder %s19, 1
      %s301 = scalar_select %p300, %s19, 1
      %p302 = scmp.lt.s32.totalorder %s20, 0
      %s303 = scalar_select %p302, %s20, 0
      %s304 = sadd.s32 %s303, %s301
      %s305 = smul.addr %s304, 8
      %s306 = scalar_lea.vmem %s4, %s305
      // Predicated region
      $region37: #{cross_attention_forward.10} parent=35 // pred_check
        %p307 = pneg %p148
      $region38: #{cross_attention_forward.10} parent=35 // pred_check_branch
        %309 = sbr.rel (%p307) target = $region40
      $region39: #{cross_attention_forward.10} parent=35 // pred_region
        _
      $region40: #{cross_attention_forward.10} parent=35 // pred_fallthru
        _
    $region36: #{cross_attention_forward.10} parent=5 // pred_fallthru
      _
    %p310 = scmp.le.s32.totalorder 2, %s10
    // Predicated region
    $region41: #{cross_attention_forward.10} parent=5 // pred_check
      %p311 = pneg %p310
    $region42: #{cross_attention_forward.10} parent=5 // pred_check_branch
      %313 = sbr.rel (%p311) target = $region44
    $region43: #{cross_attention_forward.10} parent=5 // pred_region
      %s314 = ssub.s32 %s10, 2
      // Predicated region
      $region45: #{cross_attention_forward.10} parent=43 // pred_check
        %p315 = pneg %p154
      $region46: #{cross_attention_forward.10} parent=43 // pred_check_branch
        %317 = sbr.rel (%p315) target = $region48
      $region47: #{cross_attention_forward.10} parent=43 // pred_region
        %p318 = scmp.lt.s32.totalorder %s21, 1
        %s319 = scalar_select %p318, %s21, 1
        %p320 = scmp.lt.s32.totalorder %s22, 0
        %s321 = scalar_select %p320, %s22, 0
        %s322 = sadd.s32 %s321, %s319
        %s323 = smul.addr %s322, 8
        %s324 = scalar_lea.vmem %s4, %s323
      $region48: #{cross_attention_forward.10} parent=43 // pred_fallthru
        _
    $region44: #{cross_attention_forward.10} parent=5 // pred_fallthru
      _
  $region6: #{cross_attention_forward.10} parent=0 // loop_footer
    %s14 = sadd.s32 1, %s10
  $region7: #{cross_attention_forward.10} parent=0 // loop_footer_branch
    %9 = sbr.rel target = $region3
  $region8: #{cross_attention_forward.10} parent=0 // loop_exit
    _

// kernel: cross_attention_forward.13
$region0: #{cross_attention_forward.13}
  #allocation0 [shape = 'u32[]', space=smem, size = 0x4, offset = 0x4, fixed_abs, tag = 'smem constant byte address 0x4 - core index']
  #allocation1 [shape = 'u32[72,128]{1,0:T(1,128)}', space=vmem, size = 0x9000, scoped, tag = 'internal scratch']
  %s0 = inlined_call_operand.vmem [shape: f32[2,8,128], index: 0, kind: input, shape index: {}]
  %s1 = inlined_call_operand.vmem [shape: f32[2,8,128], index: 1, kind: input, shape index: {}]
  %s2 = inlined_call_operand.vmem [shape: f32[8,8], index: 2, kind: input, shape index: {}]
  %s3 = inlined_call_operand.vmem [shape: f32[8,8], index: 3, kind: input, shape index: {}]
  %s4 = inlined_call_operand.vmem [shape: f32[8,8], index: 4, kind: input, shape index: {}]
  %s5 = inlined_call_operand.vmem [shape: bf16[2,8,128], index: 5, kind: output, shape index: {0}]
  %s6 = inlined_call_operand.vmem [shape: bf16[2,8,128], index: 6, kind: output, shape index: {1}]
  %s7 = inlined_call_operand.vmem [shape: bf16[2,8,128], index: 7, kind: output, shape index: {2}]
  %8 = xla_tuple %s5, %s6, %s7
  %s9 = sld [smem:[#allocation0]]
  $region69: #{cross_attention_forward.13} parent=0
    _
  %s11 = ssub.s32 1, %s9
  %s12 = scalar_select 0, %s11, %s9
  loop: start=0, step=1, limit=4
  $region2: #{cross_attention_forward.13} parent=0 // loop_pre_header
    _
  $region3: #{cross_attention_forward.13} parent=0 // loop_header
    %s14 = sphi 0, %s18
    %p15 = scmp.ge.s32.totalorder %s14, 4
    %s21 = sphi 0, %s33
    %s22 = sphi 0, %s29
    %s23 = sphi 0, %s21
    %s24 = sphi 0, %s22
    %s25 = sphi 0, %s23
    %s26 = sphi 0, %s24
    %s38 = sphi 0, %s40
    %s41 = sphi 0, %s38
    %s42 = sphi 0, %s41
    %s58 = sphi 0, %s42
    %s66 = sphi 0, %s68
    %s69 = sphi 0, %s66
    %s70 = sphi 0, %s69
    %s86 = sphi 0, %s70
    %s90 = sphi 0, %s90
    %s92 = sphi 0, %s90
    %s93 = sphi 0, %s92
    %s107 = sphi 0, %s93
    %s111 = sphi 0, %s111
    %s113 = sphi 0, %s111
    %s114 = sphi 0, %s113
    %s128 = sphi 0, %s114
    %s132 = sphi 0, %s132
    %s134 = sphi 0, %s132
    %s135 = sphi 0, %s134
    %s149 = sphi 0, %s135
    %s157 = sphi 0, %s159
    %s160 = sphi 0, %s157
    %s161 = sphi 0, %s160
    %s177 = sphi 0, %s161
    %s185 = sphi 0, %s187
    %s188 = sphi 0, %s185
    %s189 = sphi 0, %s188
    %s205 = sphi 0, %s189
    %s213 = sphi 0, %s215
    %s216 = sphi 0, %s213
    %s217 = sphi 0, %s216
    %s233 = sphi 0, %s217
  $region4: #{cross_attention_forward.13} parent=0 // loop_header_branch
    %17 = sbr.rel (%p15) target = $region8
  $region5: #{cross_attention_forward.13} parent=0 // loop_body
    %s19 = ssub.s32 %s14, 1
    %s20 = ssub.s32 %s14, 2
    %s27 = sadd.s32 1, %s22
    %p28 = scmp.ge.s32.totalorder %s27, 1
    %s29 = scalar_select %p28, 0, %s27
    %s30 = sadd.s32 1, %s21
    %s31 = scalar_select %p28, %s30, %s21
    %p32 = scmp.ge.s32.totalorder %s31, 2
    %s33 = scalar_select %p32, 0, %s31
    %s34 = ssub.s32 %s21, %s33
    %s35 = ssub.s32 %s22, %s29
    %s36 = sor.u32 %s34, %s35
    %p37 = scmp.eq.s32.totalorder %s36, 0
    %s39 = sadd.s32 %s38, 1
    %s40 = scalar_select %p37, %s38, %s39
    %p43 = pneg %p37
    %p44 = scmp.eq.s32.totalorder %s14, 1
    %p45 = por %p43, %p44
    %p46 = scmp.ne.s32.totalorder %s38, %s41
    %p47 = scmp.eq.s32.totalorder %s14, 0
    %p48 = por %p46, %p47
    %p49 = scmp.ne.s32.totalorder %s38, %s41
    %p50 = scmp.eq.s32.totalorder %s19, 1
    %p51 = por %p49, %p50
    %p52 = scmp.ne.s32.totalorder %s41, %s42
    %p53 = scmp.eq.s32.totalorder %s19, 0
    %p54 = por %p52, %p53
    %p55 = scmp.ne.s32.totalorder %s41, %s42
    %p56 = scmp.eq.s32.totalorder %s20, 1
    %p57 = por %p55, %p56
    %p59 = scmp.ne.s32.totalorder %s42, %s58
    %p60 = scmp.eq.s32.totalorder %s20, 0
    %p61 = por %p59, %p60
    %s62 = ssub.s32 %s21, %s33
    %s63 = ssub.s32 %s22, %s29
    %s64 = sor.u32 %s62, %s63
    %p65 = scmp.eq.s32.totalorder %s64, 0
    %s67 = sadd.s32 %s66, 1
    %s68 = scalar_select %p65, %s66, %s67
    %p71 = pneg %p65
    %p72 = scmp.eq.s32.totalorder %s14, 1
    %p73 = por %p71, %p72
    %p74 = scmp.ne.s32.totalorder %s66, %s69
    %p75 = scmp.eq.s32.totalorder %s14, 0
    %p76 = por %p74, %p75
    %p77 = scmp.ne.s32.totalorder %s66, %s69
    %p78 = scmp.eq.s32.totalorder %s19, 1
    %p79 = por %p77, %p78
    %p80 = scmp.ne.s32.totalorder %s69, %s70
    %p81 = scmp.eq.s32.totalorder %s19, 0
    %p82 = por %p80, %p81
    %p83 = scmp.ne.s32.totalorder %s69, %s70
    %p84 = scmp.eq.s32.totalorder %s20, 1
    %p85 = por %p83, %p84
    %p87 = scmp.ne.s32.totalorder %s70, %s86
    %p88 = scmp.eq.s32.totalorder %s20, 0
    %p89 = por %p87, %p88
    %s91 = sadd.s32 %s90, 1
    %p94 = scmp.eq.s32.totalorder %s14, 1
    %p95 = scmp.ne.s32.totalorder %s90, %s92
    %p96 = scmp.eq.s32.totalorder %s14, 0
    %p97 = por %p95, %p96
    %p98 = scmp.ne.s32.totalorder %s90, %s92
    %p99 = scmp.eq.s32.totalorder %s19, 1
    %p100 = por %p98, %p99
    %p101 = scmp.ne.s32.totalorder %s92, %s93
    %p102 = scmp.eq.s32.totalorder %s19, 0
    %p103 = por %p101, %p102
    %p104 = scmp.ne.s32.totalorder %s92, %s93
    %p105 = scmp.eq.s32.totalorder %s20, 1
    %p106 = por %p104, %p105
    %p108 = scmp.ne.s32.totalorder %s93, %s107
    %p109 = scmp.eq.s32.totalorder %s20, 0
    %p110 = por %p108, %p109
    %s112 = sadd.s32 %s111, 1
    %p115 = scmp.eq.s32.totalorder %s14, 1
    %p116 = scmp.ne.s32.totalorder %s111, %s113
    %p117 = scmp.eq.s32.totalorder %s14, 0
    %p118 = por %p116, %p117
    %p119 = scmp.ne.s32.totalorder %s111, %s113
    %p120 = scmp.eq.s32.totalorder %s19, 1
    %p121 = por %p119, %p120
    %p122 = scmp.ne.s32.totalorder %s113, %s114
    %p123 = scmp.eq.s32.totalorder %s19, 0
    %p124 = por %p122, %p123
    %p125 = scmp.ne.s32.totalorder %s113, %s114
    %p126 = scmp.eq.s32.totalorder %s20, 1
    %p127 = por %p125, %p126
    %p129 = scmp.ne.s32.totalorder %s114, %s128
    %p130 = scmp.eq.s32.totalorder %s20, 0
    %p131 = por %p129, %p130
    %s133 = sadd.s32 %s132, 1
    %p136 = scmp.eq.s32.totalorder %s14, 1
    %p137 = scmp.ne.s32.totalorder %s132, %s134
    %p138 = scmp.eq.s32.totalorder %s14, 0
    %p139 = por %p137, %p138
    %p140 = scmp.ne.s32.totalorder %s132, %s134
    %p141 = scmp.eq.s32.totalorder %s19, 1
    %p142 = por %p140, %p141
    %p143 = scmp.ne.s32.totalorder %s134, %s135
    %p144 = scmp.eq.s32.totalorder %s19, 0
    %p145 = por %p143, %p144
    %p146 = scmp.ne.s32.totalorder %s134, %s135
    %p147 = scmp.eq.s32.totalorder %s20, 1
    %p148 = por %p146, %p147
    %p150 = scmp.ne.s32.totalorder %s135, %s149
    %p151 = scmp.eq.s32.totalorder %s20, 0
    %p152 = por %p150, %p151
    %s153 = ssub.s32 %s21, %s33
    %s154 = ssub.s32 %s22, %s29
    %s155 = sor.u32 %s153, %s154
    %p156 = scmp.eq.s32.totalorder %s155, 0
    %s158 = sadd.s32 %s157, 1
    %s159 = scalar_select %p156, %s157, %s158
    %p162 = pneg %p156
    %p163 = scmp.eq.s32.totalorder %s14, 1
    %p164 = por %p162, %p163
    %p165 = scmp.ne.s32.totalorder %s157, %s160
    %p166 = scmp.eq.s32.totalorder %s14, 0
    %p167 = por %p165, %p166
    %p168 = scmp.ne.s32.totalorder %s157, %s160
    %p169 = scmp.eq.s32.totalorder %s19, 1
    %p170 = por %p168, %p169
    %p171 = scmp.ne.s32.totalorder %s160, %s161
    %p172 = scmp.eq.s32.totalorder %s19, 0
    %p173 = por %p171, %p172
    %p174 = scmp.ne.s32.totalorder %s160, %s161
    %p175 = scmp.eq.s32.totalorder %s20, 1
    %p176 = por %p174, %p175
    %p178 = scmp.ne.s32.totalorder %s161, %s177
    %p179 = scmp.eq.s32.totalorder %s20, 0
    %p180 = por %p178, %p179
    %s181 = ssub.s32 %s21, %s33
    %s182 = ssub.s32 %s22, %s29
    %s183 = sor.u32 %s181, %s182
    %p184 = scmp.eq.s32.totalorder %s183, 0
    %s186 = sadd.s32 %s185, 1
    %s187 = scalar_select %p184, %s185, %s186
    %p190 = pneg %p184
    %p191 = scmp.eq.s32.totalorder %s14, 1
    %p192 = por %p190, %p191
    %p193 = scmp.ne.s32.totalorder %s185, %s188
    %p194 = scmp.eq.s32.totalorder %s14, 0
    %p195 = por %p193, %p194
    %p196 = scmp.ne.s32.totalorder %s185, %s188
    %p197 = scmp.eq.s32.totalorder %s19, 1
    %p198 = por %p196, %p197
    %p199 = scmp.ne.s32.totalorder %s188, %s189
    %p200 = scmp.eq.s32.totalorder %s19, 0
    %p201 = por %p199, %p200
    %p202 = scmp.ne.s32.totalorder %s188, %s189
    %p203 = scmp.eq.s32.totalorder %s20, 1
    %p204 = por %p202, %p203
    %p206 = scmp.ne.s32.totalorder %s189, %s205
    %p207 = scmp.eq.s32.totalorder %s20, 0
    %p208 = por %p206, %p207
    %s209 = ssub.s32 %s21, %s33
    %s210 = ssub.s32 %s22, %s29
    %s211 = sor.u32 %s209, %s210
    %p212 = scmp.eq.s32.totalorder %s211, 0
    %s214 = sadd.s32 %s213, 1
    %s215 = scalar_select %p212, %s213, %s214
    %p218 = pneg %p212
    %p219 = scmp.eq.s32.totalorder %s14, 1
    %p220 = por %p218, %p219
    %p221 = scmp.ne.s32.totalorder %s213, %s216
    %p222 = scmp.eq.s32.totalorder %s14, 0
    %p223 = por %p221, %p222
    %p224 = scmp.ne.s32.totalorder %s213, %s216
    %p225 = scmp.eq.s32.totalorder %s19, 1
    %p226 = por %p224, %p225
    %p227 = scmp.ne.s32.totalorder %s216, %s217
    %p228 = scmp.eq.s32.totalorder %s19, 0
    %p229 = por %p227, %p228
    %p230 = scmp.ne.s32.totalorder %s216, %s217
    %p231 = scmp.eq.s32.totalorder %s20, 1
    %p232 = por %p230, %p231
    %p234 = scmp.ne.s32.totalorder %s217, %s233
    %p235 = scmp.eq.s32.totalorder %s20, 0
    %p236 = por %p234, %p235
    %p237 = scmp.le.s32.totalorder 1, %s14
    %p238 = scmp.lt.s32.totalorder %s14, 3
    %p239 = pnand %p237, %p238
    %p240 = pneg %p239
    // Predicated region
    $region9: #{cross_attention_forward.13} parent=5 // pred_check
      _
    $region10: #{cross_attention_forward.13} parent=5 // pred_check_branch
      %242 = sbr.rel (%p239) target = $region12
    $region11: #{cross_attention_forward.13} parent=5 // pred_region
      %s243 = ssub.s32 %s14, 1
      // Predicated region
      $region13: #{cross_attention_forward.13} parent=11 // pred_check
        %p244 = pneg %p103
      $region14: #{cross_attention_forward.13} parent=11 // pred_check_branch
        %246 = sbr.rel (%p244) target = $region16
      $region15: #{cross_attention_forward.13} parent=11 // pred_region
        _
      $region16: #{cross_attention_forward.13} parent=11 // pred_fallthru
        _
      // Predicated region
      $region17: #{cross_attention_forward.13} parent=11 // pred_check
        %p247 = pneg %p124
      $region18: #{cross_attention_forward.13} parent=11 // pred_check_branch
        %249 = sbr.rel (%p247) target = $region20
      $region19: #{cross_attention_forward.13} parent=11 // pred_region
        _
      $region20: #{cross_attention_forward.13} parent=11 // pred_fallthru
        _
      // Predicated region
      $region21: #{cross_attention_forward.13} parent=11 // pred_check
        %p250 = pneg %p145
      $region22: #{cross_attention_forward.13} parent=11 // pred_check_branch
        %252 = sbr.rel (%p250) target = $region24
      $region23: #{cross_attention_forward.13} parent=11 // pred_region
        _
      $region24: #{cross_attention_forward.13} parent=11 // pred_fallthru
        _
    $region12: #{cross_attention_forward.13} parent=5 // pred_fallthru
      _
    %p253 = scmp.lt.s32.totalorder %s14, 2
    // Predicated region
    $region25: #{cross_attention_forward.13} parent=5 // pred_check
      %p254 = pneg %p253
    $region26: #{cross_attention_forward.13} parent=5 // pred_check_branch
      %256 = sbr.rel (%p254) target = $region28
    $region27: #{cross_attention_forward.13} parent=5 // pred_region
      // Predicated region
      $region29: #{cross_attention_forward.13} parent=27 // pred_check
        %p257 = pneg %p48
      $region30: #{cross_attention_forward.13} parent=27 // pred_check_branch
        %259 = sbr.rel (%p257) target = $region32
      $region31: #{cross_attention_forward.13} parent=27 // pred_region
        %p260 = scmp.lt.s32.totalorder %s21, 1
        %s261 = scalar_select %p260, %s21, 1
        %p262 = scmp.lt.s32.totalorder %s22, 0
        %s263 = scalar_select %p262, %s22, 0
        %s264 = sadd.s32 %s263, %s261
        %s265 = smul.addr %s264, 8
        %s266 = scalar_lea.vmem %s0, %s265
      $region32: #{cross_attention_forward.13} parent=27 // pred_fallthru
        _
      // Predicated region
      $region33: #{cross_attention_forward.13} parent=27 // pred_check
        %p267 = pneg %p76
      $region34: #{cross_attention_forward.13} parent=27 // pred_check_branch
        %269 = sbr.rel (%p267) target = $region36
      $region35: #{cross_attention_forward.13} parent=27 // pred_region
        %p270 = scmp.lt.s32.totalorder %s21, 1
        %s271 = scalar_select %p270, %s21, 1
        %p272 = scmp.lt.s32.totalorder %s22, 0
        %s273 = scalar_select %p272, %s22, 0
        %s274 = sadd.s32 %s273, %s271
        %s275 = smul.addr %s274, 8
        %s276 = scalar_lea.vmem %s1, %s275
      $region36: #{cross_attention_forward.13} parent=27 // pred_fallthru
        _
    $region28: #{cross_attention_forward.13} parent=5 // pred_fallthru
      _
    %p277 = scmp.le.s32.totalorder 1, %s14
    %p278 = scmp.lt.s32.totalorder %s14, 3
    %p279 = pnand %p277, %p278
    %p280 = pneg %p279
    // Predicated region
    $region37: #{cross_attention_forward.13} parent=5 // pred_check
      _
    $region38: #{cross_attention_forward.13} parent=5 // pred_check_branch
      %282 = sbr.rel (%p279) target = $region40
    $region39: #{cross_attention_forward.13} parent=5 // pred_region
      %s283 = ssub.s32 %s14, 1
      %p284 = scmp.lt.s32.totalorder %s23, 1
      %s285 = scalar_select %p284, %s23, 1
      %p286 = scmp.lt.s32.totalorder %s24, 0
      %s287 = scalar_select %p286, %s24, 0
      %s288 = sadd.s32 %s287, %s285
      %s289 = smul.addr %s288, 8
      %s290 = scalar_lea.vmem %s0, %s289
      %p291 = pneg %p54
      %p292 = pneg %p51
      %p293 = scmp.lt.s32.totalorder %s23, 1
      %s294 = scalar_select %p293, %s23, 1
      %p295 = scmp.lt.s32.totalorder %s24, 0
      %s296 = scalar_select %p295, %s24, 0
      %s297 = sadd.s32 %s296, %s294
      %s298 = smul.addr %s297, 8
      %s299 = scalar_lea.vmem %s1, %s298
      %p300 = pneg %p82
      %p301 = pneg %p79
      %p302 = pneg %p103
      %p303 = pneg %p100
      %p304 = pneg %p124
      %p305 = pneg %p121
      %p306 = pneg %p145
      %p307 = pneg %p142
      %p308 = pneg %p173
      %p309 = pneg %p170
      %p310 = scmp.lt.s32.totalorder %s23, 1
      %s311 = scalar_select %p310, %s23, 1
      %p312 = scmp.lt.s32.totalorder %s24, 0
      %s313 = scalar_select %p312, %s24, 0
      %s314 = sadd.s32 %s313, %s311
      %s315 = smul.addr %s314, 4
      %s316 = scalar_lea.vmem %s5, %s315
      %p317 = pneg %p201
      %p318 = pneg %p198
      %p319 = scmp.lt.s32.totalorder %s23, 1
      %s320 = scalar_select %p319, %s23, 1
      %p321 = scmp.lt.s32.totalorder %s24, 0
      %s322 = scalar_select %p321, %s24, 0
      %s323 = sadd.s32 %s322, %s320
      %s324 = smul.addr %s323, 4
      %s325 = scalar_lea.vmem %s6, %s324
      %p326 = pneg %p229
      %p327 = pneg %p226
      %p328 = scmp.lt.s32.totalorder %s23, 1
      %s329 = scalar_select %p328, %s23, 1
      %p330 = scmp.lt.s32.totalorder %s24, 0
      %s331 = scalar_select %p330, %s24, 0
      %s332 = sadd.s32 %s331, %s329
      %s333 = smul.addr %s332, 4
      %s334 = scalar_lea.vmem %s7, %s333
      %p335 = scmp.lt.s32.totalorder %s23, 1
      %s336 = scalar_select %p335, %s23, 1
      %p337 = scmp.lt.s32.totalorder %s24, 0
      %s338 = scalar_select %p337, %s24, 0
      %s339 = sadd.s32 %s338, %s336
      %s340 = smul.addr %s339, 8
      %s341 = scalar_lea.vmem %s0, %s340
      %p342 = scmp.lt.s32.totalorder %s23, 1
      %s343 = scalar_select %p342, %s23, 1
      %p344 = scmp.lt.s32.totalorder %s24, 0
      %s345 = scalar_select %p344, %s24, 0
      %s346 = sadd.s32 %s345, %s343
      %s347 = smul.addr %s346, 8
      %s348 = scalar_lea.vmem %s1, %s347
      %p349 = scmp.lt.s32.totalorder %s23, 1
      %s350 = scalar_select %p349, %s23, 1
      %p351 = scmp.lt.s32.totalorder %s24, 0
      %s352 = scalar_select %p351, %s24, 0
      %s353 = sadd.s32 %s352, %s350
      %s354 = smul.addr %s353, 4
      %s355 = scalar_lea.vmem %s5, %s354
      %p356 = scmp.lt.s32.totalorder %s23, 1
      %s357 = scalar_select %p356, %s23, 1
      %p358 = scmp.lt.s32.totalorder %s24, 0
      %s359 = scalar_select %p358, %s24, 0
      %s360 = sadd.s32 %s359, %s357
      %s361 = smul.addr %s360, 4
      %s362 = scalar_lea.vmem %s6, %s361
      %p363 = scmp.lt.s32.totalorder %s23, 1
      %s364 = scalar_select %p363, %s23, 1
      %p365 = scmp.lt.s32.totalorder %s24, 0
      %s366 = scalar_select %p365, %s24, 0
      %s367 = sadd.s32 %s366, %s364
      %s368 = smul.addr %s367, 4
      %s369 = scalar_lea.vmem %s7, %s368
      %v370 = vld [vmem:[%s341] sm:$0xff]
      %v371 = vld [vmem:[%s348] sm:$0xff]
      %v372 = vld [vmem:[%s2] sm:$0xff]
      %vm373 = vcmask 64512
      %v375 = vsel %vm373, %v372, 0
      %377 = vmatpush.msra.mxu0 0.0
      %378 = vmatpush.msra.mxu0 0.0
      %379 = vmatpush.msra.mxu0 0.0
      %380 = vmatpush.msra.mxu0 0.0
      %381 = vmatpush.msra.mxu0 0.0
      %382 = vmatpush.msra.mxu0 0.0
      %383 = vmatpush.msra.mxu0 0.0
      %384 = vmatpush.msra.mxu0 0.0
      %385 = vmatpush.msra.mxu0 0.0
      %386 = vmatpush.msra.mxu0 0.0
      %387 = vmatpush.msra.mxu0 0.0
      %388 = vmatpush.msra.mxu0 0.0
      %389 = vmatpush.msra.mxu0 0.0
      %390 = vmatpush.msra.mxu0 0.0
      %391 = vmatpush.msra.mxu0 0.0
      %392 = vmatpush.msra.mxu0 %v370
      %393 = vmatmul.f32.gmra.mxu0 %v375
      %v394 = vpop.f32.mrf.mxu0
      %v395 = vadd.f32 0.0, %v394
      %396 = vdwg.mxu0
      %v397 = vld [vmem:[%s3] sm:$0xff]
      %v399 = vsel %vm373, %v397, 0
      %401 = vmatpush.msra.mxu0 0.0
      %402 = vmatpush.msra.mxu0 0.0
      %403 = vmatpush.msra.mxu0 0.0
      %404 = vmatpush.msra.mxu0 0.0
      %405 = vmatpush.msra.mxu0 0.0
      %406 = vmatpush.msra.mxu0 0.0
      %407 = vmatpush.msra.mxu0 0.0
      %408 = vmatpush.msra.mxu0 0.0
      %409 = vmatpush.msra.mxu0 0.0
      %410 = vmatpush.msra.mxu0 0.0
      %411 = vmatpush.msra.mxu0 0.0
      %412 = vmatpush.msra.mxu0 0.0
      %413 = vmatpush.msra.mxu0 0.0
      %414 = vmatpush.msra.mxu0 0.0
      %415 = vmatpush.msra.mxu0 0.0
      %416 = vmatpush.msra.mxu0 %v370
      %417 = vmatmul.f32.gmra.mxu0 %v399
      %v418 = vpop.f32.mrf.mxu0
      %v419 = vadd.f32 0.0, %v418
      %420 = vdwg.mxu0
      %v421 = vld [vmem:[%s4] sm:$0xff]
      %v423 = vsel %vm373, %v421, 0
      %425 = vmatpush.msra.mxu0 0.0
      %426 = vmatpush.msra.mxu0 0.0
      %427 = vmatpush.msra.mxu0 0.0
      %428 = vmatpush.msra.mxu0 0.0
      %429 = vmatpush.msra.mxu0 0.0
      %430 = vmatpush.msra.mxu0 0.0
      %431 = vmatpush.msra.mxu0 0.0
      %432 = vmatpush.msra.mxu0 0.0
      %433 = vmatpush.msra.mxu0 0.0
      %434 = vmatpush.msra.mxu0 0.0
      %435 = vmatpush.msra.mxu0 0.0
      %436 = vmatpush.msra.mxu0 0.0
      %437 = vmatpush.msra.mxu0 0.0
      %438 = vmatpush.msra.mxu0 0.0
      %439 = vmatpush.msra.mxu0 0.0
      %440 = vmatpush.msra.mxu0 %v371
      %441 = vmatmul.f32.gmra.mxu0 %v423
      %v442 = vpop.f32.mrf.mxu0
      %v443 = vadd.f32 0.0, %v442
      %444 = vdwg.mxu0
      %v445 = vmul.f32 %v395, 0.35355338
      %v446 = vpack.c.bf16 %v445, %v445
      %447 = vst [vmem:[%s355] sm:$0xf] %v446
      %v448 = vpack.c.bf16 %v419, %v419
      %449 = vst [vmem:[%s362] sm:$0xf] %v448
      %v450 = vpack.c.bf16 %v443, %v443
      %451 = vst [vmem:[%s369] sm:$0xf] %v450
      %p452 = scmp.lt.s32.totalorder %s23, 1
      %s453 = scalar_select %p452, %s23, 1
      %p454 = scmp.lt.s32.totalorder %s24, 0
      %s455 = scalar_select %p454, %s24, 0
      %s456 = sadd.s32 %s455, %s453
      %s457 = smul.addr %s456, 4
      %s458 = scalar_lea.vmem %s5, %s457
      %p459 = scmp.lt.s32.totalorder %s23, 1
      %s460 = scalar_select %p459, %s23, 1
      %p461 = scmp.lt.s32.totalorder %s24, 0
      %s462 = scalar_select %p461, %s24, 0
      %s463 = sadd.s32 %s462, %s460
      %s464 = smul.addr %s463, 4
      %s465 = scalar_lea.vmem %s6, %s464
      %p466 = scmp.lt.s32.totalorder %s23, 1
      %s467 = scalar_select %p466, %s23, 1
      %p468 = scmp.lt.s32.totalorder %s24, 0
      %s469 = scalar_select %p468, %s24, 0
      %s470 = sadd.s32 %s469, %s467
      %s471 = smul.addr %s470, 4
      %s472 = scalar_lea.vmem %s7, %s471
      // Predicated region
      $region41: #{cross_attention_forward.13} parent=39 // pred_check
        %p473 = pneg %p170
      $region42: #{cross_attention_forward.13} parent=39 // pred_check_branch
        %475 = sbr.rel (%p473) target = $region44
      $region43: #{cross_attention_forward.13} parent=39 // pred_region
        _
      $region44: #{cross_attention_forward.13} parent=39 // pred_fallthru
        _
      // Predicated region
      $region45: #{cross_attention_forward.13} parent=39 // pred_check
        %p476 = pneg %p198
      $region46: #{cross_attention_forward.13} parent=39 // pred_check_branch
        %478 = sbr.rel (%p476) target = $region48
      $region47: #{cross_attention_forward.13} parent=39 // pred_region
        _
      $region48: #{cross_attention_forward.13} parent=39 // pred_fallthru
        _
      // Predicated region
      $region49: #{cross_attention_forward.13} parent=39 // pred_check
        %p479 = pneg %p226
      $region50: #{cross_attention_forward.13} parent=39 // pred_check_branch
        %481 = sbr.rel (%p479) target = $region52
      $region51: #{cross_attention_forward.13} parent=39 // pred_region
        _
      $region52: #{cross_attention_forward.13} parent=39 // pred_fallthru
        _
    $region40: #{cross_attention_forward.13} parent=5 // pred_fallthru
      _
    %p482 = scmp.le.s32.totalorder 2, %s14
    // Predicated region
    $region53: #{cross_attention_forward.13} parent=5 // pred_check
      %p483 = pneg %p482
    $region54: #{cross_attention_forward.13} parent=5 // pred_check_branch
      %485 = sbr.rel (%p483) target = $region56
    $region55: #{cross_attention_forward.13} parent=5 // pred_region
      %s486 = ssub.s32 %s14, 2
      // Predicated region
      $region57: #{cross_attention_forward.13} parent=55 // pred_check
        %p487 = pneg %p176
      $region58: #{cross_attention_forward.13} parent=55 // pred_check_branch
        %489 = sbr.rel (%p487) target = $region60
      $region59: #{cross_attention_forward.13} parent=55 // pred_region
        %p490 = scmp.lt.s32.totalorder %s25, 1
        %s491 = scalar_select %p490, %s25, 1
        %p492 = scmp.lt.s32.totalorder %s26, 0
        %s493 = scalar_select %p492, %s26, 0
        %s494 = sadd.s32 %s493, %s491
        %s495 = smul.addr %s494, 4
        %s496 = scalar_lea.vmem %s5, %s495
      $region60: #{cross_attention_forward.13} parent=55 // pred_fallthru
        _
      // Predicated region
      $region61: #{cross_attention_forward.13} parent=55 // pred_check
        %p497 = pneg %p204
      $region62: #{cross_attention_forward.13} parent=55 // pred_check_branch
        %499 = sbr.rel (%p497) target = $region64
      $region63: #{cross_attention_forward.13} parent=55 // pred_region
        %p500 = scmp.lt.s32.totalorder %s25, 1
        %s501 = scalar_select %p500, %s25, 1
        %p502 = scmp.lt.s32.totalorder %s26, 0
        %s503 = scalar_select %p502, %s26, 0
        %s504 = sadd.s32 %s503, %s501
        %s505 = smul.addr %s504, 4
        %s506 = scalar_lea.vmem %s6, %s505
      $region64: #{cross_attention_forward.13} parent=55 // pred_fallthru
        _
      // Predicated region
      $region65: #{cross_attention_forward.13} parent=55 // pred_check
        %p507 = pneg %p232
      $region66: #{cross_attention_forward.13} parent=55 // pred_check_branch
        %509 = sbr.rel (%p507) target = $region68
      $region67: #{cross_attention_forward.13} parent=55 // pred_region
        %p510 = scmp.lt.s32.totalorder %s25, 1
        %s511 = scalar_select %p510, %s25, 1
        %p512 = scmp.lt.s32.totalorder %s26, 0
        %s513 = scalar_select %p512, %s26, 0
        %s514 = sadd.s32 %s513, %s511
        %s515 = smul.addr %s514, 4
        %s516 = scalar_lea.vmem %s7, %s515
      $region68: #{cross_attention_forward.13} parent=55 // pred_fallthru
        _
    $region56: #{cross_attention_forward.13} parent=5 // pred_fallthru
      _
  $region6: #{cross_attention_forward.13} parent=0 // loop_footer
    %s18 = sadd.s32 1, %s14
  $region7: #{cross_attention_forward.13} parent=0 // loop_footer_branch
    %13 = sbr.rel target = $region3
  $region8: #{cross_attention_forward.13} parent=0 // loop_exit
    _

// kernel: cross_attention_forward.14
$region0: #{cross_attention_forward.14}
  #allocation0 [shape = 'u32[]', space=smem, size = 0x4, offset = 0x4, fixed_abs, tag = 'smem constant byte address 0x4 - core index']
  #allocation1 [shape = 'u32[72,128]{1,0:T(1,128)}', space=vmem, size = 0x9000, scoped, tag = 'internal scratch']
  #allocation2 [shape = 'f32[1,128]{1,0:T(1,128)}', space=vmem, size = 0x200, scoped, tag = 'scratch operand']
  #allocation3 [shape = 'f32[1,128]{1,0:T(1,128)}', space=vmem, size = 0x200, scoped, tag = 'scratch operand']
  #allocation4 [shape = 'f32[8,128]{1,0:T(8,128)}', space=vmem, size = 0x1000, scoped, tag = 'scratch operand']
  %s0 = inlined_call_operand.vmem [shape: bf16[2,8,128], index: 0, kind: input, shape index: {}]
  %s1 = inlined_call_operand.vmem [shape: bf16[2,8,128], index: 1, kind: input, shape index: {}]
  %s2 = inlined_call_operand.vmem [shape: bf16[2,8,128], index: 2, kind: input, shape index: {}]
  %s3 = inlined_call_operand.vmem [shape: f32[2,8,128], index: 3, kind: output, shape index: {}]
  %s4 = sld [smem:[#allocation0]]
  $region53: #{cross_attention_forward.14} parent=0
    _
  %s6 = ssub.s32 1, %s4
  %s7 = scalar_select 0, %s6, %s4
  loop: start=0, step=1, limit=4
  $region2: #{cross_attention_forward.14} parent=0 // loop_pre_header
    _
  $region3: #{cross_attention_forward.14} parent=0 // loop_header
    %s9 = sphi 0, %s13
    %p10 = scmp.ge.s32.totalorder %s9, 4
    %s16 = sphi 0, %s35
    %s17 = sphi 0, %s31
    %s18 = sphi 0, %s27
    %s19 = sphi 0, %s16
    %s20 = sphi 0, %s17
    %s21 = sphi 0, %s18
    %s22 = sphi 0, %s19
    %s23 = sphi 0, %s20
    %s24 = sphi 0, %s21
    %s40 = sphi 0, %s42
    %s43 = sphi 0, %s40
    %s44 = sphi 0, %s43
    %s60 = sphi 0, %s44
    %s68 = sphi 0, %s70
    %s71 = sphi 0, %s68
    %s72 = sphi 0, %s71
    %s88 = sphi 0, %s72
    %s96 = sphi 0, %s98
    %s99 = sphi 0, %s96
    %s100 = sphi 0, %s99
    %s116 = sphi 0, %s100
    %s124 = sphi 0, %s126
    %s127 = sphi 0, %s124
    %s128 = sphi 0, %s127
    %s144 = sphi 0, %s128
  $region4: #{cross_attention_forward.14} parent=0 // loop_header_branch
    %12 = sbr.rel (%p10) target = $region8
  $region5: #{cross_attention_forward.14} parent=0 // loop_body
    %s14 = ssub.s32 %s9, 1
    %s15 = ssub.s32 %s9, 2
    %s25 = sadd.s32 1, %s18
    %p26 = scmp.ge.s32.totalorder %s25, 1
    %s27 = scalar_select %p26, 0, %s25
    %s28 = sadd.s32 1, %s17
    %s29 = scalar_select %p26, %s28, %s17
    %p30 = scmp.ge.s32.totalorder %s29, 1
    %s31 = scalar_select %p30, 0, %s29
    %s32 = sadd.s32 1, %s16
    %s33 = scalar_select %p30, %s32, %s16
    %p34 = scmp.ge.s32.totalorder %s33, 2
    %s35 = scalar_select %p34, 0, %s33
    %s36 = ssub.s32 %s16, %s35
    %s37 = ssub.s32 %s17, %s31
    %s38 = sor.u32 %s36, %s37
    %p39 = scmp.eq.s32.totalorder %s38, 0
    %s41 = sadd.s32 %s40, 1
    %s42 = scalar_select %p39, %s40, %s41
    %p45 = pneg %p39
    %p46 = scmp.eq.s32.totalorder %s9, 1
    %p47 = por %p45, %p46
    %p48 = scmp.ne.s32.totalorder %s40, %s43
    %p49 = scmp.eq.s32.totalorder %s9, 0
    %p50 = por %p48, %p49
    %p51 = scmp.ne.s32.totalorder %s40, %s43
    %p52 = scmp.eq.s32.totalorder %s14, 1
    %p53 = por %p51, %p52
    %p54 = scmp.ne.s32.totalorder %s43, %s44
    %p55 = scmp.eq.s32.totalorder %s14, 0
    %p56 = por %p54, %p55
    %p57 = scmp.ne.s32.totalorder %s43, %s44
    %p58 = scmp.eq.s32.totalorder %s15, 1
    %p59 = por %p57, %p58
    %p61 = scmp.ne.s32.totalorder %s44, %s60
    %p62 = scmp.eq.s32.totalorder %s15, 0
    %p63 = por %p61, %p62
    %s64 = ssub.s32 %s16, %s35
    %s65 = ssub.s32 %s18, %s27
    %s66 = sor.u32 %s64, %s65
    %p67 = scmp.eq.s32.totalorder %s66, 0
    %s69 = sadd.s32 %s68, 1
    %s70 = scalar_select %p67, %s68, %s69
    %p73 = pneg %p67
    %p74 = scmp.eq.s32.totalorder %s9, 1
    %p75 = por %p73, %p74
    %p76 = scmp.ne.s32.totalorder %s68, %s71
    %p77 = scmp.eq.s32.totalorder %s9, 0
    %p78 = por %p76, %p77
    %p79 = scmp.ne.s32.totalorder %s68, %s71
    %p80 = scmp.eq.s32.totalorder %s14, 1
    %p81 = por %p79, %p80
    %p82 = scmp.ne.s32.totalorder %s71, %s72
    %p83 = scmp.eq.s32.totalorder %s14, 0
    %p84 = por %p82, %p83
    %p85 = scmp.ne.s32.totalorder %s71, %s72
    %p86 = scmp.eq.s32.totalorder %s15, 1
    %p87 = por %p85, %p86
    %p89 = scmp.ne.s32.totalorder %s72, %s88
    %p90 = scmp.eq.s32.totalorder %s15, 0
    %p91 = por %p89, %p90
    %s92 = ssub.s32 %s16, %s35
    %s93 = ssub.s32 %s18, %s27
    %s94 = sor.u32 %s92, %s93
    %p95 = scmp.eq.s32.totalorder %s94, 0
    %s97 = sadd.s32 %s96, 1
    %s98 = scalar_select %p95, %s96, %s97
    %p101 = pneg %p95
    %p102 = scmp.eq.s32.totalorder %s9, 1
    %p103 = por %p101, %p102
    %p104 = scmp.ne.s32.totalorder %s96, %s99
    %p105 = scmp.eq.s32.totalorder %s9, 0
    %p106 = por %p104, %p105
    %p107 = scmp.ne.s32.totalorder %s96, %s99
    %p108 = scmp.eq.s32.totalorder %s14, 1
    %p109 = por %p107, %p108
    %p110 = scmp.ne.s32.totalorder %s99, %s100
    %p111 = scmp.eq.s32.totalorder %s14, 0
    %p112 = por %p110, %p111
    %p113 = scmp.ne.s32.totalorder %s99, %s100
    %p114 = scmp.eq.s32.totalorder %s15, 1
    %p115 = por %p113, %p114
    %p117 = scmp.ne.s32.totalorder %s100, %s116
    %p118 = scmp.eq.s32.totalorder %s15, 0
    %p119 = por %p117, %p118
    %s120 = ssub.s32 %s16, %s35
    %s121 = ssub.s32 %s17, %s31
    %s122 = sor.u32 %s120, %s121
    %p123 = scmp.eq.s32.totalorder %s122, 0
    %s125 = sadd.s32 %s124, 1
    %s126 = scalar_select %p123, %s124, %s125
    %p129 = pneg %p123
    %p130 = scmp.eq.s32.totalorder %s9, 1
    %p131 = por %p129, %p130
    %p132 = scmp.ne.s32.totalorder %s124, %s127
    %p133 = scmp.eq.s32.totalorder %s9, 0
    %p134 = por %p132, %p133
    %p135 = scmp.ne.s32.totalorder %s124, %s127
    %p136 = scmp.eq.s32.totalorder %s14, 1
    %p137 = por %p135, %p136
    %p138 = scmp.ne.s32.totalorder %s127, %s128
    %p139 = scmp.eq.s32.totalorder %s14, 0
    %p140 = por %p138, %p139
    %p141 = scmp.ne.s32.totalorder %s127, %s128
    %p142 = scmp.eq.s32.totalorder %s15, 1
    %p143 = por %p141, %p142
    %p145 = scmp.ne.s32.totalorder %s128, %s144
    %p146 = scmp.eq.s32.totalorder %s15, 0
    %p147 = por %p145, %p146
    %p148 = scmp.le.s32.totalorder 1, %s9
    %p149 = scmp.lt.s32.totalorder %s9, 3
    %p150 = pnand %p148, %p149
    %p151 = pneg %p150
    // Predicated region
    $region9: #{cross_attention_forward.14} parent=5 // pred_check
      _
    $region10: #{cross_attention_forward.14} parent=5 // pred_check_branch
      %153 = sbr.rel (%p150) target = $region12
    $region11: #{cross_attention_forward.14} parent=5 // pred_region
      %s154 = ssub.s32 %s9, 1
    $region12: #{cross_attention_forward.14} parent=5 // pred_fallthru
      _
    %p155 = scmp.lt.s32.totalorder %s9, 2
    // Predicated region
    $region13: #{cross_attention_forward.14} parent=5 // pred_check
      %p156 = pneg %p155
    $region14: #{cross_attention_forward.14} parent=5 // pred_check_branch
      %158 = sbr.rel (%p156) target = $region16
    $region15: #{cross_attention_forward.14} parent=5 // pred_region
      // Predicated region
      $region17: #{cross_attention_forward.14} parent=15 // pred_check
        %p159 = pneg %p50
      $region18: #{cross_attention_forward.14} parent=15 // pred_check_branch
        %161 = sbr.rel (%p159) target = $region20
      $region19: #{cross_attention_forward.14} parent=15 // pred_region
        %p162 = scmp.lt.s32.totalorder %s16, 1
        %s163 = scalar_select %p162, %s16, 1
        %p164 = scmp.lt.s32.totalorder %s17, 0
        %s165 = scalar_select %p164, %s17, 0
        %s166 = sadd.s32 %s165, %s163
        %s167 = smul.addr %s166, 4
        %s168 = scalar_lea.vmem %s0, %s167
      $region20: #{cross_attention_forward.14} parent=15 // pred_fallthru
        _
      // Predicated region
      $region21: #{cross_attention_forward.14} parent=15 // pred_check
        %p169 = pneg %p78
      $region22: #{cross_attention_forward.14} parent=15 // pred_check_branch
        %171 = sbr.rel (%p169) target = $region24
      $region23: #{cross_attention_forward.14} parent=15 // pred_region
        %p172 = scmp.lt.s32.totalorder %s16, 1
        %s173 = scalar_select %p172, %s16, 1
        %p174 = scmp.lt.s32.totalorder %s18, 0
        %s175 = scalar_select %p174, %s18, 0
        %s176 = sadd.s32 %s175, %s173
        %s177 = smul.addr %s176, 4
        %s178 = scalar_lea.vmem %s1, %s177
      $region24: #{cross_attention_forward.14} parent=15 // pred_fallthru
        _
      // Predicated region
      $region25: #{cross_attention_forward.14} parent=15 // pred_check
        %p179 = pneg %p106
      $region26: #{cross_attention_forward.14} parent=15 // pred_check_branch
        %181 = sbr.rel (%p179) target = $region28
      $region27: #{cross_attention_forward.14} parent=15 // pred_region
        %p182 = scmp.lt.s32.totalorder %s16, 1
        %s183 = scalar_select %p182, %s16, 1
        %p184 = scmp.lt.s32.totalorder %s18, 0
        %s185 = scalar_select %p184, %s18, 0
        %s186 = sadd.s32 %s185, %s183
        %s187 = smul.addr %s186, 4
        %s188 = scalar_lea.vmem %s2, %s187
      $region28: #{cross_attention_forward.14} parent=15 // pred_fallthru
        _
    $region16: #{cross_attention_forward.14} parent=5 // pred_fallthru
      _
    %p189 = scmp.le.s32.totalorder 1, %s9
    %p190 = scmp.lt.s32.totalorder %s9, 3
    %p191 = pnand %p189, %p190
    %p192 = pneg %p191
    // Predicated region
    $region29: #{cross_attention_forward.14} parent=5 // pred_check
      _
    $region30: #{cross_attention_forward.14} parent=5 // pred_check_branch
      %194 = sbr.rel (%p191) target = $region32
    $region31: #{cross_attention_forward.14} parent=5 // pred_region
      %s195 = ssub.s32 %s9, 1
      %p196 = scmp.lt.s32.totalorder %s19, 1
      %s197 = scalar_select %p196, %s19, 1
      %p198 = scmp.lt.s32.totalorder %s20, 0
      %s199 = scalar_select %p198, %s20, 0
      %s200 = sadd.s32 %s199, %s197
      %s201 = smul.addr %s200, 4
      %s202 = scalar_lea.vmem %s0, %s201
      %p203 = pneg %p56
      %p204 = pneg %p53
      %p205 = scmp.lt.s32.totalorder %s19, 1
      %s206 = scalar_select %p205, %s19, 1
      %p207 = scmp.lt.s32.totalorder %s21, 0
      %s208 = scalar_select %p207, %s21, 0
      %s209 = sadd.s32 %s208, %s206
      %s210 = smul.addr %s209, 4
      %s211 = scalar_lea.vmem %s1, %s210
      %p212 = pneg %p84
      %p213 = pneg %p81
      %p214 = scmp.lt.s32.totalorder %s19, 1
      %s215 = scalar_select %p214, %s19, 1
      %p216 = scmp.lt.s32.totalorder %s21, 0
      %s217 = scalar_select %p216, %s21, 0
      %s218 = sadd.s32 %s217, %s215
      %s219 = smul.addr %s218, 4
      %s220 = scalar_lea.vmem %s2, %s219
      %p221 = pneg %p112
      %p222 = pneg %p109
      %p223 = pneg %p140
      %p224 = pneg %p137
      %p225 = scmp.lt.s32.totalorder %s19, 1
      %s226 = scalar_select %p225, %s19, 1
      %p227 = scmp.lt.s32.totalorder %s20, 0
      %s228 = scalar_select %p227, %s20, 0
      %s229 = sadd.s32 %s228, %s226
      %s230 = smul.addr %s229, 8
      %s231 = scalar_lea.vmem %s3, %s230
      %p232 = scmp.lt.s32.totalorder %s19, 1
      %s233 = scalar_select %p232, %s19, 1
      %p234 = scmp.lt.s32.totalorder %s20, 0
      %s235 = scalar_select %p234, %s20, 0
      %s236 = sadd.s32 %s235, %s233
      %s237 = smul.addr %s236, 4
      %s238 = scalar_lea.vmem %s0, %s237
      %p239 = scmp.lt.s32.totalorder %s19, 1
      %s240 = scalar_select %p239, %s19, 1
      %p241 = scmp.lt.s32.totalorder %s21, 0
      %s242 = scalar_select %p241, %s21, 0
      %s243 = sadd.s32 %s242, %s240
      %s244 = smul.addr %s243, 4
      %s245 = scalar_lea.vmem %s1, %s244
      %p246 = scmp.lt.s32.totalorder %s19, 1
      %s247 = scalar_select %p246, %s19, 1
      %p248 = scmp.lt.s32.totalorder %s21, 0
      %s249 = scalar_select %p248, %s21, 0
      %s250 = sadd.s32 %s249, %s247
      %s251 = smul.addr %s250, 4
      %s252 = scalar_lea.vmem %s2, %s251
      %p253 = scmp.lt.s32.totalorder %s19, 1
      %s254 = scalar_select %p253, %s19, 1
      %p255 = scmp.lt.s32.totalorder %s20, 0
      %s256 = scalar_select %p255, %s20, 0
      %s257 = sadd.s32 %s256, %s254
      %s258 = smul.addr %s257, 8
      %s259 = scalar_lea.vmem %s3, %s258
      %p261 = scmp.eq.s32.totalorder %s21, 0
      // Predicated region
      $region33: #{cross_attention_forward.14} parent=31 // pred_check
        %p262 = pneg %p261
      $region34: #{cross_attention_forward.14} parent=31 // pred_check_branch
        %264 = sbr.rel (%p262) target = $region36
      $region35: #{cross_attention_forward.14} parent=31 // pred_region
        %265 = vst [vmem:[#allocation2] sm:$0x1] -inf
        %266 = vst [vmem:[#allocation3] sm:$0x1] 0.0
        %267 = vst [vmem:[#allocation4] sm:$0xff] 0.0
      $region36: #{cross_attention_forward.14} parent=31 // pred_fallthru
        _
      %v268 = vld [vmem:[%s238] sm:$0xf]
      %v269 = vld [vmem:[%s245] sm:$0xf]
      %v270 = vld [vmem:[%s252] sm:$0xf]
      %271 = vxpose.xlu0.c.b16.start [1/8] %v269, 128
      %272 = vxpose.xlu0.c.b16.cont [2/8] 0, 128
      %273 = vxpose.xlu0.c.b16.cont [3/8] 0, 128
      %274 = vxpose.xlu0.c.b16.cont [4/8] 0, 128
      %275 = vxpose.xlu0.c.b16.cont [5/8] 0, 128
      %276 = vxpose.xlu0.c.b16.cont [6/8] 0, 128
      %277 = vxpose.xlu0.c.b16.cont [7/8] 0, 128
      %278 = vxpose.xlu0.c.b16.end [8/8] 0, 128
      %v279 = vpop.trf.xlu0
      %v280 = vpop.trf.xlu0
      %v281 = vpop.trf.xlu0
      %v282 = vpop.trf.xlu0
      %v283 = vpop.trf.xlu0
      %v284 = vpop.trf.xlu0
      %v285 = vpop.trf.xlu0
      %v286 = vpop.trf.xlu0
      %vm287 = vcmask 64512
      %v289 = vsel %vm287, %v279, 0
      %v292 = vsel %vm287, %v280, 0
      %v295 = vsel %vm287, %v281, 0
      %v298 = vsel %vm287, %v282, 0
      %v301 = vsel %vm287, %v283, 0
      %v304 = vsel %vm287, %v284, 0
      %v307 = vsel %vm287, %v285, 0
      %v310 = vsel %vm287, %v286, 0
      %vm312 = vcmask 1043456
      %v314 = vsel %vm312, %v268, 0
      %316 = vmatpush.bf16.msra.mxu0 0
      %317 = vmatpush.bf16.msra.mxu0 0
      %318 = vmatpush.bf16.msra.mxu0 0
      %319 = vmatpush.bf16.msra.mxu0 0
      %320 = vmatpush.bf16.msra.mxu0 0
      %321 = vmatpush.bf16.msra.mxu0 0
      %322 = vmatpush.bf16.msra.mxu0 0
      %323 = vmatpush.bf16.msra.mxu0 %v314
      %324 = vmatmul.bf16.gmra.mxu0 %v289
      %v325 = vpop.f32.mrf.mxu0
      %v326 = vadd.f32 0.0, %v325
      %v327 = vpop.f32.mrf.mxu0
      %v328 = vadd.f32 0.0, %v327
      %329 = vmatmul.bf16.gmra.mxu0 %v292
      %v330 = vpop.f32.mrf.mxu0
      %v331 = vadd.f32 0.0, %v330
      %v332 = vpop.f32.mrf.mxu0
      %v333 = vadd.f32 0.0, %v332
      %334 = vmatmul.bf16.gmra.mxu0 %v295
      %v335 = vpop.f32.mrf.mxu0
      %v336 = vadd.f32 0.0, %v335
      %v337 = vpop.f32.mrf.mxu0
      %v338 = vadd.f32 0.0, %v337
      %339 = vmatmul.bf16.gmra.mxu0 %v298
      %v340 = vpop.f32.mrf.mxu0
      %v341 = vadd.f32 0.0, %v340
      %v342 = vpop.f32.mrf.mxu0
      %v343 = vadd.f32 0.0, %v342
      %344 = vmatmul.bf16.gmra.mxu0 %v301
      %v345 = vpop.f32.mrf.mxu0
      %v346 = vadd.f32 0.0, %v345
      %v347 = vpop.f32.mrf.mxu0
      %v348 = vadd.f32 0.0, %v347
      %349 = vmatmul.bf16.gmra.mxu0 %v304
      %v350 = vpop.f32.mrf.mxu0
      %v351 = vadd.f32 0.0, %v350
      %v352 = vpop.f32.mrf.mxu0
      %v353 = vadd.f32 0.0, %v352
      %354 = vmatmul.bf16.gmra.mxu0 %v307
      %v355 = vpop.f32.mrf.mxu0
      %v356 = vadd.f32 0.0, %v355
      %v357 = vpop.f32.mrf.mxu0
      %v358 = vadd.f32 0.0, %v357
      %359 = vmatmul.bf16.gmra.mxu0 %v310
      %v360 = vpop.f32.mrf.mxu0
      %v361 = vadd.f32 0.0, %v360
      %v362 = vpop.f32.mrf.mxu0
      %v363 = vadd.f32 0.0, %v362
      %364 = vdwg.mxu0
      %s365 = smul.u32 %s21, 128
      %v366 = vlaneseq
      %v367 = vshrl.u32 %v366, 7
      %v368 = vadd.s32 %v367, 8
      %v369 = vadd.s32 %v367, 16
      %v370 = vadd.s32 %v367, 24
      %v371 = vadd.s32 %v367, 32
      %v372 = vadd.s32 %v367, 40
      %v373 = vadd.s32 %v367, 48
      %v374 = vadd.s32 %v367, 56
      %v375 = vadd.s32 %v367, 64
      %v376 = vadd.s32 %v367, 72
      %v377 = vadd.s32 %v367, 80
      %v378 = vadd.s32 %v367, 88
      %v379 = vadd.s32 %v367, 96
      %v380 = vadd.s32 %v367, 104
      %v381 = vadd.s32 %v367, 112
      %v382 = vadd.s32 %v367, 120
      %v383 = vstv %s365
      %v384 = vadd.s32 %v383, %v367
      %v385 = vadd.s32 %v383, %v368
      %v386 = vadd.s32 %v383, %v369
      %v387 = vadd.s32 %v383, %v370
      %v388 = vadd.s32 %v383, %v371
      %v389 = vadd.s32 %v383, %v372
      %v390 = vadd.s32 %v383, %v373
      %v391 = vadd.s32 %v383, %v374
      %v392 = vadd.s32 %v383, %v375
      %v393 = vadd.s32 %v383, %v376
      %v394 = vadd.s32 %v383, %v377
      %v395 = vadd.s32 %v383, %v378
      %v396 = vadd.s32 %v383, %v379
      %v397 = vadd.s32 %v383, %v380
      %v398 = vadd.s32 %v383, %v381
      %v399 = vadd.s32 %v383, %v382
      %vm400 = vcmp.lt.s32.totalorder %v384, 64
      %vm401 = vcmp.lt.s32.totalorder %v385, 64
      %vm402 = vcmp.lt.s32.totalorder %v386, 64
      %vm403 = vcmp.lt.s32.totalorder %v387, 64
      %vm404 = vcmp.lt.s32.totalorder %v388, 64
      %vm405 = vcmp.lt.s32.totalorder %v389, 64
      %vm406 = vcmp.lt.s32.totalorder %v390, 64
      %vm407 = vcmp.lt.s32.totalorder %v391, 64
      %vm408 = vcmp.lt.s32.totalorder %v392, 64
      %vm409 = vcmp.lt.s32.totalorder %v393, 64
      %vm410 = vcmp.lt.s32.totalorder %v394, 64
      %vm411 = vcmp.lt.s32.totalorder %v395, 64
      %vm412 = vcmp.lt.s32.totalorder %v396, 64
      %vm413 = vcmp.lt.s32.totalorder %v397, 64
      %vm414 = vcmp.lt.s32.totalorder %v398, 64
      %vm415 = vcmp.lt.s32.totalorder %v399, 64
      %v416 = vsel %vm400, 1, 0
      %v417 = vsel %vm401, 1, 0
      %v418 = vsel %vm402, 1, 0
      %v419 = vsel %vm403, 1, 0
      %v420 = vsel %vm404, 1, 0
      %v421 = vsel %vm405, 1, 0
      %v422 = vsel %vm406, 1, 0
      %v423 = vsel %vm407, 1, 0
      %v424 = vsel %vm408, 1, 0
      %v425 = vsel %vm409, 1, 0
      %v426 = vsel %vm410, 1, 0
      %v427 = vsel %vm411, 1, 0
      %v428 = vsel %vm412, 1, 0
      %v429 = vsel %vm413, 1, 0
      %v430 = vsel %vm414, 1, 0
      %v431 = vsel %vm415, 1, 0
      %vm432 = vcmp.eq.s32.totalorder %v416, 1
      %vm433 = vcmp.eq.s32.totalorder %v417, 1
      %vm434 = vcmp.eq.s32.totalorder %v418, 1
      %vm435 = vcmp.eq.s32.totalorder %v419, 1
      %vm436 = vcmp.eq.s32.totalorder %v420, 1
      %vm437 = vcmp.eq.s32.totalorder %v421, 1
      %vm438 = vcmp.eq.s32.totalorder %v422, 1
      %vm439 = vcmp.eq.s32.totalorder %v423, 1
      %vm440 = vcmp.eq.s32.totalorder %v424, 1
      %vm441 = vcmp.eq.s32.totalorder %v425, 1
      %vm442 = vcmp.eq.s32.totalorder %v426, 1
      %vm443 = vcmp.eq.s32.totalorder %v427, 1
      %vm444 = vcmp.eq.s32.totalorder %v428, 1
      %vm445 = vcmp.eq.s32.totalorder %v429, 1
      %vm446 = vcmp.eq.s32.totalorder %v430, 1
      %vm447 = vcmp.eq.s32.totalorder %v431, 1
      %v448 = vsel %vm432, %v326, -inf
      %v449 = vsel %vm433, %v328, -inf
      %v450 = vsel %vm434, %v331, -inf
      %v451 = vsel %vm435, %v333, -inf
      %v452 = vsel %vm436, %v336, -inf
      %v453 = vsel %vm437, %v338, -inf
      %v454 = vsel %vm438, %v341, -inf
      %v455 = vsel %vm439, %v343, -inf
      %v456 = vsel %vm440, %v346, -inf
      %v457 = vsel %vm441, %v348, -inf
      %v458 = vsel %vm442, %v351, -inf
      %v459 = vsel %vm443, %v353, -inf
      %v460 = vsel %vm444, %v356, -inf
      %v461 = vsel %vm445, %v358, -inf
      %v462 = vsel %vm446, %v361, -inf
      %v463 = vsel %vm447, %v363, -inf
      %v464 = vld [vmem:[#allocation2] sm:$0x1]
      %v465 = vmax.f32 %v448, %v452
      %v466 = vmax.f32 %v449, %v453
      %v467 = vmax.f32 %v450, %v454
      %v468 = vmax.f32 %v451, %v455
      %v469 = vmax.f32 %v465, %v456
      %v470 = vmax.f32 %v466, %v457
      %v471 = vmax.f32 %v467, %v458
      %v472 = vmax.f32 %v468, %v459
      %v473 = vmax.f32 %v469, %v460
      %v474 = vmax.f32 %v470, %v461
      %v475 = vmax.f32 %v471, %v462
      %v476 = vmax.f32 %v472, %v463
      %v477 = vmax.f32 %v473, %v474
      %v478 = vmax.f32 %v475, %v476
      %v479 = vmax.f32 %v477, %v478
      %v480 = vrot.slane %v479, 4
      %v481 = vmax.f32 %v479, %v480
      %v482 = vrot.slane %v481, 2
      %v483 = vmax.f32 %v481, %v482
      %v484 = vrot.slane %v483, 1
      %v485 = vmax.f32 %v483, %v484
      %v486 = vmax.f32 %v464, %v485
      %v487 = vsub.f32 %v464, %v486
      %v488 = vmul.f32 %v487, 1.442695
      %v489 = vpow.pop %v488
      %v491 = vperm.slane %v486, 0
      %v493 = vsub.f32 %v448, %v491
      %v494 = vsub.f32 %v449, %v491
      %v495 = vsub.f32 %v450, %v491
      %v496 = vsub.f32 %v451, %v491
      %v497 = vsub.f32 %v452, %v491
      %v498 = vsub.f32 %v453, %v491
      %v499 = vsub.f32 %v454, %v491
      %v500 = vsub.f32 %v455, %v491
      %v501 = vsub.f32 %v456, %v491
      %v502 = vsub.f32 %v457, %v491
      %v503 = vsub.f32 %v458, %v491
      %v504 = vsub.f32 %v459, %v491
      %v505 = vsub.f32 %v460, %v491
      %v506 = vsub.f32 %v461, %v491
      %v507 = vsub.f32 %v462, %v491
      %v508 = vsub.f32 %v463, %v491
      %v509 = vmul.f32 %v493, 1.442695
      %v510 = vpow.pop %v509
      %v511 = vmul.f32 %v494, 1.442695
      %v512 = vpow.pop %v511
      %v513 = vmul.f32 %v495, 1.442695
      %v514 = vpow.pop %v513
      %v515 = vmul.f32 %v496, 1.442695
      %v516 = vpow.pop %v515
      %v517 = vmul.f32 %v497, 1.442695
      %v518 = vpow.pop %v517
      %v519 = vmul.f32 %v498, 1.442695
      %v520 = vpow.pop %v519
      %v521 = vmul.f32 %v499, 1.442695
      %v522 = vpow.pop %v521
      %v523 = vmul.f32 %v500, 1.442695
      %v524 = vpow.pop %v523
      %v525 = vmul.f32 %v501, 1.442695
      %v526 = vpow.pop %v525
      %v527 = vmul.f32 %v502, 1.442695
      %v528 = vpow.pop %v527
      %v529 = vmul.f32 %v503, 1.442695
      %v530 = vpow.pop %v529
      %v531 = vmul.f32 %v504, 1.442695
      %v532 = vpow.pop %v531
      %v533 = vmul.f32 %v505, 1.442695
      %v534 = vpow.pop %v533
      %v535 = vmul.f32 %v506, 1.442695
      %v536 = vpow.pop %v535
      %v537 = vmul.f32 %v507, 1.442695
      %v538 = vpow.pop %v537
      %v539 = vmul.f32 %v508, 1.442695
      %v540 = vpow.pop %v539
      %v541 = vld [vmem:[#allocation3] sm:$0x1]
      %v542 = vmul.f32 %v489, %v541
      %v543 = vadd.f32 %v510, %v512
      %v544 = vadd.f32 %v543, %v514
      %v545 = vadd.f32 %v544, %v516
      %v546 = vadd.f32 %v545, %v518
      %v547 = vadd.f32 %v546, %v520
      %v548 = vadd.f32 %v547, %v522
      %v549 = vadd.f32 %v548, %v524
      %v550 = vadd.f32 %v549, %v526
      %v551 = vadd.f32 %v550, %v528
      %v552 = vadd.f32 %v551, %v530
      %v553 = vadd.f32 %v552, %v532
      %v554 = vadd.f32 %v553, %v534
      %v555 = vadd.f32 %v554, %v536
      %v556 = vadd.f32 %v555, %v538
      %v557 = vadd.f32 %v556, %v540
      %v558 = vrot.slane %v557, 4
      %v559 = vadd.f32 %v557, %v558
      %v560 = vrot.slane %v559, 2
      %v561 = vadd.f32 %v559, %v560
      %v562 = vrot.slane %v561, 1
      %v563 = vadd.f32 %v561, %v562
      %v564 = vadd.f32 %v542, %v563
      %565 = vst [vmem:[#allocation3] sm:$0x1] %v564
      %v566 = vld [vmem:[#allocation4] sm:$0xff]
      %v568 = vperm.slane %v489, 0
      %v570 = vmul.f32 %v568, %v566
      %v571 = vpack.c.bf16 %v512, %v510
      %v572 = vpack.c.bf16 %v516, %v514
      %v573 = vpack.c.bf16 %v520, %v518
      %v574 = vpack.c.bf16 %v524, %v522
      %v575 = vpack.c.bf16 %v528, %v526
      %v576 = vpack.c.bf16 %v532, %v530
      %v577 = vpack.c.bf16 %v536, %v534
      %v578 = vpack.c.bf16 %v540, %v538
      %579 = vmatpush.bf16.msra.mxu0 %v578
      %580 = vmatpush.bf16.msra.mxu0 %v577
      %581 = vmatpush.bf16.msra.mxu0 %v576
      %582 = vmatpush.bf16.msra.mxu0 %v575
      %583 = vmatpush.bf16.msra.mxu0 %v574
      %584 = vmatpush.bf16.msra.mxu0 %v573
      %585 = vmatpush.bf16.msra.mxu0 %v572
      %586 = vmatpush.bf16.msra.mxu0 %v571
      %587 = vmatmul.bf16.gmra.mxu0 %v270
      %v588 = vpop.f32.mrf.mxu0
      %v589 = vadd.f32 0.0, %v588
      %v590 = vpop.f32.mrf.mxu0
      %591 = vdwg.mxu0
      %v592 = vadd.f32 %v570, %v589
      %593 = vst [vmem:[#allocation4] sm:$0xff] %v592
      %594 = vst [vmem:[#allocation2] sm:$0x1] %v486
      // Predicated region
      $region37: #{cross_attention_forward.14} parent=31 // pred_check
        %p595 = pneg %p261
      $region38: #{cross_attention_forward.14} parent=31 // pred_check_branch
        %597 = sbr.rel (%p595) target = $region40
      $region39: #{cross_attention_forward.14} parent=31 // pred_region
        %v598 = vld [vmem:[#allocation3] sm:$0x1]
        %v599 = vrcp.pop %v598
        %v600 = vld [vmem:[#allocation4] sm:$0xff]
        %v602 = vperm.slane %v599, 0
        %v604 = vmul.f32 %v600, %v602
        %605 = vst [vmem:[%s259] sm:$0xff] %v604
      $region40: #{cross_attention_forward.14} parent=31 // pred_fallthru
        _
      %p606 = scmp.lt.s32.totalorder %s19, 1
      %s607 = scalar_select %p606, %s19, 1
      %p608 = scmp.lt.s32.totalorder %s20, 0
      %s609 = scalar_select %p608, %s20, 0
      %s610 = sadd.s32 %s609, %s607
      %s611 = smul.addr %s610, 8
      %s612 = scalar_lea.vmem %s3, %s611
      // Predicated region
      $region41: #{cross_attention_forward.14} parent=31 // pred_check
        %p613 = pneg %p137
      $region42: #{cross_attention_forward.14} parent=31 // pred_check_branch
        %615 = sbr.rel (%p613) target = $region44
      $region43: #{cross_attention_forward.14} parent=31 // pred_region
        _
      $region44: #{cross_attention_forward.14} parent=31 // pred_fallthru
        _
    $region32: #{cross_attention_forward.14} parent=5 // pred_fallthru
      _
    %p616 = scmp.le.s32.totalorder 2, %s9
    // Predicated region
    $region45: #{cross_attention_forward.14} parent=5 // pred_check
      %p617 = pneg %p616
    $region46: #{cross_attention_forward.14} parent=5 // pred_check_branch
      %619 = sbr.rel (%p617) target = $region48
    $region47: #{cross_attention_forward.14} parent=5 // pred_region
      %s620 = ssub.s32 %s9, 2
      // Predicated region
      $region49: #{cross_attention_forward.14} parent=47 // pred_check
        %p621 = pneg %p143
      $region50: #{cross_attention_forward.14} parent=47 // pred_check_branch
        %623 = sbr.rel (%p621) target = $region52
      $region51: #{cross_attention_forward.14} parent=47 // pred_region
        %p624 = scmp.lt.s32.totalorder %s22, 1
        %s625 = scalar_select %p624, %s22, 1
        %p626 = scmp.lt.s32.totalorder %s23, 0
        %s627 = scalar_select %p626, %s23, 0
        %s628 = sadd.s32 %s627, %s625
        %s629 = smul.addr %s628, 8
        %s630 = scalar_lea.vmem %s3, %s629
      $region52: #{cross_attention_forward.14} parent=47 // pred_fallthru
        _
    $region48: #{cross_attention_forward.14} parent=5 // pred_fallthru
      _
  $region6: #{cross_attention_forward.14} parent=0 // loop_footer
    %s13 = sadd.s32 1, %s9
  $region7: #{cross_attention_forward.14} parent=0 // loop_footer_branch
    %8 = sbr.rel target = $region3
  $region8: #{cross_attention_forward.14} parent=0 // loop_exit
    _

// kernel: cross_attention_forward.15
$region0: #{cross_attention_forward.15}
  #allocation0 [shape = 'u32[]', space=smem, size = 0x4, offset = 0x4, fixed_abs, tag = 'smem constant byte address 0x4 - core index']
  #allocation1 [shape = 'u32[72,128]{1,0:T(1,128)}', space=vmem, size = 0x9000, scoped, tag = 'internal scratch']
  %s0 = inlined_call_operand.vmem [shape: f32[2,8,512], index: 0, kind: input, shape index: {}]
  %s1 = inlined_call_operand.vmem [shape: f32[8,8], index: 1, kind: input, shape index: {}]
  %s2 = inlined_call_operand.vmem [shape: f32[2,8,1], index: 2, kind: output, shape index: {0}]
  %s3 = inlined_call_operand.vmem [shape: f32[2,8,1], index: 3, kind: output, shape index: {1}]
  %4 = xla_tuple %s2, %s3
  %s5 = sld [smem:[#allocation0]]
  $region53: #{cross_attention_forward.15} parent=0
    _
  %s7 = ssub.s32 1, %s5
  %s8 = scalar_select 0, %s7, %s5
  loop: start=0, step=1, limit=4
  $region2: #{cross_attention_forward.15} parent=0 // loop_pre_header
    _
  $region3: #{cross_attention_forward.15} parent=0 // loop_header
    %s10 = sphi 0, %s14
    %p11 = scmp.ge.s32.totalorder %s10, 4
    %s17 = sphi 0, %s29
    %s18 = sphi 0, %s25
    %s19 = sphi 0, %s17
    %s20 = sphi 0, %s18
    %s21 = sphi 0, %s19
    %s22 = sphi 0, %s20
    %s34 = sphi 0, %s36
    %s37 = sphi 0, %s34
    %s38 = sphi 0, %s37
    %s54 = sphi 0, %s38
    %s58 = sphi 0, %s58
    %s60 = sphi 0, %s58
    %s61 = sphi 0, %s60
    %s75 = sphi 0, %s61
    %s81 = sphi 0, %s83
    %s84 = sphi 0, %s81
    %s85 = sphi 0, %s84
    %s101 = sphi 0, %s85
    %s107 = sphi 0, %s109
    %s110 = sphi 0, %s107
    %s111 = sphi 0, %s110
    %s127 = sphi 0, %s111
  $region4: #{cross_attention_forward.15} parent=0 // loop_header_branch
    %13 = sbr.rel (%p11) target = $region8
  $region5: #{cross_attention_forward.15} parent=0 // loop_body
    %s15 = ssub.s32 %s10, 1
    %s16 = ssub.s32 %s10, 2
    %s23 = sadd.s32 1, %s18
    %p24 = scmp.ge.s32.totalorder %s23, 1
    %s25 = scalar_select %p24, 0, %s23
    %s26 = sadd.s32 1, %s17
    %s27 = scalar_select %p24, %s26, %s17
    %p28 = scmp.ge.s32.totalorder %s27, 2
    %s29 = scalar_select %p28, 0, %s27
    %s30 = ssub.s32 %s17, %s29
    %s31 = ssub.s32 %s18, %s25
    %s32 = sor.u32 %s30, %s31
    %p33 = scmp.eq.s32.totalorder %s32, 0
    %s35 = sadd.s32 %s34, 1
    %s36 = scalar_select %p33, %s34, %s35
    %p39 = pneg %p33
    %p40 = scmp.eq.s32.totalorder %s10, 1
    %p41 = por %p39, %p40
    %p42 = scmp.ne.s32.totalorder %s34, %s37
    %p43 = scmp.eq.s32.totalorder %s10, 0
    %p44 = por %p42, %p43
    %p45 = scmp.ne.s32.totalorder %s34, %s37
    %p46 = scmp.eq.s32.totalorder %s15, 1
    %p47 = por %p45, %p46
    %p48 = scmp.ne.s32.totalorder %s37, %s38
    %p49 = scmp.eq.s32.totalorder %s15, 0
    %p50 = por %p48, %p49
    %p51 = scmp.ne.s32.totalorder %s37, %s38
    %p52 = scmp.eq.s32.totalorder %s16, 1
    %p53 = por %p51, %p52
    %p55 = scmp.ne.s32.totalorder %s38, %s54
    %p56 = scmp.eq.s32.totalorder %s16, 0
    %p57 = por %p55, %p56
    %s59 = sadd.s32 %s58, 1
    %p62 = scmp.eq.s32.totalorder %s10, 1
    %p63 = scmp.ne.s32.totalorder %s58, %s60
    %p64 = scmp.eq.s32.totalorder %s10, 0
    %p65 = por %p63, %p64
    %p66 = scmp.ne.s32.totalorder %s58, %s60
    %p67 = scmp.eq.s32.totalorder %s15, 1
    %p68 = por %p66, %p67
    %p69 = scmp.ne.s32.totalorder %s60, %s61
    %p70 = scmp.eq.s32.totalorder %s15, 0
    %p71 = por %p69, %p70
    %p72 = scmp.ne.s32.totalorder %s60, %s61
    %p73 = scmp.eq.s32.totalorder %s16, 1
    %p74 = por %p72, %p73
    %p76 = scmp.ne.s32.totalorder %s61, %s75
    %p77 = scmp.eq.s32.totalorder %s16, 0
    %p78 = por %p76, %p77
    %s79 = ssub.s32 %s17, %s29
    %p80 = scmp.eq.s32.totalorder %s79, 0
    %s82 = sadd.s32 %s81, 1
    %s83 = scalar_select %p80, %s81, %s82
    %p86 = pneg %p80
    %p87 = scmp.eq.s32.totalorder %s10, 1
    %p88 = por %p86, %p87
    %p89 = scmp.ne.s32.totalorder %s81, %s84
    %p90 = scmp.eq.s32.totalorder %s10, 0
    %p91 = por %p89, %p90
    %p92 = scmp.ne.s32.totalorder %s81, %s84
    %p93 = scmp.eq.s32.totalorder %s15, 1
    %p94 = por %p92, %p93
    %p95 = scmp.ne.s32.totalorder %s84, %s85
    %p96 = scmp.eq.s32.totalorder %s15, 0
    %p97 = por %p95, %p96
    %p98 = scmp.ne.s32.totalorder %s84, %s85
    %p99 = scmp.eq.s32.totalorder %s16, 1
    %p100 = por %p98, %p99
    %p102 = scmp.ne.s32.totalorder %s85, %s101
    %p103 = scmp.eq.s32.totalorder %s16, 0
    %p104 = por %p102, %p103
    %s105 = ssub.s32 %s17, %s29
    %p106 = scmp.eq.s32.totalorder %s105, 0
    %s108 = sadd.s32 %s107, 1
    %s109 = scalar_select %p106, %s107, %s108
    %p112 = pneg %p106
    %p113 = scmp.eq.s32.totalorder %s10, 1
    %p114 = por %p112, %p113
    %p115 = scmp.ne.s32.totalorder %s107, %s110
    %p116 = scmp.eq.s32.totalorder %s10, 0
    %p117 = por %p115, %p116
    %p118 = scmp.ne.s32.totalorder %s107, %s110
    %p119 = scmp.eq.s32.totalorder %s15, 1
    %p120 = por %p118, %p119
    %p121 = scmp.ne.s32.totalorder %s110, %s111
    %p122 = scmp.eq.s32.totalorder %s15, 0
    %p123 = por %p121, %p122
    %p124 = scmp.ne.s32.totalorder %s110, %s111
    %p125 = scmp.eq.s32.totalorder %s16, 1
    %p126 = por %p124, %p125
    %p128 = scmp.ne.s32.totalorder %s111, %s127
    %p129 = scmp.eq.s32.totalorder %s16, 0
    %p130 = por %p128, %p129
    %p131 = scmp.le.s32.totalorder 1, %s10
    %p132 = scmp.lt.s32.totalorder %s10, 3
    %p133 = pnand %p131, %p132
    %p134 = pneg %p133
    // Predicated region
    $region9: #{cross_attention_forward.15} parent=5 // pred_check
      _
    $region10: #{cross_attention_forward.15} parent=5 // pred_check_branch
      %136 = sbr.rel (%p133) target = $region12
    $region11: #{cross_attention_forward.15} parent=5 // pred_region
      %s137 = ssub.s32 %s10, 1
      // Predicated region
      $region13: #{cross_attention_forward.15} parent=11 // pred_check
        %p138 = pneg %p71
      $region14: #{cross_attention_forward.15} parent=11 // pred_check_branch
        %140 = sbr.rel (%p138) target = $region16
      $region15: #{cross_attention_forward.15} parent=11 // pred_region
        _
      $region16: #{cross_attention_forward.15} parent=11 // pred_fallthru
        _
    $region12: #{cross_attention_forward.15} parent=5 // pred_fallthru
      _
    %p141 = scmp.lt.s32.totalorder %s10, 2
    // Predicated region
    $region17: #{cross_attention_forward.15} parent=5 // pred_check
      %p142 = pneg %p141
    $region18: #{cross_attention_forward.15} parent=5 // pred_check_branch
      %144 = sbr.rel (%p142) target = $region20
    $region19: #{cross_attention_forward.15} parent=5 // pred_region
      // Predicated region
      $region21: #{cross_attention_forward.15} parent=19 // pred_check
        %p145 = pneg %p44
      $region22: #{cross_attention_forward.15} parent=19 // pred_check_branch
        %147 = sbr.rel (%p145) target = $region24
      $region23: #{cross_attention_forward.15} parent=19 // pred_region
        %s148 = smul.u32 4, %s18
        %p149 = scmp.lt.s32.totalorder %s17, 1
        %s150 = scalar_select %p149, %s17, 1
        %p151 = scmp.lt.s32.totalorder %s148, 3
        %s152 = scalar_select %p151, %s148, 3
        %s153 = smul.addr %s150, 4
        %s154 = sadd.s32 %s152, %s153
        %s155 = smul.addr %s154, 8
        %s156 = scalar_lea.vmem %s0, %s155
        %s157 = smul.u32 4, %s18
      $region24: #{cross_attention_forward.15} parent=19 // pred_fallthru
        _
    $region20: #{cross_attention_forward.15} parent=5 // pred_fallthru
      _
    %p158 = scmp.le.s32.totalorder 1, %s10
    %p159 = scmp.lt.s32.totalorder %s10, 3
    %p160 = pnand %p158, %p159
    %p161 = pneg %p160
    // Predicated region
    $region25: #{cross_attention_forward.15} parent=5 // pred_check
      _
    $region26: #{cross_attention_forward.15} parent=5 // pred_check_branch
      %163 = sbr.rel (%p160) target = $region28
    $region27: #{cross_attention_forward.15} parent=5 // pred_region
      %s164 = ssub.s32 %s10, 1
      %s165 = smul.u32 4, %s20
      %p166 = scmp.lt.s32.totalorder %s19, 1
      %s167 = scalar_select %p166, %s19, 1
      %p168 = scmp.lt.s32.totalorder %s165, 3
      %s169 = scalar_select %p168, %s165, 3
      %s170 = smul.addr %s167, 4
      %s171 = sadd.s32 %s169, %s170
      %s172 = smul.addr %s171, 8
      %s173 = scalar_lea.vmem %s0, %s172
      %p174 = pneg %p50
      %p175 = pneg %p47
      %p176 = pneg %p71
      %p177 = pneg %p68
      %p178 = pneg %p97
      %p179 = pneg %p94
      %p180 = scmp.lt.s32.totalorder %s19, 1
      %s181 = scalar_select %p180, %s19, 1
      %s182 = smul.addr %s181, 8
      %s183 = scalar_lea.vmem %s2, %s182
      %p184 = pneg %p123
      %p185 = pneg %p120
      %p186 = scmp.lt.s32.totalorder %s19, 1
      %s187 = scalar_select %p186, %s19, 1
      %s188 = smul.addr %s187, 8
      %s189 = scalar_lea.vmem %s3, %s188
      %s190 = smul.u32 4, %s20
      %p191 = scmp.lt.s32.totalorder %s19, 1
      %s192 = scalar_select %p191, %s19, 1
      %p193 = scmp.lt.s32.totalorder %s190, 3
      %s194 = scalar_select %p193, %s190, 3
      %s195 = smul.addr %s192, 4
      %s196 = sadd.s32 %s194, %s195
      %s197 = smul.addr %s196, 8
      %s198 = scalar_lea.vmem %s0, %s197
      %s199 = smul.u32 4, %s20
      %p200 = scmp.lt.s32.totalorder %s19, 1
      %s201 = scalar_select %p200, %s19, 1
      %s202 = smul.addr %s201, 8
      %s203 = scalar_lea.vmem %s2, %s202
      %p204 = scmp.lt.s32.totalorder %s19, 1
      %s205 = scalar_select %p204, %s19, 1
      %s206 = smul.addr %s205, 8
      %s207 = scalar_lea.vmem %s3, %s206
      %p208 = scmp.eq.s32.totalorder %s20, 0
      // Predicated region
      $region29: #{cross_attention_forward.15} parent=27 // pred_check
        %p209 = pneg %p208
      $region30: #{cross_attention_forward.15} parent=27 // pred_check_branch
        %211 = sbr.rel (%p209) target = $region32
      $region31: #{cross_attention_forward.15} parent=27 // pred_region
        %vm212 = vcmask 7168
        %213 = vst.msk [vmem:[%s203] sm:$0xff] %vm212, 0.0
        %214 = vst.msk [vmem:[%s207] sm:$0xff] %vm212, 0.0
      $region32: #{cross_attention_forward.15} parent=27 // pred_fallthru
        _
      %v215 = vld [vmem:[%s1] sm:$0xff]
      %v216 = vld [vmem:[%s198] sm:$0xff]
      %v217 = vld [vmem:[%s198 + $0x8] sm:$0xff]
      %v218 = vld [vmem:[%s198 + $0x10] sm:$0xff]
      %v219 = vld [vmem:[%s198 + $0x18] sm:$0xff]
      %vm220 = vcmask 64512
      %v222 = vsel %vm220, %v215, 0
      %224 = vmatpush.msra.mxu0 0.0
      %225 = vmatpush.msra.mxu0 0.0
      %226 = vmatpush.msra.mxu0 0.0
      %227 = vmatpush.msra.mxu0 0.0
      %228 = vmatpush.msra.mxu0 0.0
      %229 = vmatpush.msra.mxu0 0.0
      %230 = vmatpush.msra.mxu0 0.0
      %231 = vmatpush.msra.mxu0 0.0
      %232 = vmatpush.msra.mxu0 0.0
      %233 = vmatpush.msra.mxu0 0.0
      %234 = vmatpush.msra.mxu0 0.0
      %235 = vmatpush.msra.mxu0 0.0
      %236 = vmatpush.msra.mxu0 0.0
      %237 = vmatpush.msra.mxu0 0.0
      %238 = vmatpush.msra.mxu0 0.0
      %239 = vmatpush.msra.mxu0 %v216
      %240 = vmatmul.f32.gmra.mxu0 %v222
      %v241 = vpop.f32.mrf.mxu0
      %v242 = vadd.f32 0.0, %v241
      %243 = vdwg.mxu0
      %244 = vmatpush.msra.mxu0 0.0
      %245 = vmatpush.msra.mxu0 0.0
      %246 = vmatpush.msra.mxu0 0.0
      %247 = vmatpush.msra.mxu0 0.0
      %248 = vmatpush.msra.mxu0 0.0
      %249 = vmatpush.msra.mxu0 0.0
      %250 = vmatpush.msra.mxu0 0.0
      %251 = vmatpush.msra.mxu0 0.0
      %252 = vmatpush.msra.mxu0 0.0
      %253 = vmatpush.msra.mxu0 0.0
      %254 = vmatpush.msra.mxu0 0.0
      %255 = vmatpush.msra.mxu0 0.0
      %256 = vmatpush.msra.mxu0 0.0
      %257 = vmatpush.msra.mxu0 0.0
      %258 = vmatpush.msra.mxu0 0.0
      %259 = vmatpush.msra.mxu0 %v217
      %260 = vmatmul.f32.gmra.mxu0 %v222
      %v261 = vpop.f32.mrf.mxu0
      %v262 = vadd.f32 0.0, %v261
      %263 = vdwg.mxu0
      %264 = vmatpush.msra.mxu0 0.0
      %265 = vmatpush.msra.mxu0 0.0
      %266 = vmatpush.msra.mxu0 0.0
      %267 = vmatpush.msra.mxu0 0.0
      %268 = vmatpush.msra.mxu0 0.0
      %269 = vmatpush.msra.mxu0 0.0
      %270 = vmatpush.msra.mxu0 0.0
      %271 = vmatpush.msra.mxu0 0.0
      %272 = vmatpush.msra.mxu0 0.0
      %273 = vmatpush.msra.mxu0 0.0
      %274 = vmatpush.msra.mxu0 0.0
      %275 = vmatpush.msra.mxu0 0.0
      %276 = vmatpush.msra.mxu0 0.0
      %277 = vmatpush.msra.mxu0 0.0
      %278 = vmatpush.msra.mxu0 0.0
      %279 = vmatpush.msra.mxu0 %v218
      %280 = vmatmul.f32.gmra.mxu0 %v222
      %v281 = vpop.f32.mrf.mxu0
      %v282 = vadd.f32 0.0, %v281
      %283 = vdwg.mxu0
      %284 = vmatpush.msra.mxu0 0.0
      %285 = vmatpush.msra.mxu0 0.0
      %286 = vmatpush.msra.mxu0 0.0
      %287 = vmatpush.msra.mxu0 0.0
      %288 = vmatpush.msra.mxu0 0.0
      %289 = vmatpush.msra.mxu0 0.0
      %290 = vmatpush.msra.mxu0 0.0
      %291 = vmatpush.msra.mxu0 0.0
      %292 = vmatpush.msra.mxu0 0.0
      %293 = vmatpush.msra.mxu0 0.0
      %294 = vmatpush.msra.mxu0 0.0
      %295 = vmatpush.msra.mxu0 0.0
      %296 = vmatpush.msra.mxu0 0.0
      %297 = vmatpush.msra.mxu0 0.0
      %298 = vmatpush.msra.mxu0 0.0
      %299 = vmatpush.msra.mxu0 %v219
      %300 = vmatmul.f32.gmra.mxu0 %v222
      %v301 = vpop.f32.mrf.mxu0
      %v302 = vadd.f32 0.0, %v301
      %303 = vdwg.mxu0
      %v304 = vld [vmem:[%s203] sm:$0xff]
      %v305 = vadd.f32 %v242, %v262
      %v306 = vadd.f32 %v305, %v282
      %v307 = vadd.f32 %v306, %v302
      %308 = vadd.xlane.f32.xlu0 %v307
      %v309 = vpop.xlane.xlu0 %308
      %v310 = vadd.f32 %v304, %v309
      %vm311 = vcmask 7168
      %312 = vst.msk [vmem:[%s203] sm:$0xff] %vm311, %v310
      %v313 = vld [vmem:[%s207] sm:$0xff]
      %v314 = vmul.f32 %v242, %v242
      %v315 = vmul.f32 %v262, %v262
      %v316 = vmul.f32 %v282, %v282
      %v317 = vmul.f32 %v302, %v302
      %v318 = vadd.f32 %v314, %v315
      %v319 = vadd.f32 %v318, %v316
      %v320 = vadd.f32 %v319, %v317
      %321 = vadd.xlane.f32.xlu0 %v320
      %v322 = vpop.xlane.xlu0 %321
      %v323 = vadd.f32 %v313, %v322
      %324 = vst.msk [vmem:[%s207] sm:$0xff] %vm311, %v323
      %p325 = scmp.lt.s32.totalorder %s19, 1
      %s326 = scalar_select %p325, %s19, 1
      %s327 = smul.addr %s326, 8
      %s328 = scalar_lea.vmem %s2, %s327
      %p329 = scmp.lt.s32.totalorder %s19, 1
      %s330 = scalar_select %p329, %s19, 1
      %s331 = smul.addr %s330, 8
      %s332 = scalar_lea.vmem %s3, %s331
      // Predicated region
      $region33: #{cross_attention_forward.15} parent=27 // pred_check
        %p333 = pneg %p94
      $region34: #{cross_attention_forward.15} parent=27 // pred_check_branch
        %335 = sbr.rel (%p333) target = $region36
      $region35: #{cross_attention_forward.15} parent=27 // pred_region
        _
      $region36: #{cross_attention_forward.15} parent=27 // pred_fallthru
        _
      // Predicated region
      $region37: #{cross_attention_forward.15} parent=27 // pred_check
        %p336 = pneg %p120
      $region38: #{cross_attention_forward.15} parent=27 // pred_check_branch
        %338 = sbr.rel (%p336) target = $region40
      $region39: #{cross_attention_forward.15} parent=27 // pred_region
        _
      $region40: #{cross_attention_forward.15} parent=27 // pred_fallthru
        _
    $region28: #{cross_attention_forward.15} parent=5 // pred_fallthru
      _
    %p339 = scmp.le.s32.totalorder 2, %s10
    // Predicated region
    $region41: #{cross_attention_forward.15} parent=5 // pred_check
      %p340 = pneg %p339
    $region42: #{cross_attention_forward.15} parent=5 // pred_check_branch
      %342 = sbr.rel (%p340) target = $region44
    $region43: #{cross_attention_forward.15} parent=5 // pred_region
      %s343 = ssub.s32 %s10, 2
      // Predicated region
      $region45: #{cross_attention_forward.15} parent=43 // pred_check
        %p344 = pneg %p100
      $region46: #{cross_attention_forward.15} parent=43 // pred_check_branch
        %346 = sbr.rel (%p344) target = $region48
      $region47: #{cross_attention_forward.15} parent=43 // pred_region
        %p347 = scmp.lt.s32.totalorder %s21, 1
        %s348 = scalar_select %p347, %s21, 1
        %s349 = smul.addr %s348, 8
        %s350 = scalar_lea.vmem %s2, %s349
      $region48: #{cross_attention_forward.15} parent=43 // pred_fallthru
        _
      // Predicated region
      $region49: #{cross_attention_forward.15} parent=43 // pred_check
        %p351 = pneg %p126
      $region50: #{cross_attention_forward.15} parent=43 // pred_check_branch
        %353 = sbr.rel (%p351) target = $region52
      $region51: #{cross_attention_forward.15} parent=43 // pred_region
        %p354 = scmp.lt.s32.totalorder %s21, 1
        %s355 = scalar_select %p354, %s21, 1
        %s356 = smul.addr %s355, 8
        %s357 = scalar_lea.vmem %s3, %s356
      $region52: #{cross_attention_forward.15} parent=43 // pred_fallthru
        _
    $region44: #{cross_attention_forward.15} parent=5 // pred_fallthru
      _
  $region6: #{cross_attention_forward.15} parent=0 // loop_footer
    %s14 = sadd.s32 1, %s10
  $region7: #{cross_attention_forward.15} parent=0 // loop_footer_branch
    %9 = sbr.rel target = $region3
  $region8: #{cross_attention_forward.15} parent=0 // loop_exit
    _

// kernel: cross_attention_forward.16
$region0: #{cross_attention_forward.16}
  #allocation0 [shape = 'u32[]', space=smem, size = 0x4, offset = 0x4, fixed_abs, tag = 'smem constant byte address 0x4 - core index']
  #allocation1 [shape = 'u32[72,128]{1,0:T(1,128)}', space=vmem, size = 0x9000, scoped, tag = 'internal scratch']
  %s0 = inlined_call_operand.vmem [shape: f32[2,8,512], index: 0, kind: input, shape index: {}]
  %s1 = inlined_call_operand.vmem [shape: f32[8,8], index: 1, kind: input, shape index: {}]
  %s2 = inlined_call_operand.vmem [shape: f32[2,8,1], index: 2, kind: input, shape index: {}]
  %s3 = inlined_call_operand.vmem [shape: f32[2,8,1], index: 3, kind: input, shape index: {}]
  %s4 = inlined_call_operand.vmem [shape: f32[2,8,512], index: 4, kind: output, shape index: {}]
  %s5 = sld [smem:[#allocation0]]
  $region49: #{cross_attention_forward.16} parent=0
    _
  %s7 = ssub.s32 1, %s5
  %s8 = scalar_select 0, %s7, %s5
  loop: start=0, step=1, limit=4
  $region2: #{cross_attention_forward.16} parent=0 // loop_pre_header
    _
  $region3: #{cross_attention_forward.16} parent=0 // loop_header
    %s10 = sphi 0, %s14
    %p11 = scmp.ge.s32.totalorder %s10, 4
    %s17 = sphi 0, %s29
    %s18 = sphi 0, %s25
    %s19 = sphi 0, %s17
    %s20 = sphi 0, %s18
    %s21 = sphi 0, %s19
    %s22 = sphi 0, %s20
    %s34 = sphi 0, %s36
    %s37 = sphi 0, %s34
    %s38 = sphi 0, %s37
    %s54 = sphi 0, %s38
    %s58 = sphi 0, %s58
    %s60 = sphi 0, %s58
    %s61 = sphi 0, %s60
    %s75 = sphi 0, %s61
    %s81 = sphi 0, %s83
    %s84 = sphi 0, %s81
    %s85 = sphi 0, %s84
    %s101 = sphi 0, %s85
    %s107 = sphi 0, %s109
    %s110 = sphi 0, %s107
    %s111 = sphi 0, %s110
    %s127 = sphi 0, %s111
    %s135 = sphi 0, %s137
    %s138 = sphi 0, %s135
    %s139 = sphi 0, %s138
    %s155 = sphi 0, %s139
  $region4: #{cross_attention_forward.16} parent=0 // loop_header_branch
    %13 = sbr.rel (%p11) target = $region8
  $region5: #{cross_attention_forward.16} parent=0 // loop_body
    %s15 = ssub.s32 %s10, 1
    %s16 = ssub.s32 %s10, 2
    %s23 = sadd.s32 1, %s18
    %p24 = scmp.ge.s32.totalorder %s23, 1
    %s25 = scalar_select %p24, 0, %s23
    %s26 = sadd.s32 1, %s17
    %s27 = scalar_select %p24, %s26, %s17
    %p28 = scmp.ge.s32.totalorder %s27, 2
    %s29 = scalar_select %p28, 0, %s27
    %s30 = ssub.s32 %s17, %s29
    %s31 = ssub.s32 %s18, %s25
    %s32 = sor.u32 %s30, %s31
    %p33 = scmp.eq.s32.totalorder %s32, 0
    %s35 = sadd.s32 %s34, 1
    %s36 = scalar_select %p33, %s34, %s35
    %p39 = pneg %p33
    %p40 = scmp.eq.s32.totalorder %s10, 1
    %p41 = por %p39, %p40
    %p42 = scmp.ne.s32.totalorder %s34, %s37
    %p43 = scmp.eq.s32.totalorder %s10, 0
    %p44 = por %p42, %p43
    %p45 = scmp.ne.s32.totalorder %s34, %s37
    %p46 = scmp.eq.s32.totalorder %s15, 1
    %p47 = por %p45, %p46
    %p48 = scmp.ne.s32.totalorder %s37, %s38
    %p49 = scmp.eq.s32.totalorder %s15, 0
    %p50 = por %p48, %p49
    %p51 = scmp.ne.s32.totalorder %s37, %s38
    %p52 = scmp.eq.s32.totalorder %s16, 1
    %p53 = por %p51, %p52
    %p55 = scmp.ne.s32.totalorder %s38, %s54
    %p56 = scmp.eq.s32.totalorder %s16, 0
    %p57 = por %p55, %p56
    %s59 = sadd.s32 %s58, 1
    %p62 = scmp.eq.s32.totalorder %s10, 1
    %p63 = scmp.ne.s32.totalorder %s58, %s60
    %p64 = scmp.eq.s32.totalorder %s10, 0
    %p65 = por %p63, %p64
    %p66 = scmp.ne.s32.totalorder %s58, %s60
    %p67 = scmp.eq.s32.totalorder %s15, 1
    %p68 = por %p66, %p67
    %p69 = scmp.ne.s32.totalorder %s60, %s61
    %p70 = scmp.eq.s32.totalorder %s15, 0
    %p71 = por %p69, %p70
    %p72 = scmp.ne.s32.totalorder %s60, %s61
    %p73 = scmp.eq.s32.totalorder %s16, 1
    %p74 = por %p72, %p73
    %p76 = scmp.ne.s32.totalorder %s61, %s75
    %p77 = scmp.eq.s32.totalorder %s16, 0
    %p78 = por %p76, %p77
    %s79 = ssub.s32 %s17, %s29
    %p80 = scmp.eq.s32.totalorder %s79, 0
    %s82 = sadd.s32 %s81, 1
    %s83 = scalar_select %p80, %s81, %s82
    %p86 = pneg %p80
    %p87 = scmp.eq.s32.totalorder %s10, 1
    %p88 = por %p86, %p87
    %p89 = scmp.ne.s32.totalorder %s81, %s84
    %p90 = scmp.eq.s32.totalorder %s10, 0
    %p91 = por %p89, %p90
    %p92 = scmp.ne.s32.totalorder %s81, %s84
    %p93 = scmp.eq.s32.totalorder %s15, 1
    %p94 = por %p92, %p93
    %p95 = scmp.ne.s32.totalorder %s84, %s85
    %p96 = scmp.eq.s32.totalorder %s15, 0
    %p97 = por %p95, %p96
    %p98 = scmp.ne.s32.totalorder %s84, %s85
    %p99 = scmp.eq.s32.totalorder %s16, 1
    %p100 = por %p98, %p99
    %p102 = scmp.ne.s32.totalorder %s85, %s101
    %p103 = scmp.eq.s32.totalorder %s16, 0
    %p104 = por %p102, %p103
    %s105 = ssub.s32 %s17, %s29
    %p106 = scmp.eq.s32.totalorder %s105, 0
    %s108 = sadd.s32 %s107, 1
    %s109 = scalar_select %p106, %s107, %s108
    %p112 = pneg %p106
    %p113 = scmp.eq.s32.totalorder %s10, 1
    %p114 = por %p112, %p113
    %p115 = scmp.ne.s32.totalorder %s107, %s110
    %p116 = scmp.eq.s32.totalorder %s10, 0
    %p117 = por %p115, %p116
    %p118 = scmp.ne.s32.totalorder %s107, %s110
    %p119 = scmp.eq.s32.totalorder %s15, 1
    %p120 = por %p118, %p119
    %p121 = scmp.ne.s32.totalorder %s110, %s111
    %p122 = scmp.eq.s32.totalorder %s15, 0
    %p123 = por %p121, %p122
    %p124 = scmp.ne.s32.totalorder %s110, %s111
    %p125 = scmp.eq.s32.totalorder %s16, 1
    %p126 = por %p124, %p125
    %p128 = scmp.ne.s32.totalorder %s111, %s127
    %p129 = scmp.eq.s32.totalorder %s16, 0
    %p130 = por %p128, %p129
    %s131 = ssub.s32 %s17, %s29
    %s132 = ssub.s32 %s18, %s25
    %s133 = sor.u32 %s131, %s132
    %p134 = scmp.eq.s32.totalorder %s133, 0
    %s136 = sadd.s32 %s135, 1
    %s137 = scalar_select %p134, %s135, %s136
    %p140 = pneg %p134
    %p141 = scmp.eq.s32.totalorder %s10, 1
    %p142 = por %p140, %p141
    %p143 = scmp.ne.s32.totalorder %s135, %s138
    %p144 = scmp.eq.s32.totalorder %s10, 0
    %p145 = por %p143, %p144
    %p146 = scmp.ne.s32.totalorder %s135, %s138
    %p147 = scmp.eq.s32.totalorder %s15, 1
    %p148 = por %p146, %p147
    %p149 = scmp.ne.s32.totalorder %s138, %s139
    %p150 = scmp.eq.s32.totalorder %s15, 0
    %p151 = por %p149, %p150
    %p152 = scmp.ne.s32.totalorder %s138, %s139
    %p153 = scmp.eq.s32.totalorder %s16, 1
    %p154 = por %p152, %p153
    %p156 = scmp.ne.s32.totalorder %s139, %s155
    %p157 = scmp.eq.s32.totalorder %s16, 0
    %p158 = por %p156, %p157
    %p159 = scmp.le.s32.totalorder 1, %s10
    %p160 = scmp.lt.s32.totalorder %s10, 3
    %p161 = pnand %p159, %p160
    %p162 = pneg %p161
    // Predicated region
    $region9: #{cross_attention_forward.16} parent=5 // pred_check
      _
    $region10: #{cross_attention_forward.16} parent=5 // pred_check_branch
      %164 = sbr.rel (%p161) target = $region12
    $region11: #{cross_attention_forward.16} parent=5 // pred_region
      %s165 = ssub.s32 %s10, 1
      // Predicated region
      $region13: #{cross_attention_forward.16} parent=11 // pred_check
        %p166 = pneg %p71
      $region14: #{cross_attention_forward.16} parent=11 // pred_check_branch
        %168 = sbr.rel (%p166) target = $region16
      $region15: #{cross_attention_forward.16} parent=11 // pred_region
        _
      $region16: #{cross_attention_forward.16} parent=11 // pred_fallthru
        _
    $region12: #{cross_attention_forward.16} parent=5 // pred_fallthru
      _
    %p169 = scmp.lt.s32.totalorder %s10, 2
    // Predicated region
    $region17: #{cross_attention_forward.16} parent=5 // pred_check
      %p170 = pneg %p169
    $region18: #{cross_attention_forward.16} parent=5 // pred_check_branch
      %172 = sbr.rel (%p170) target = $region20
    $region19: #{cross_attention_forward.16} parent=5 // pred_region
      // Predicated region
      $region21: #{cross_attention_forward.16} parent=19 // pred_check
        %p173 = pneg %p44
      $region22: #{cross_attention_forward.16} parent=19 // pred_check_branch
        %175 = sbr.rel (%p173) target = $region24
      $region23: #{cross_attention_forward.16} parent=19 // pred_region
        %s176 = smul.u32 4, %s18
        %p177 = scmp.lt.s32.totalorder %s17, 1
        %s178 = scalar_select %p177, %s17, 1
        %p179 = scmp.lt.s32.totalorder %s176, 3
        %s180 = scalar_select %p179, %s176, 3
        %s181 = smul.addr %s178, 4
        %s182 = sadd.s32 %s180, %s181
        %s183 = smul.addr %s182, 8
        %s184 = scalar_lea.vmem %s0, %s183
        %s185 = smul.u32 4, %s18
      $region24: #{cross_attention_forward.16} parent=19 // pred_fallthru
        _
      // Predicated region
      $region25: #{cross_attention_forward.16} parent=19 // pred_check
        %p186 = pneg %p91
      $region26: #{cross_attention_forward.16} parent=19 // pred_check_branch
        %188 = sbr.rel (%p186) target = $region28
      $region27: #{cross_attention_forward.16} parent=19 // pred_region
        %p189 = scmp.lt.s32.totalorder %s17, 1
        %s190 = scalar_select %p189, %s17, 1
        %s191 = smul.addr %s190, 8
        %s192 = scalar_lea.vmem %s2, %s191
      $region28: #{cross_attention_forward.16} parent=19 // pred_fallthru
        _
      // Predicated region
      $region29: #{cross_attention_forward.16} parent=19 // pred_check
        %p193 = pneg %p117
      $region30: #{cross_attention_forward.16} parent=19 // pred_check_branch
        %195 = sbr.rel (%p193) target = $region32
      $region31: #{cross_attention_forward.16} parent=19 // pred_region
        %p196 = scmp.lt.s32.totalorder %s17, 1
        %s197 = scalar_select %p196, %s17, 1
        %s198 = smul.addr %s197, 8
        %s199 = scalar_lea.vmem %s3, %s198
      $region32: #{cross_attention_forward.16} parent=19 // pred_fallthru
        _
    $region20: #{cross_attention_forward.16} parent=5 // pred_fallthru
      _
    %p200 = scmp.le.s32.totalorder 1, %s10
    %p201 = scmp.lt.s32.totalorder %s10, 3
    %p202 = pnand %p200, %p201
    %p203 = pneg %p202
    // Predicated region
    $region33: #{cross_attention_forward.16} parent=5 // pred_check
      _
    $region34: #{cross_attention_forward.16} parent=5 // pred_check_branch
      %205 = sbr.rel (%p202) target = $region36
    $region35: #{cross_attention_forward.16} parent=5 // pred_region
      %s206 = ssub.s32 %s10, 1
      %s207 = smul.u32 4, %s20
      %p208 = scmp.lt.s32.totalorder %s19, 1
      %s209 = scalar_select %p208, %s19, 1
      %p210 = scmp.lt.s32.totalorder %s207, 3
      %s211 = scalar_select %p210, %s207, 3
      %s212 = smul.addr %s209, 4
      %s213 = sadd.s32 %s211, %s212
      %s214 = smul.addr %s213, 8
      %s215 = scalar_lea.vmem %s0, %s214
      %p216 = pneg %p50
      %p217 = pneg %p47
      %p218 = pneg %p71
      %p219 = pneg %p68
      %p220 = scmp.lt.s32.totalorder %s19, 1
      %s221 = scalar_select %p220, %s19, 1
      %s222 = smul.addr %s221, 8
      %s223 = scalar_lea.vmem %s2, %s222
      %p224 = pneg %p97
      %p225 = pneg %p94
      %p226 = scmp.lt.s32.totalorder %s19, 1
      %s227 = scalar_select %p226, %s19, 1
      %s228 = smul.addr %s227, 8
      %s229 = scalar_lea.vmem %s3, %s228
      %p230 = pneg %p123
      %p231 = pneg %p120
      %p232 = pneg %p151
      %p233 = pneg %p148
      %s234 = smul.u32 4, %s20
      %p235 = scmp.lt.s32.totalorder %s19, 1
      %s236 = scalar_select %p235, %s19, 1
      %p237 = scmp.lt.s32.totalorder %s234, 3
      %s238 = scalar_select %p237, %s234, 3
      %s239 = smul.addr %s236, 4
      %s240 = sadd.s32 %s238, %s239
      %s241 = smul.addr %s240, 8
      %s242 = scalar_lea.vmem %s4, %s241
      %s243 = smul.u32 4, %s20
      %p244 = scmp.lt.s32.totalorder %s19, 1
      %s245 = scalar_select %p244, %s19, 1
      %p246 = scmp.lt.s32.totalorder %s243, 3
      %s247 = scalar_select %p246, %s243, 3
      %s248 = smul.addr %s245, 4
      %s249 = sadd.s32 %s247, %s248
      %s250 = smul.addr %s249, 8
      %s251 = scalar_lea.vmem %s0, %s250
      %s252 = smul.u32 4, %s20
      %p253 = scmp.lt.s32.totalorder %s19, 1
      %s254 = scalar_select %p253, %s19, 1
      %s255 = smul.addr %s254, 8
      %s256 = scalar_lea.vmem %s2, %s255
      %p257 = scmp.lt.s32.totalorder %s19, 1
      %s258 = scalar_select %p257, %s19, 1
      %s259 = smul.addr %s258, 8
      %s260 = scalar_lea.vmem %s3, %s259
      %s261 = smul.u32 4, %s20
      %p262 = scmp.lt.s32.totalorder %s19, 1
      %s263 = scalar_select %p262, %s19, 1
      %p264 = scmp.lt.s32.totalorder %s261, 3
      %s265 = scalar_select %p264, %s261, 3
      %s266 = smul.addr %s263, 4
      %s267 = sadd.s32 %s265, %s266
      %s268 = smul.addr %s267, 8
      %s269 = scalar_lea.vmem %s4, %s268
      %s270 = smul.u32 4, %s20
      %v271 = vld [vmem:[%s1] sm:$0xff]
      %v272 = vld [vmem:[%s251] sm:$0xff]
      %v273 = vld [vmem:[%s251 + $0x8] sm:$0xff]
      %v274 = vld [vmem:[%s251 + $0x10] sm:$0xff]
      %v275 = vld [vmem:[%s251 + $0x18] sm:$0xff]
      %vm276 = vcmask 64512
      %v278 = vsel %vm276, %v271, 0
      %280 = vmatpush.msra.mxu0 0.0
      %281 = vmatpush.msra.mxu0 0.0
      %282 = vmatpush.msra.mxu0 0.0
      %283 = vmatpush.msra.mxu0 0.0
      %284 = vmatpush.msra.mxu0 0.0
      %285 = vmatpush.msra.mxu0 0.0
      %286 = vmatpush.msra.mxu0 0.0
      %287 = vmatpush.msra.mxu0 0.0
      %288 = vmatpush.msra.mxu0 0.0
      %289 = vmatpush.msra.mxu0 0.0
      %290 = vmatpush.msra.mxu0 0.0
      %291 = vmatpush.msra.mxu0 0.0
      %292 = vmatpush.msra.mxu0 0.0
      %293 = vmatpush.msra.mxu0 0.0
      %294 = vmatpush.msra.mxu0 0.0
      %295 = vmatpush.msra.mxu0 %v272
      %296 = vmatmul.f32.gmra.mxu0 %v278
      %v297 = vpop.f32.mrf.mxu0
      %v298 = vadd.f32 0.0, %v297
      %299 = vdwg.mxu0
      %300 = vmatpush.msra.mxu0 0.0
      %301 = vmatpush.msra.mxu0 0.0
      %302 = vmatpush.msra.mxu0 0.0
      %303 = vmatpush.msra.mxu0 0.0
      %304 = vmatpush.msra.mxu0 0.0
      %305 = vmatpush.msra.mxu0 0.0
      %306 = vmatpush.msra.mxu0 0.0
      %307 = vmatpush.msra.mxu0 0.0
      %308 = vmatpush.msra.mxu0 0.0
      %309 = vmatpush.msra.mxu0 0.0
      %310 = vmatpush.msra.mxu0 0.0
      %311 = vmatpush.msra.mxu0 0.0
      %312 = vmatpush.msra.mxu0 0.0
      %313 = vmatpush.msra.mxu0 0.0
      %314 = vmatpush.msra.mxu0 0.0
      %315 = vmatpush.msra.mxu0 %v273
      %316 = vmatmul.f32.gmra.mxu0 %v278
      %v317 = vpop.f32.mrf.mxu0
      %v318 = vadd.f32 0.0, %v317
      %319 = vdwg.mxu0
      %320 = vmatpush.msra.mxu0 0.0
      %321 = vmatpush.msra.mxu0 0.0
      %322 = vmatpush.msra.mxu0 0.0
      %323 = vmatpush.msra.mxu0 0.0
      %324 = vmatpush.msra.mxu0 0.0
      %325 = vmatpush.msra.mxu0 0.0
      %326 = vmatpush.msra.mxu0 0.0
      %327 = vmatpush.msra.mxu0 0.0
      %328 = vmatpush.msra.mxu0 0.0
      %329 = vmatpush.msra.mxu0 0.0
      %330 = vmatpush.msra.mxu0 0.0
      %331 = vmatpush.msra.mxu0 0.0
      %332 = vmatpush.msra.mxu0 0.0
      %333 = vmatpush.msra.mxu0 0.0
      %334 = vmatpush.msra.mxu0 0.0
      %335 = vmatpush.msra.mxu0 %v274
      %336 = vmatmul.f32.gmra.mxu0 %v278
      %v337 = vpop.f32.mrf.mxu0
      %v338 = vadd.f32 0.0, %v337
      %339 = vdwg.mxu0
      %340 = vmatpush.msra.mxu0 0.0
      %341 = vmatpush.msra.mxu0 0.0
      %342 = vmatpush.msra.mxu0 0.0
      %343 = vmatpush.msra.mxu0 0.0
      %344 = vmatpush.msra.mxu0 0.0
      %345 = vmatpush.msra.mxu0 0.0
      %346 = vmatpush.msra.mxu0 0.0
      %347 = vmatpush.msra.mxu0 0.0
      %348 = vmatpush.msra.mxu0 0.0
      %349 = vmatpush.msra.mxu0 0.0
      %350 = vmatpush.msra.mxu0 0.0
      %351 = vmatpush.msra.mxu0 0.0
      %352 = vmatpush.msra.mxu0 0.0
      %353 = vmatpush.msra.mxu0 0.0
      %354 = vmatpush.msra.mxu0 0.0
      %355 = vmatpush.msra.mxu0 %v275
      %356 = vmatmul.f32.gmra.mxu0 %v278
      %v357 = vpop.f32.mrf.mxu0
      %v358 = vadd.f32 0.0, %v357
      %359 = vdwg.mxu0
      %v360 = vld [vmem:[%s256] sm:$0xff]
      %362 = vset.pattern.permute.xlu0 0
      %363 = vperm.xlu0 %362, %v360
      %v364 = vpop.permute.xlu0 %363
      %v366 = vmul.f32 %v298, %v364
      %v367 = vmul.f32 %v318, %v364
      %v368 = vmul.f32 %v338, %v364
      %v369 = vmul.f32 %v358, %v364
      %v370 = vld [vmem:[%s260] sm:$0xff]
      %372 = vset.pattern.permute.xlu0 0
      %373 = vperm.xlu0 %372, %v370
      %v374 = vpop.permute.xlu0 %373
      %v376 = vadd.f32 %v366, %v374
      %v377 = vadd.f32 %v367, %v374
      %v378 = vadd.f32 %v368, %v374
      %v379 = vadd.f32 %v369, %v374
      %v380 = vmax.f32 %v376, 0.0
      %v381 = vmax.f32 %v377, 0.0
      %v382 = vmax.f32 %v378, 0.0
      %v383 = vmax.f32 %v379, 0.0
      %384 = vst [vmem:[%s269] sm:$0xff] %v380
      %385 = vst [vmem:[%s269 + $0x8] sm:$0xff] %v381
      %386 = vst [vmem:[%s269 + $0x10] sm:$0xff] %v382
      %387 = vst [vmem:[%s269 + $0x18] sm:$0xff] %v383
      %s388 = smul.u32 4, %s20
      %p389 = scmp.lt.s32.totalorder %s19, 1
      %s390 = scalar_select %p389, %s19, 1
      %p391 = scmp.lt.s32.totalorder %s388, 3
      %s392 = scalar_select %p391, %s388, 3
      %s393 = smul.addr %s390, 4
      %s394 = sadd.s32 %s392, %s393
      %s395 = smul.addr %s394, 8
      %s396 = scalar_lea.vmem %s4, %s395
      // Predicated region
      $region37: #{cross_attention_forward.16} parent=35 // pred_check
        %p397 = pneg %p148
      $region38: #{cross_attention_forward.16} parent=35 // pred_check_branch
        %399 = sbr.rel (%p397) target = $region40
      $region39: #{cross_attention_forward.16} parent=35 // pred_region
        %s400 = smul.u32 4, %s20
      $region40: #{cross_attention_forward.16} parent=35 // pred_fallthru
        _
    $region36: #{cross_attention_forward.16} parent=5 // pred_fallthru
      _
    %p401 = scmp.le.s32.totalorder 2, %s10
    // Predicated region
    $region41: #{cross_attention_forward.16} parent=5 // pred_check
      %p402 = pneg %p401
    $region42: #{cross_attention_forward.16} parent=5 // pred_check_branch
      %404 = sbr.rel (%p402) target = $region44
    $region43: #{cross_attention_forward.16} parent=5 // pred_region
      %s405 = ssub.s32 %s10, 2
      // Predicated region
      $region45: #{cross_attention_forward.16} parent=43 // pred_check
        %p406 = pneg %p154
      $region46: #{cross_attention_forward.16} parent=43 // pred_check_branch
        %408 = sbr.rel (%p406) target = $region48
      $region47: #{cross_attention_forward.16} parent=43 // pred_region
        %s409 = smul.u32 4, %s22
        %p410 = scmp.lt.s32.totalorder %s21, 1
        %s411 = scalar_select %p410, %s21, 1
        %p412 = scmp.lt.s32.totalorder %s409, 3
        %s413 = scalar_select %p412, %s409, 3
        %s414 = smul.addr %s411, 4
        %s415 = sadd.s32 %s413, %s414
        %s416 = smul.addr %s415, 8
        %s417 = scalar_lea.vmem %s4, %s416
      $region48: #{cross_attention_forward.16} parent=43 // pred_fallthru
        _
    $region44: #{cross_attention_forward.16} parent=5 // pred_fallthru
      _
  $region6: #{cross_attention_forward.16} parent=0 // loop_footer
    %s14 = sadd.s32 1, %s10
  $region7: #{cross_attention_forward.16} parent=0 // loop_footer_branch
    %9 = sbr.rel target = $region3
  $region8: #{cross_attention_forward.16} parent=0 // loop_exit
    _

// kernel: cross_attention_forward.17
$region0: #{cross_attention_forward.17}
  #allocation0 [shape = 'u32[]', space=smem, size = 0x4, offset = 0x4, fixed_abs, tag = 'smem constant byte address 0x4 - core index']
  #allocation1 [shape = 'u32[72,128]{1,0:T(1,128)}', space=vmem, size = 0x9000, scoped, tag = 'internal scratch']
  %s0 = inlined_call_operand.vmem [shape: f32[2,8,512], index: 0, kind: input, shape index: {}]
  %s1 = inlined_call_operand.vmem [shape: f32[2,8,512], index: 1, kind: input, shape index: {}]
  %s2 = inlined_call_operand.vmem [shape: f32[2,8,512], index: 2, kind: input, shape index: {}]
  %s3 = inlined_call_operand.vmem [shape: f32[2,2,8,512], index: 3, kind: output, shape index: {}]
  %s4 = sld [smem:[#allocation0]]
  $region45: #{cross_attention_forward.17} parent=0
    _
  %s6 = ssub.s32 1, %s4
  %s7 = scalar_select 0, %s6, %s4
  loop: start=0, step=1, limit=4
  $region2: #{cross_attention_forward.17} parent=0 // loop_pre_header
    _
  $region3: #{cross_attention_forward.17} parent=0 // loop_header
    %s9 = sphi 0, %s13
    %p10 = scmp.ge.s32.totalorder %s9, 4
    %s16 = sphi 0, %s28
    %s17 = sphi 0, %s24
    %s18 = sphi 0, %s16
    %s19 = sphi 0, %s17
    %s20 = sphi 0, %s18
    %s21 = sphi 0, %s19
    %s33 = sphi 0, %s35
    %s36 = sphi 0, %s33
    %s37 = sphi 0, %s36
    %s53 = sphi 0, %s37
    %s61 = sphi 0, %s63
    %s64 = sphi 0, %s61
    %s65 = sphi 0, %s64
    %s81 = sphi 0, %s65
    %s89 = sphi 0, %s91
    %s92 = sphi 0, %s89
    %s93 = sphi 0, %s92
    %s109 = sphi 0, %s93
    %s117 = sphi 0, %s119
    %s120 = sphi 0, %s117
    %s121 = sphi 0, %s120
    %s137 = sphi 0, %s121
  $region4: #{cross_attention_forward.17} parent=0 // loop_header_branch
    %12 = sbr.rel (%p10) target = $region8
  $region5: #{cross_attention_forward.17} parent=0 // loop_body
    %s14 = ssub.s32 %s9, 1
    %s15 = ssub.s32 %s9, 2
    %s22 = sadd.s32 1, %s17
    %p23 = scmp.ge.s32.totalorder %s22, 1
    %s24 = scalar_select %p23, 0, %s22
    %s25 = sadd.s32 1, %s16
    %s26 = scalar_select %p23, %s25, %s16
    %p27 = scmp.ge.s32.totalorder %s26, 2
    %s28 = scalar_select %p27, 0, %s26
    %s29 = ssub.s32 %s16, %s28
    %s30 = ssub.s32 %s17, %s24
    %s31 = sor.u32 %s29, %s30
    %p32 = scmp.eq.s32.totalorder %s31, 0
    %s34 = sadd.s32 %s33, 1
    %s35 = scalar_select %p32, %s33, %s34
    %p38 = pneg %p32
    %p39 = scmp.eq.s32.totalorder %s9, 1
    %p40 = por %p38, %p39
    %p41 = scmp.ne.s32.totalorder %s33, %s36
    %p42 = scmp.eq.s32.totalorder %s9, 0
    %p43 = por %p41, %p42
    %p44 = scmp.ne.s32.totalorder %s33, %s36
    %p45 = scmp.eq.s32.totalorder %s14, 1
    %p46 = por %p44, %p45
    %p47 = scmp.ne.s32.totalorder %s36, %s37
    %p48 = scmp.eq.s32.totalorder %s14, 0
    %p49 = por %p47, %p48
    %p50 = scmp.ne.s32.totalorder %s36, %s37
    %p51 = scmp.eq.s32.totalorder %s15, 1
    %p52 = por %p50, %p51
    %p54 = scmp.ne.s32.totalorder %s37, %s53
    %p55 = scmp.eq.s32.totalorder %s15, 0
    %p56 = por %p54, %p55
    %s57 = ssub.s32 %s16, %s28
    %s58 = ssub.s32 %s17, %s24
    %s59 = sor.u32 %s57, %s58
    %p60 = scmp.eq.s32.totalorder %s59, 0
    %s62 = sadd.s32 %s61, 1
    %s63 = scalar_select %p60, %s61, %s62
    %p66 = pneg %p60
    %p67 = scmp.eq.s32.totalorder %s9, 1
    %p68 = por %p66, %p67
    %p69 = scmp.ne.s32.totalorder %s61, %s64
    %p70 = scmp.eq.s32.totalorder %s9, 0
    %p71 = por %p69, %p70
    %p72 = scmp.ne.s32.totalorder %s61, %s64
    %p73 = scmp.eq.s32.totalorder %s14, 1
    %p74 = por %p72, %p73
    %p75 = scmp.ne.s32.totalorder %s64, %s65
    %p76 = scmp.eq.s32.totalorder %s14, 0
    %p77 = por %p75, %p76
    %p78 = scmp.ne.s32.totalorder %s64, %s65
    %p79 = scmp.eq.s32.totalorder %s15, 1
    %p80 = por %p78, %p79
    %p82 = scmp.ne.s32.totalorder %s65, %s81
    %p83 = scmp.eq.s32.totalorder %s15, 0
    %p84 = por %p82, %p83
    %s85 = ssub.s32 %s16, %s28
    %s86 = ssub.s32 %s17, %s24
    %s87 = sor.u32 %s85, %s86
    %p88 = scmp.eq.s32.totalorder %s87, 0
    %s90 = sadd.s32 %s89, 1
    %s91 = scalar_select %p88, %s89, %s90
    %p94 = pneg %p88
    %p95 = scmp.eq.s32.totalorder %s9, 1
    %p96 = por %p94, %p95
    %p97 = scmp.ne.s32.totalorder %s89, %s92
    %p98 = scmp.eq.s32.totalorder %s9, 0
    %p99 = por %p97, %p98
    %p100 = scmp.ne.s32.totalorder %s89, %s92
    %p101 = scmp.eq.s32.totalorder %s14, 1
    %p102 = por %p100, %p101
    %p103 = scmp.ne.s32.totalorder %s92, %s93
    %p104 = scmp.eq.s32.totalorder %s14, 0
    %p105 = por %p103, %p104
    %p106 = scmp.ne.s32.totalorder %s92, %s93
    %p107 = scmp.eq.s32.totalorder %s15, 1
    %p108 = por %p106, %p107
    %p110 = scmp.ne.s32.totalorder %s93, %s109
    %p111 = scmp.eq.s32.totalorder %s15, 0
    %p112 = por %p110, %p111
    %s113 = ssub.s32 %s16, %s28
    %s114 = ssub.s32 %s17, %s24
    %s115 = sor.u32 %s113, %s114
    %p116 = scmp.eq.s32.totalorder %s115, 0
    %s118 = sadd.s32 %s117, 1
    %s119 = scalar_select %p116, %s117, %s118
    %p122 = pneg %p116
    %p123 = scmp.eq.s32.totalorder %s9, 1
    %p124 = por %p122, %p123
    %p125 = scmp.ne.s32.totalorder %s117, %s120
    %p126 = scmp.eq.s32.totalorder %s9, 0
    %p127 = por %p125, %p126
    %p128 = scmp.ne.s32.totalorder %s117, %s120
    %p129 = scmp.eq.s32.totalorder %s14, 1
    %p130 = por %p128, %p129
    %p131 = scmp.ne.s32.totalorder %s120, %s121
    %p132 = scmp.eq.s32.totalorder %s14, 0
    %p133 = por %p131, %p132
    %p134 = scmp.ne.s32.totalorder %s120, %s121
    %p135 = scmp.eq.s32.totalorder %s15, 1
    %p136 = por %p134, %p135
    %p138 = scmp.ne.s32.totalorder %s121, %s137
    %p139 = scmp.eq.s32.totalorder %s15, 0
    %p140 = por %p138, %p139
    %p141 = scmp.le.s32.totalorder 1, %s9
    %p142 = scmp.lt.s32.totalorder %s9, 3
    %p143 = pnand %p141, %p142
    %p144 = pneg %p143
    // Predicated region
    $region9: #{cross_attention_forward.17} parent=5 // pred_check
      _
    $region10: #{cross_attention_forward.17} parent=5 // pred_check_branch
      %146 = sbr.rel (%p143) target = $region12
    $region11: #{cross_attention_forward.17} parent=5 // pred_region
      %s147 = ssub.s32 %s9, 1
    $region12: #{cross_attention_forward.17} parent=5 // pred_fallthru
      _
    %p148 = scmp.lt.s32.totalorder %s9, 2
    // Predicated region
    $region13: #{cross_attention_forward.17} parent=5 // pred_check
      %p149 = pneg %p148
    $region14: #{cross_attention_forward.17} parent=5 // pred_check_branch
      %151 = sbr.rel (%p149) target = $region16
    $region15: #{cross_attention_forward.17} parent=5 // pred_region
      // Predicated region
      $region17: #{cross_attention_forward.17} parent=15 // pred_check
        %p152 = pneg %p43
      $region18: #{cross_attention_forward.17} parent=15 // pred_check_branch
        %154 = sbr.rel (%p152) target = $region20
      $region19: #{cross_attention_forward.17} parent=15 // pred_region
        %s155 = smul.u32 4, %s17
        %p156 = scmp.lt.s32.totalorder %s16, 1
        %s157 = scalar_select %p156, %s16, 1
        %p158 = scmp.lt.s32.totalorder %s155, 3
        %s159 = scalar_select %p158, %s155, 3
        %s160 = smul.addr %s157, 4
        %s161 = sadd.s32 %s159, %s160
        %s162 = smul.addr %s161, 8
        %s163 = scalar_lea.vmem %s0, %s162
        %s164 = smul.u32 4, %s17
      $region20: #{cross_attention_forward.17} parent=15 // pred_fallthru
        _
      // Predicated region
      $region21: #{cross_attention_forward.17} parent=15 // pred_check
        %p165 = pneg %p71
      $region22: #{cross_attention_forward.17} parent=15 // pred_check_branch
        %167 = sbr.rel (%p165) target = $region24
      $region23: #{cross_attention_forward.17} parent=15 // pred_region
        %s168 = smul.u32 4, %s17
        %p169 = scmp.lt.s32.totalorder %s16, 1
        %s170 = scalar_select %p169, %s16, 1
        %p171 = scmp.lt.s32.totalorder %s168, 3
        %s172 = scalar_select %p171, %s168, 3
        %s173 = smul.addr %s170, 4
        %s174 = sadd.s32 %s172, %s173
        %s175 = smul.addr %s174, 8
        %s176 = scalar_lea.vmem %s1, %s175
        %s177 = smul.u32 4, %s17
      $region24: #{cross_attention_forward.17} parent=15 // pred_fallthru
        _
      // Predicated region
      $region25: #{cross_attention_forward.17} parent=15 // pred_check
        %p178 = pneg %p99
      $region26: #{cross_attention_forward.17} parent=15 // pred_check_branch
        %180 = sbr.rel (%p178) target = $region28
      $region27: #{cross_attention_forward.17} parent=15 // pred_region
        %s181 = smul.u32 4, %s17
        %p182 = scmp.lt.s32.totalorder %s16, 1
        %s183 = scalar_select %p182, %s16, 1
        %p184 = scmp.lt.s32.totalorder %s181, 3
        %s185 = scalar_select %p184, %s181, 3
        %s186 = smul.addr %s183, 4
        %s187 = sadd.s32 %s185, %s186
        %s188 = smul.addr %s187, 8
        %s189 = scalar_lea.vmem %s2, %s188
        %s190 = smul.u32 4, %s17
      $region28: #{cross_attention_forward.17} parent=15 // pred_fallthru
        _
    $region16: #{cross_attention_forward.17} parent=5 // pred_fallthru
      _
    %p191 = scmp.le.s32.totalorder 1, %s9
    %p192 = scmp.lt.s32.totalorder %s9, 3
    %p193 = pnand %p191, %p192
    %p194 = pneg %p193
    // Predicated region
    $region29: #{cross_attention_forward.17} parent=5 // pred_check
      _
    $region30: #{cross_attention_forward.17} parent=5 // pred_check_branch
      %196 = sbr.rel (%p193) target = $region32
    $region31: #{cross_attention_forward.17} parent=5 // pred_region
      %s197 = ssub.s32 %s9, 1
      %s198 = smul.u32 4, %s19
      %p199 = scmp.lt.s32.totalorder %s18, 1
      %s200 = scalar_select %p199, %s18, 1
      %p201 = scmp.lt.s32.totalorder %s198, 3
      %s202 = scalar_select %p201, %s198, 3
      %s203 = smul.addr %s200, 4
      %s204 = sadd.s32 %s202, %s203
      %s205 = smul.addr %s204, 8
      %s206 = scalar_lea.vmem %s0, %s205
      %p207 = pneg %p49
      %p208 = pneg %p46
      %s209 = smul.u32 4, %s19
      %p210 = scmp.lt.s32.totalorder %s18, 1
      %s211 = scalar_select %p210, %s18, 1
      %p212 = scmp.lt.s32.totalorder %s209, 3
      %s213 = scalar_select %p212, %s209, 3
      %s214 = smul.addr %s211, 4
      %s215 = sadd.s32 %s213, %s214
      %s216 = smul.addr %s215, 8
      %s217 = scalar_lea.vmem %s1, %s216
      %p218 = pneg %p77
      %p219 = pneg %p74
      %s220 = smul.u32 4, %s19
      %p221 = scmp.lt.s32.totalorder %s18, 1
      %s222 = scalar_select %p221, %s18, 1
      %p223 = scmp.lt.s32.totalorder %s220, 3
      %s224 = scalar_select %p223, %s220, 3
      %s225 = smul.addr %s222, 4
      %s226 = sadd.s32 %s224, %s225
      %s227 = smul.addr %s226, 8
      %s228 = scalar_lea.vmem %s2, %s227
      %p229 = pneg %p105
      %p230 = pneg %p102
      %p231 = pneg %p133
      %p232 = pneg %p130
      %s233 = smul.u32 4, %s19
      %p234 = scmp.lt.s32.totalorder %s18, 1
      %s235 = scalar_select %p234, %s18, 1
      %p236 = scmp.lt.s32.totalorder %s233, 3
      %s237 = scalar_select %p236, %s233, 3
      %s238 = smul.addr %s235, 8
      %s239 = sadd.s32 %s237, %s238
      %s240 = smul.addr %s239, 8
      %s241 = scalar_lea.vmem %s3, %s240
      %s242 = smul.u32 4, %s19
      %p243 = scmp.lt.s32.totalorder %s18, 1
      %s244 = scalar_select %p243, %s18, 1
      %p245 = scmp.lt.s32.totalorder %s242, 3
      %s246 = scalar_select %p245, %s242, 3
      %s247 = smul.addr %s244, 4
      %s248 = sadd.s32 %s246, %s247
      %s249 = smul.addr %s248, 8
      %s250 = scalar_lea.vmem %s0, %s249
      %s251 = smul.u32 4, %s19
      %s252 = smul.u32 4, %s19
      %p253 = scmp.lt.s32.totalorder %s18, 1
      %s254 = scalar_select %p253, %s18, 1
      %p255 = scmp.lt.s32.totalorder %s252, 3
      %s256 = scalar_select %p255, %s252, 3
      %s257 = smul.addr %s254, 4
      %s258 = sadd.s32 %s256, %s257
      %s259 = smul.addr %s258, 8
      %s260 = scalar_lea.vmem %s1, %s259
      %s261 = smul.u32 4, %s19
      %s262 = smul.u32 4, %s19
      %p263 = scmp.lt.s32.totalorder %s18, 1
      %s264 = scalar_select %p263, %s18, 1
      %p265 = scmp.lt.s32.totalorder %s262, 3
      %s266 = scalar_select %p265, %s262, 3
      %s267 = smul.addr %s264, 4
      %s268 = sadd.s32 %s266, %s267
      %s269 = smul.addr %s268, 8
      %s270 = scalar_lea.vmem %s2, %s269
      %s271 = smul.u32 4, %s19
      %s272 = smul.u32 4, %s19
      %p273 = scmp.lt.s32.totalorder %s18, 1
      %s274 = scalar_select %p273, %s18, 1
      %p275 = scmp.lt.s32.totalorder %s272, 3
      %s276 = scalar_select %p275, %s272, 3
      %s277 = smul.addr %s274, 8
      %s278 = sadd.s32 %s276, %s277
      %s279 = smul.addr %s278, 8
      %s280 = scalar_lea.vmem %s3, %s279
      %s281 = smul.u32 4, %s19
      %v282 = vld [vmem:[%s250] sm:$0xff]
      %v283 = vld [vmem:[%s250 + $0x8] sm:$0xff]
      %v284 = vld [vmem:[%s250 + $0x10] sm:$0xff]
      %v285 = vld [vmem:[%s250 + $0x18] sm:$0xff]
      %v286 = vld [vmem:[%s260] sm:$0xff]
      %v287 = vld [vmem:[%s260 + $0x8] sm:$0xff]
      %v288 = vld [vmem:[%s260 + $0x10] sm:$0xff]
      %v289 = vld [vmem:[%s260 + $0x18] sm:$0xff]
      %v290 = vmul.f32 %v282, %v286
      %v291 = vmul.f32 %v283, %v287
      %v292 = vmul.f32 %v284, %v288
      %v293 = vmul.f32 %v285, %v289
      %294 = vst [vmem:[%s280] sm:$0xff] %v290
      %295 = vst [vmem:[%s280 + $0x8] sm:$0xff] %v291
      %296 = vst [vmem:[%s280 + $0x10] sm:$0xff] %v292
      %297 = vst [vmem:[%s280 + $0x18] sm:$0xff] %v293
      %v298 = vld [vmem:[%s270] sm:$0xff]
      %v299 = vld [vmem:[%s270 + $0x8] sm:$0xff]
      %v300 = vld [vmem:[%s270 + $0x10] sm:$0xff]
      %v301 = vld [vmem:[%s270 + $0x18] sm:$0xff]
      %s302 = scalar_lea.vmem %s280, 32
      %303 = vst [vmem:[%s302] sm:$0xff] %v298
      %304 = vst [vmem:[%s302 + $0x8] sm:$0xff] %v299
      %305 = vst [vmem:[%s302 + $0x10] sm:$0xff] %v300
      %306 = vst [vmem:[%s302 + $0x18] sm:$0xff] %v301
      %s307 = smul.u32 4, %s19
      %p308 = scmp.lt.s32.totalorder %s18, 1
      %s309 = scalar_select %p308, %s18, 1
      %p310 = scmp.lt.s32.totalorder %s307, 3
      %s311 = scalar_select %p310, %s307, 3
      %s312 = smul.addr %s309, 8
      %s313 = sadd.s32 %s311, %s312
      %s314 = smul.addr %s313, 8
      %s315 = scalar_lea.vmem %s3, %s314
      // Predicated region
      $region33: #{cross_attention_forward.17} parent=31 // pred_check
        %p316 = pneg %p130
      $region34: #{cross_attention_forward.17} parent=31 // pred_check_branch
        %318 = sbr.rel (%p316) target = $region36
      $region35: #{cross_attention_forward.17} parent=31 // pred_region
        %s319 = smul.u32 4, %s19
      $region36: #{cross_attention_forward.17} parent=31 // pred_fallthru
        _
    $region32: #{cross_attention_forward.17} parent=5 // pred_fallthru
      _
    %p320 = scmp.le.s32.totalorder 2, %s9
    // Predicated region
    $region37: #{cross_attention_forward.17} parent=5 // pred_check
      %p321 = pneg %p320
    $region38: #{cross_attention_forward.17} parent=5 // pred_check_branch
      %323 = sbr.rel (%p321) target = $region40
    $region39: #{cross_attention_forward.17} parent=5 // pred_region
      %s324 = ssub.s32 %s9, 2
      // Predicated region
      $region41: #{cross_attention_forward.17} parent=39 // pred_check
        %p325 = pneg %p136
      $region42: #{cross_attention_forward.17} parent=39 // pred_check_branch
        %327 = sbr.rel (%p325) target = $region44
      $region43: #{cross_attention_forward.17} parent=39 // pred_region
        %s328 = smul.u32 4, %s21
        %p329 = scmp.lt.s32.totalorder %s20, 1
        %s330 = scalar_select %p329, %s20, 1
        %p331 = scmp.lt.s32.totalorder %s328, 3
        %s332 = scalar_select %p331, %s328, 3
        %s333 = smul.addr %s330, 8
        %s334 = sadd.s32 %s332, %s333
        %s335 = smul.addr %s334, 8
        %s336 = scalar_lea.vmem %s3, %s335
      $region44: #{cross_attention_forward.17} parent=39 // pred_fallthru
        _
    $region40: #{cross_attention_forward.17} parent=5 // pred_fallthru
      _
  $region6: #{cross_attention_forward.17} parent=0 // loop_footer
    %s13 = sadd.s32 1, %s9
  $region7: #{cross_attention_forward.17} parent=0 // loop_footer_branch
    %8 = sbr.rel target = $region3
  $region8: #{cross_attention_forward.17} parent=0 // loop_exit
    _

</llo_original>
